<compile_context>
chip_gen: v5e
topology: v5e:2x2
jax: 0.10.0
libtpu: 0.0.40
codegen_flags: <defaults>
</compile_context>

<pallas_src>
import jax
import jax.numpy as jnp
from jax.experimental import pallas as pl
from jax.experimental.pallas import tpu as pltpu


def mlp_kernel(x_ref, w1_ref, b1_ref, w2_ref, b2_ref, w3_ref, b3_ref, o_ref):
    # fc1 + ReLU (bf16 operands, f32 accumulate; bias/ReLU in f32)
    h1 = jnp.dot(x_ref[...], w1_ref[...], preferred_element_type=jnp.float32)
    h1 = jnp.maximum(h1 + b1_ref[...], 0.0)
    # fc2 + ReLU
    h2 = jnp.dot(h1.astype(jnp.bfloat16), w2_ref[...],
                 preferred_element_type=jnp.float32)
    h2 = jnp.maximum(h2 + b2_ref[...], 0.0)
    # fc3 (no activation); lane-dense padded output, stored as bf16 to halve writeback.
    out = jnp.dot(h2.astype(jnp.bfloat16), w3_ref[...],
                  preferred_element_type=jnp.float32)
    o_ref[...] = (out + b3_ref[...]).astype(o_ref.dtype)


def prepare_params(w1, b1, w2, b2, w3, b3):
    """One-time weight prep (do NOT call per forward): pad fc3 to 128 lanes, cast dtypes."""
    hidden = w1.shape[1]
    action_space = w3.shape[1]
    a_pad = max(128, pl.cdiv(action_space, 128) * 128)  # lane-dense output width
    w3p = jnp.zeros((hidden, a_pad), jnp.bfloat16).at[:, :action_space].set(
        w3.astype(jnp.bfloat16))
    b3p = jnp.zeros((1, a_pad), jnp.float32).at[:, :action_space].set(
        b3.astype(jnp.float32))
    return {
        "w1": w1.astype(jnp.bfloat16), "b1": b1.astype(jnp.float32),
        "w2": w2.astype(jnp.bfloat16), "b2": b2.astype(jnp.float32),
        "w3": w3p, "b3": b3p,
        "action_space": action_space,
    }


def _dimension_semantics_and_splits():
    """v7x: 2 TensorCores -> 2 core-parallel batch tiles; v5e/v6e: 1 tile, grid=1."""
    try:
        kind = jax.devices()[0].device_kind.lower()
    except Exception:
        kind = ""
    if "v7" in kind:
        return (getattr(pltpu, "CORE_PARALLEL", "parallel"),), 2
    return ("parallel",), 1


def dqn_forward(x, params, *, max_block_batch=2048):
    w1, b1 = params["w1"], params["b1"]
    w2, b2 = params["w2"], params["b2"]
    w3p, b3p = params["w3"], params["b3"]
    action_space = params["action_space"]

    batch, obs_dim = x.shape
    hidden = w1.shape[1]
    a_pad = w3p.shape[1]

    dim_sem, n_splits = _dimension_semantics_and_splits()

    # Batch tile: whole batch in one step (v5e/v6e) or one tile per core (v7x),
    # rounded to the native bf16 sublane tile of 16 rows, capped for VMEM headroom.
    tb = pl.cdiv(pl.cdiv(batch, n_splits), 16) * 16
    tb = max(16, min(tb, max_block_batch))
    padded_batch = pl.cdiv(batch, tb) * tb
    if padded_batch != batch:
        x = jnp.pad(x, ((0, padded_batch - batch), (0, 0)))
    x_bf = x.astype(jnp.bfloat16)  # only per-call cast; weights were prepped once

    grid = (padded_batch // tb,)
    resident = lambda i: (0, 0)  # constant block index -> stays VMEM-resident

    out = pl.pallas_call(
        mlp_kernel,
        out_shape=jax.ShapeDtypeStruct((padded_batch, a_pad), jnp.bfloat16),
        grid_spec=pltpu.PrefetchScalarGridSpec(
            num_scalar_prefetch=0,
            grid=grid,
            in_specs=[
                pl.BlockSpec((tb, obs_dim), lambda i: (i, 0)),      # x tile (pipelined)
                pl.BlockSpec((obs_dim, hidden), resident),          # w1
                pl.BlockSpec((1, hidden), resident),                # b1
                pl.BlockSpec((hidden, hidden), resident),           # w2
                pl.BlockSpec((1, hidden), resident),                # b2
                pl.BlockSpec((hidden, a_pad), resident),            # w3 (padded)
                pl.BlockSpec((1, a_pad), resident),                 # b3 (padded)
            ],
            out_specs=pl.BlockSpec((tb, a_pad), lambda i: (i, 0)),  # lane-dense stores
        ),
        compiler_params=pltpu.CompilerParams(dimension_semantics=dim_sem),
    )(x_bf, w1, b1, w2, b2, w3p, b3p)

    # Slice away padded rows / padded action lanes; upcast to f32 for the consumer.
    return out[:batch, :action_space].astype(jnp.float32)


def init_linear(key, fan_in, fan_out):
    # Deterministic init mirroring nn.Linear's uniform(-1/sqrt(fan_in), 1/sqrt(fan_in)).
    kw, kb = jax.random.split(key)
    bound = 1.0 / jnp.sqrt(jnp.float32(fan_in))
    # Stored already transposed: (in, out)
    w = jax.random.uniform(kw, (fan_in, fan_out), jnp.float32, -bound, bound)
    b = jax.random.uniform(kb, (1, fan_out), jnp.float32, -bound, bound)
    return w, b


def reference_forward(x, w1, b1, w2, b2, w3, b3):
    # Mirrors the kernel's bf16-operand / f32-accumulate precision choices.
    bf = jnp.bfloat16
    h1 = jnp.dot(x.astype(bf), w1.astype(bf), preferred_element_type=jnp.float32)
    h1 = jnp.maximum(h1 + b1, 0.0)
    h2 = jnp.dot(h1.astype(bf), w2.astype(bf), preferred_element_type=jnp.float32)
    h2 = jnp.maximum(h2 + b2, 0.0)
    out = jnp.dot(h2.astype(bf), w3.astype(bf), preferred_element_type=jnp.float32)
    return out + b3


if __name__ == "__main__":
    # Shapes consistent with the module's forward (hidden_size=256 is the module default).
    observation_space = 16
    hidden_size = 256
    action_space = 4
    batch = 1024  # many stacked env states per call to amortize launch overhead

    key = jax.random.PRNGKey(0)
    k_obs, k1, k2, k3 = jax.random.split(key, 4)

    # transform(obs): observations as float32
    obs = jax.random.normal(k_obs, (batch, observation_space), jnp.float32)

    w1, b1 = init_linear(k1, observation_space, hidden_size)
    w2, b2 = init_linear(k2, hidden_size, hidden_size)
    w3, b3 = init_linear(k3, hidden_size, action_space)

    # One-time weight prep (bf16 cast + fc3 lane padding), hoisted out of the hot path.
    params = prepare_params(w1, b1, w2, b2, w3, b3)
    params = jax.tree_util.tree_map(
        lambda a: jax.block_until_ready(a) if isinstance(a, jax.Array) else a, params)

    out = dqn_forward(obs, params)
    out = jax.block_until_ready(out)

    ref = reference_forward(obs, w1, b1, w2, b2, w3, b3)
    assert out.shape == (batch, action_space)
    assert jnp.allclose(out, ref, atol=2e-2, rtol=2e-2), float(jnp.max(jnp.abs(out - ref)))

    # TODO(synk): transform() (numpy->tensor) and make_one_hot are host-side glue, not kernel compute.
    print("KERNEL_OK")
</pallas_src>

<mosaic_0001>
module attributes {stable_mosaic.version = 11 : i64} {
  func.func @mlp_kernel(%arg0: i32, %arg1: memref<1024x16xbf16, #tpu.memory_space<vmem>>, %arg2: memref<16x256xbf16, #tpu.memory_space<vmem>>, %arg3: memref<1x256xf32, #tpu.memory_space<vmem>>, %arg4: memref<256x256xbf16, #tpu.memory_space<vmem>>, %arg5: memref<1x256xf32, #tpu.memory_space<vmem>>, %arg6: memref<256x128xbf16, #tpu.memory_space<vmem>>, %arg7: memref<1x128xf32, #tpu.memory_space<vmem>>, %arg8: memref<1024x128xbf16, #tpu.memory_space<vmem>>) attributes {dimension_semantics = [#tpu.dimension_semantics<parallel>], iteration_bounds = array<i64: 1>, scalar_prefetch = 0 : i64, scratch_operands = 0 : i64, tpu.core_type = #tpu.core_type<tc>, window_params = [{transform_indices = @transform_0, window_bounds = array<i64: 1024, 16>}, {pipeline_mode = #tpu.pipeline_mode<synchronous>, transform_indices = @transform_1, window_bounds = array<i64: 16, 256>}, {pipeline_mode = #tpu.pipeline_mode<synchronous>, transform_indices = @transform_2, window_bounds = array<i64: 1, 256>}, {pipeline_mode = #tpu.pipeline_mode<synchronous>, transform_indices = @transform_3, window_bounds = array<i64: 256, 256>}, {pipeline_mode = #tpu.pipeline_mode<synchronous>, transform_indices = @transform_4, window_bounds = array<i64: 1, 256>}, {pipeline_mode = #tpu.pipeline_mode<synchronous>, transform_indices = @transform_5, window_bounds = array<i64: 256, 128>}, {pipeline_mode = #tpu.pipeline_mode<synchronous>, transform_indices = @transform_6, window_bounds = array<i64: 1, 128>}, {transform_indices = @transform_7, window_bounds = array<i64: 1024, 128>}]} {
    %c0 = arith.constant 0 : index
    %c0_0 = arith.constant 0 : index
    %0 = vector.load %arg1[%c0, %c0_0] : memref<1024x16xbf16, #tpu.memory_space<vmem>>, vector<1024x16xbf16>
    %c0_1 = arith.constant 0 : index
    %c0_2 = arith.constant 0 : index
    %1 = vector.load %arg2[%c0_1, %c0_2] : memref<16x256xbf16, #tpu.memory_space<vmem>>, vector<16x256xbf16>
    %cst = arith.constant dense<0.000000e+00> : vector<1024x256xf32>
    %2 = tpu.matmul %0, %1, %cst {dimension_numbers = #tpu.dot_dimension_numbers<[1], [0], [0], [1], [0, 0, 1, 1], [], []>} : vector<1024x16xbf16>, vector<16x256xbf16>, vector<1024x256xf32> -> vector<1024x256xf32>
    %c0_3 = arith.constant 0 : index
    %c0_4 = arith.constant 0 : index
    %3 = vector.load %arg3[%c0_3, %c0_4] : memref<1x256xf32, #tpu.memory_space<vmem>>, vector<1x256xf32>
    %4 = vector.broadcast %3 : vector<1x256xf32> to vector<1024x256xf32>
    %5 = arith.addf %2, %4 : vector<1024x256xf32>
    %cst_5 = arith.constant 0.000000e+00 : f32
    %6 = vector.broadcast %cst_5 : f32 to vector<1024x256xf32>
    %7 = arith.maximumf %5, %6 : vector<1024x256xf32>
    %8 = arith.truncf %7 : vector<1024x256xf32> to vector<1024x256xbf16>
    %c0_6 = arith.constant 0 : index
    %c0_7 = arith.constant 0 : index
    %9 = vector.load %arg4[%c0_6, %c0_7] : memref<256x256xbf16, #tpu.memory_space<vmem>>, vector<256x256xbf16>
    %cst_8 = arith.constant dense<0.000000e+00> : vector<1024x256xf32>
    %10 = tpu.matmul %8, %9, %cst_8 {dimension_numbers = #tpu.dot_dimension_numbers<[1], [0], [0], [1], [0, 0, 1, 1], [], []>} : vector<1024x256xbf16>, vector<256x256xbf16>, vector<1024x256xf32> -> vector<1024x256xf32>
    %c0_9 = arith.constant 0 : index
    %c0_10 = arith.constant 0 : index
    %11 = vector.load %arg5[%c0_9, %c0_10] : memref<1x256xf32, #tpu.memory_space<vmem>>, vector<1x256xf32>
    %12 = vector.broadcast %11 : vector<1x256xf32> to vector<1024x256xf32>
    %13 = arith.addf %10, %12 : vector<1024x256xf32>
    %cst_11 = arith.constant 0.000000e+00 : f32
    %14 = vector.broadcast %cst_11 : f32 to vector<1024x256xf32>
    %15 = arith.maximumf %13, %14 : vector<1024x256xf32>
    %16 = arith.truncf %15 : vector<1024x256xf32> to vector<1024x256xbf16>
    %c0_12 = arith.constant 0 : index
    %c0_13 = arith.constant 0 : index
    %17 = vector.load %arg6[%c0_12, %c0_13] : memref<256x128xbf16, #tpu.memory_space<vmem>>, vector<256x128xbf16>
    %cst_14 = arith.constant dense<0.000000e+00> : vector<1024x128xf32>
    %18 = tpu.matmul %16, %17, %cst_14 {dimension_numbers = #tpu.dot_dimension_numbers<[1], [0], [0], [1], [0, 0, 1, 1], [], []>} : vector<1024x256xbf16>, vector<256x128xbf16>, vector<1024x128xf32> -> vector<1024x128xf32>
    %c0_15 = arith.constant 0 : index
    %c0_16 = arith.constant 0 : index
    %19 = vector.load %arg7[%c0_15, %c0_16] : memref<1x128xf32, #tpu.memory_space<vmem>>, vector<1x128xf32>
    %20 = vector.broadcast %19 : vector<1x128xf32> to vector<1024x128xf32>
    %21 = arith.addf %18, %20 : vector<1024x128xf32>
    %22 = arith.truncf %21 : vector<1024x128xf32> to vector<1024x128xbf16>
    %c0_17 = arith.constant 0 : index
    %c0_18 = arith.constant 0 : index
    %23 = vector.load %arg8[%c0_17, %c0_18] : memref<1024x128xbf16, #tpu.memory_space<vmem>>, vector<1024x128xbf16>
    tpu.vector_store %arg8[%c0_17, %c0_18], %22 {strides = array<i32>} : memref<1024x128xbf16, #tpu.memory_space<vmem>>, vector<1024x128xbf16>,
    return
  }
  func.func @transform_0(%arg0: i32) -> (i32, i32) {
    %c0_i32 = arith.constant 0 : i32
    %c0_i32_0 = arith.constant 0 : i32
    return %arg0, %c0_i32 : i32, i32
  }
  func.func @transform_1(%arg0: i32) -> (i32, i32) {
    %c0_i32 = arith.constant 0 : i32
    %c0_i32_0 = arith.constant 0 : i32
    %c0_i32_1 = arith.constant 0 : i32
    return %c0_i32, %c0_i32_0 : i32, i32
  }
  func.func @transform_2(%arg0: i32) -> (i32, i32) {
    %c0_i32 = arith.constant 0 : i32
    %c0_i32_0 = arith.constant 0 : i32
    %c0_i32_1 = arith.constant 0 : i32
    return %c0_i32, %c0_i32_0 : i32, i32
  }
  func.func @transform_3(%arg0: i32) -> (i32, i32) {
    %c0_i32 = arith.constant 0 : i32
    %c0_i32_0 = arith.constant 0 : i32
    %c0_i32_1 = arith.constant 0 : i32
    return %c0_i32, %c0_i32_0 : i32, i32
  }
  func.func @transform_4(%arg0: i32) -> (i32, i32) {
    %c0_i32 = arith.constant 0 : i32
    %c0_i32_0 = arith.constant 0 : i32
    %c0_i32_1 = arith.constant 0 : i32
    return %c0_i32, %c0_i32_0 : i32, i32
  }
  func.func @transform_5(%arg0: i32) -> (i32, i32) {
    %c0_i32 = arith.constant 0 : i32
    %c0_i32_0 = arith.constant 0 : i32
    %c0_i32_1 = arith.constant 0 : i32
    return %c0_i32, %c0_i32_0 : i32, i32
  }
  func.func @transform_6(%arg0: i32) -> (i32, i32) {
    %c0_i32 = arith.constant 0 : i32
    %c0_i32_0 = arith.constant 0 : i32
    %c0_i32_1 = arith.constant 0 : i32
    return %c0_i32, %c0_i32_0 : i32, i32
  }
  func.func @transform_7(%arg0: i32) -> (i32, i32) {
    %c0_i32 = arith.constant 0 : i32
    %c0_i32_0 = arith.constant 0 : i32
    return %arg0, %c0_i32 : i32, i32
  }
}

</mosaic_0001>

<llo_original>
// kernel: tpu_custom_call.1
$region0: #{tpu_custom_call.1}
  #allocation0 [shape = 'u32[]', space=smem, size = 0x4, offset = 0x4, fixed_abs, tag = 'smem constant byte address 0x4 - core index']
  #allocation1 [shape = 'u32[72,128]{1,0:T(1,128)}', space=vmem, size = 0x9000, scoped, tag = 'internal scratch']
  %s0 = inlined_call_operand.vmem [shape: bf16[1024,16], index: 0, kind: input, shape index: {}]
  %s1 = inlined_call_operand.vmem [shape: bf16[16,256], index: 1, kind: input, shape index: {}]
  %s2 = inlined_call_operand.vmem [shape: f32[1,256], index: 2, kind: input, shape index: {}]
  %s3 = inlined_call_operand.vmem [shape: bf16[256,256], index: 3, kind: input, shape index: {}]
  %s4 = inlined_call_operand.vmem [shape: f32[1,256], index: 4, kind: input, shape index: {}]
  %s5 = inlined_call_operand.vmem [shape: bf16[256,128], index: 5, kind: input, shape index: {}]
  %s6 = inlined_call_operand.vmem [shape: f32[1,128], index: 6, kind: input, shape index: {}]
  %s7 = inlined_call_operand.hbm [shape: bf16[1024,128], index: 7, kind: output, shape index: {}]
  %s8 = sld [smem:[#allocation0]]
  $region38: #{tpu_custom_call.1} parent=0
    _
  %s10 = ssub.s32 1, %s8
  %s11 = scalar_select 0, %s10, %s8
  $region1: #{tpu_custom_call.1} parent=0
    #allocation2 [shape = 'u8[262144]{0}', space=vmem, size = 0x40000, scoped, tag = 'output window, operand 0, single buffered']
    #allocation3 [shape = 's32[1]{0}', space=sflag, size = 0x4, scoped, tag = 'scoped memory for tpu_custom_call.1']
    %12 = vsyncpa [#allocation3], 0
    // Predicated region
    $region2: #{tpu_custom_call.1} parent=1 // pred_check
      _
    $region3: #{tpu_custom_call.1} parent=1 // pred_check_branch
      %14 = sbr.rel (0) target = $region5
    $region4: #{tpu_custom_call.1} parent=1 // pred_region
      _
    $region5: #{tpu_custom_call.1} parent=1 // pred_fallthru
      _
    // Predicated region
    $region6: #{tpu_custom_call.1} parent=1 // pred_check
      _
    $region7: #{tpu_custom_call.1} parent=1 // pred_check_branch
      %16 = sbr.rel (0) target = $region9
    $region8: #{tpu_custom_call.1} parent=1 // pred_region
      _
    $region9: #{tpu_custom_call.1} parent=1 // pred_fallthru
      _
    // Predicated region
    $region10: #{tpu_custom_call.1} parent=1 // pred_check
      _
    $region11: #{tpu_custom_call.1} parent=1 // pred_check_branch
      %18 = sbr.rel (0) target = $region13
    $region12: #{tpu_custom_call.1} parent=1 // pred_region
      _
    $region13: #{tpu_custom_call.1} parent=1 // pred_fallthru
      _
    // Predicated region
    $region14: #{tpu_custom_call.1} parent=1 // pred_check
      _
    $region15: #{tpu_custom_call.1} parent=1 // pred_check_branch
      %20 = sbr.rel (0) target = $region17
    $region16: #{tpu_custom_call.1} parent=1 // pred_region
      _
    $region17: #{tpu_custom_call.1} parent=1 // pred_fallthru
      _
    // Predicated region
    $region18: #{tpu_custom_call.1} parent=1 // pred_check
      _
    $region19: #{tpu_custom_call.1} parent=1 // pred_check_branch
      %22 = sbr.rel (0) target = $region21
    $region20: #{tpu_custom_call.1} parent=1 // pred_region
      _
    $region21: #{tpu_custom_call.1} parent=1 // pred_fallthru
      _
    // Predicated region
    $region22: #{tpu_custom_call.1} parent=1 // pred_check
      _
    $region23: #{tpu_custom_call.1} parent=1 // pred_check_branch
      %24 = sbr.rel (0) target = $region25
    $region24: #{tpu_custom_call.1} parent=1 // pred_region
      _
    $region25: #{tpu_custom_call.1} parent=1 // pred_fallthru
      _
    // Predicated region
    $region26: #{tpu_custom_call.1} parent=1 // pred_check
      _
    $region27: #{tpu_custom_call.1} parent=1 // pred_check_branch
      %26 = sbr.rel (0) target = $region29
    $region28: #{tpu_custom_call.1} parent=1 // pred_region
      _
    $region29: #{tpu_custom_call.1} parent=1 // pred_fallthru
      _
    %v28 = vld [vmem:[%s0] sm:$0xf]
    %v29 = vld [vmem:[%s0 + $0x4] sm:$0xf]
    %v30 = vld [vmem:[%s0 + $0x8] sm:$0xf]
    %v31 = vld [vmem:[%s0 + $0xc] sm:$0xf]
    %v32 = vld [vmem:[%s0 + $0x10] sm:$0xf]
    %v33 = vld [vmem:[%s0 + $0x14] sm:$0xf]
    %v34 = vld [vmem:[%s0 + $0x18] sm:$0xf]
    %v35 = vld [vmem:[%s0 + $0x1c] sm:$0xf]
    %v36 = vld [vmem:[%s0 + $0x20] sm:$0xf]
    %v37 = vld [vmem:[%s0 + $0x24] sm:$0xf]
    %v38 = vld [vmem:[%s0 + $0x28] sm:$0xf]
    %v39 = vld [vmem:[%s0 + $0x2c] sm:$0xf]
    %v40 = vld [vmem:[%s0 + $0x30] sm:$0xf]
    %v41 = vld [vmem:[%s0 + $0x34] sm:$0xf]
    %v42 = vld [vmem:[%s0 + $0x38] sm:$0xf]
    %v43 = vld [vmem:[%s0 + $0x3c] sm:$0xf]
    %v44 = vld [vmem:[%s0 + $0x40] sm:$0xf]
    %v45 = vld [vmem:[%s0 + $0x44] sm:$0xf]
    %v46 = vld [vmem:[%s0 + $0x48] sm:$0xf]
    %v47 = vld [vmem:[%s0 + $0x4c] sm:$0xf]
    %v48 = vld [vmem:[%s0 + $0x50] sm:$0xf]
    %v49 = vld [vmem:[%s0 + $0x54] sm:$0xf]
    %v50 = vld [vmem:[%s0 + $0x58] sm:$0xf]
    %v51 = vld [vmem:[%s0 + $0x5c] sm:$0xf]
    %v52 = vld [vmem:[%s0 + $0x60] sm:$0xf]
    %v53 = vld [vmem:[%s0 + $0x64] sm:$0xf]
    %v54 = vld [vmem:[%s0 + $0x68] sm:$0xf]
    %v55 = vld [vmem:[%s0 + $0x6c] sm:$0xf]
    %v56 = vld [vmem:[%s0 + $0x70] sm:$0xf]
    %v57 = vld [vmem:[%s0 + $0x74] sm:$0xf]
    %v58 = vld [vmem:[%s0 + $0x78] sm:$0xf]
    %v59 = vld [vmem:[%s0 + $0x7c] sm:$0xf]
    %v60 = vld [vmem:[%s0 + $0x80] sm:$0xf]
    %v61 = vld [vmem:[%s0 + $0x84] sm:$0xf]
    %v62 = vld [vmem:[%s0 + $0x88] sm:$0xf]
    %v63 = vld [vmem:[%s0 + $0x8c] sm:$0xf]
    %v64 = vld [vmem:[%s0 + $0x90] sm:$0xf]
    %v65 = vld [vmem:[%s0 + $0x94] sm:$0xf]
    %v66 = vld [vmem:[%s0 + $0x98] sm:$0xf]
    %v67 = vld [vmem:[%s0 + $0x9c] sm:$0xf]
    %v68 = vld [vmem:[%s0 + $0xa0] sm:$0xf]
    %v69 = vld [vmem:[%s0 + $0xa4] sm:$0xf]
    %v70 = vld [vmem:[%s0 + $0xa8] sm:$0xf]
    %v71 = vld [vmem:[%s0 + $0xac] sm:$0xf]
    %v72 = vld [vmem:[%s0 + $0xb0] sm:$0xf]
    %v73 = vld [vmem:[%s0 + $0xb4] sm:$0xf]
    %v74 = vld [vmem:[%s0 + $0xb8] sm:$0xf]
    %v75 = vld [vmem:[%s0 + $0xbc] sm:$0xf]
    %v76 = vld [vmem:[%s0 + $0xc0] sm:$0xf]
    %v77 = vld [vmem:[%s0 + $0xc4] sm:$0xf]
    %v78 = vld [vmem:[%s0 + $0xc8] sm:$0xf]
    %v79 = vld [vmem:[%s0 + $0xcc] sm:$0xf]
    %v80 = vld [vmem:[%s0 + $0xd0] sm:$0xf]
    %v81 = vld [vmem:[%s0 + $0xd4] sm:$0xf]
    %v82 = vld [vmem:[%s0 + $0xd8] sm:$0xf]
    %v83 = vld [vmem:[%s0 + $0xdc] sm:$0xf]
    %v84 = vld [vmem:[%s0 + $0xe0] sm:$0xf]
    %v85 = vld [vmem:[%s0 + $0xe4] sm:$0xf]
    %v86 = vld [vmem:[%s0 + $0xe8] sm:$0xf]
    %v87 = vld [vmem:[%s0 + $0xec] sm:$0xf]
    %v88 = vld [vmem:[%s0 + $0xf0] sm:$0xf]
    %v89 = vld [vmem:[%s0 + $0xf4] sm:$0xf]
    %v90 = vld [vmem:[%s0 + $0xf8] sm:$0xf]
    %v91 = vld [vmem:[%s0 + $0xfc] sm:$0xf]
    %v92 = vld [vmem:[%s0 + $0x100] sm:$0xf]
    %v93 = vld [vmem:[%s0 + $0x104] sm:$0xf]
    %v94 = vld [vmem:[%s0 + $0x108] sm:$0xf]
    %v95 = vld [vmem:[%s0 + $0x10c] sm:$0xf]
    %v96 = vld [vmem:[%s0 + $0x110] sm:$0xf]
    %v97 = vld [vmem:[%s0 + $0x114] sm:$0xf]
    %v98 = vld [vmem:[%s0 + $0x118] sm:$0xf]
    %v99 = vld [vmem:[%s0 + $0x11c] sm:$0xf]
    %v100 = vld [vmem:[%s0 + $0x120] sm:$0xf]
    %v101 = vld [vmem:[%s0 + $0x124] sm:$0xf]
    %v102 = vld [vmem:[%s0 + $0x128] sm:$0xf]
    %v103 = vld [vmem:[%s0 + $0x12c] sm:$0xf]
    %v104 = vld [vmem:[%s0 + $0x130] sm:$0xf]
    %v105 = vld [vmem:[%s0 + $0x134] sm:$0xf]
    %v106 = vld [vmem:[%s0 + $0x138] sm:$0xf]
    %v107 = vld [vmem:[%s0 + $0x13c] sm:$0xf]
    %v108 = vld [vmem:[%s0 + $0x140] sm:$0xf]
    %v109 = vld [vmem:[%s0 + $0x144] sm:$0xf]
    %v110 = vld [vmem:[%s0 + $0x148] sm:$0xf]
    %v111 = vld [vmem:[%s0 + $0x14c] sm:$0xf]
    %v112 = vld [vmem:[%s0 + $0x150] sm:$0xf]
    %v113 = vld [vmem:[%s0 + $0x154] sm:$0xf]
    %v114 = vld [vmem:[%s0 + $0x158] sm:$0xf]
    %v115 = vld [vmem:[%s0 + $0x15c] sm:$0xf]
    %v116 = vld [vmem:[%s0 + $0x160] sm:$0xf]
    %v117 = vld [vmem:[%s0 + $0x164] sm:$0xf]
    %v118 = vld [vmem:[%s0 + $0x168] sm:$0xf]
    %v119 = vld [vmem:[%s0 + $0x16c] sm:$0xf]
    %v120 = vld [vmem:[%s0 + $0x170] sm:$0xf]
    %v121 = vld [vmem:[%s0 + $0x174] sm:$0xf]
    %v122 = vld [vmem:[%s0 + $0x178] sm:$0xf]
    %v123 = vld [vmem:[%s0 + $0x17c] sm:$0xf]
    %v124 = vld [vmem:[%s0 + $0x180] sm:$0xf]
    %v125 = vld [vmem:[%s0 + $0x184] sm:$0xf]
    %v126 = vld [vmem:[%s0 + $0x188] sm:$0xf]
    %v127 = vld [vmem:[%s0 + $0x18c] sm:$0xf]
    %v128 = vld [vmem:[%s0 + $0x190] sm:$0xf]
    %v129 = vld [vmem:[%s0 + $0x194] sm:$0xf]
    %v130 = vld [vmem:[%s0 + $0x198] sm:$0xf]
    %v131 = vld [vmem:[%s0 + $0x19c] sm:$0xf]
    %v132 = vld [vmem:[%s0 + $0x1a0] sm:$0xf]
    %v133 = vld [vmem:[%s0 + $0x1a4] sm:$0xf]
    %v134 = vld [vmem:[%s0 + $0x1a8] sm:$0xf]
    %v135 = vld [vmem:[%s0 + $0x1ac] sm:$0xf]
    %v136 = vld [vmem:[%s0 + $0x1b0] sm:$0xf]
    %v137 = vld [vmem:[%s0 + $0x1b4] sm:$0xf]
    %v138 = vld [vmem:[%s0 + $0x1b8] sm:$0xf]
    %v139 = vld [vmem:[%s0 + $0x1bc] sm:$0xf]
    %v140 = vld [vmem:[%s0 + $0x1c0] sm:$0xf]
    %v141 = vld [vmem:[%s0 + $0x1c4] sm:$0xf]
    %v142 = vld [vmem:[%s0 + $0x1c8] sm:$0xf]
    %v143 = vld [vmem:[%s0 + $0x1cc] sm:$0xf]
    %v144 = vld [vmem:[%s0 + $0x1d0] sm:$0xf]
    %v145 = vld [vmem:[%s0 + $0x1d4] sm:$0xf]
    %v146 = vld [vmem:[%s0 + $0x1d8] sm:$0xf]
    %v147 = vld [vmem:[%s0 + $0x1dc] sm:$0xf]
    %v148 = vld [vmem:[%s0 + $0x1e0] sm:$0xf]
    %v149 = vld [vmem:[%s0 + $0x1e4] sm:$0xf]
    %v150 = vld [vmem:[%s0 + $0x1e8] sm:$0xf]
    %v151 = vld [vmem:[%s0 + $0x1ec] sm:$0xf]
    %v152 = vld [vmem:[%s0 + $0x1f0] sm:$0xf]
    %v153 = vld [vmem:[%s0 + $0x1f4] sm:$0xf]
    %v154 = vld [vmem:[%s0 + $0x1f8] sm:$0xf]
    %v155 = vld [vmem:[%s0 + $0x1fc] sm:$0xf]
    %v156 = vld [vmem:[%s1] sm:$0xff]
    %v157 = vld [vmem:[%s1 + $0x8] sm:$0xff]
    %v158 = vld [vmem:[%s2] sm:$0x3]
    %v160 = vperm.slane %v158, 0
    %v161 = vperm.slane %v158, 1
    %v292 = vunpack.c.l.b16 %v28
    %v293 = vunpack.c.l.b16 %v29
    %v294 = vunpack.c.l.b16 %v30
    %v295 = vunpack.c.l.b16 %v31
    %v296 = vunpack.c.l.b16 %v32
    %v297 = vunpack.c.l.b16 %v33
    %v298 = vunpack.c.l.b16 %v34
    %v299 = vunpack.c.l.b16 %v35
    %v300 = vunpack.c.l.b16 %v36
    %v301 = vunpack.c.l.b16 %v37
    %v302 = vunpack.c.l.b16 %v38
    %v303 = vunpack.c.l.b16 %v39
    %v304 = vunpack.c.l.b16 %v40
    %v305 = vunpack.c.l.b16 %v41
    %v306 = vunpack.c.l.b16 %v42
    %v307 = vunpack.c.l.b16 %v43
    %v308 = vunpack.c.l.b16 %v44
    %v309 = vunpack.c.l.b16 %v45
    %v310 = vunpack.c.l.b16 %v46
    %v311 = vunpack.c.l.b16 %v47
    %v312 = vunpack.c.l.b16 %v48
    %v313 = vunpack.c.l.b16 %v49
    %v314 = vunpack.c.l.b16 %v50
    %v315 = vunpack.c.l.b16 %v51
    %v316 = vunpack.c.l.b16 %v52
    %v317 = vunpack.c.l.b16 %v53
    %v318 = vunpack.c.l.b16 %v54
    %v319 = vunpack.c.l.b16 %v55
    %v320 = vunpack.c.l.b16 %v56
    %v321 = vunpack.c.l.b16 %v57
    %v322 = vunpack.c.l.b16 %v58
    %v323 = vunpack.c.l.b16 %v59
    %v324 = vunpack.c.l.b16 %v60
    %v325 = vunpack.c.l.b16 %v61
    %v326 = vunpack.c.l.b16 %v62
    %v327 = vunpack.c.l.b16 %v63
    %v328 = vunpack.c.l.b16 %v64
    %v329 = vunpack.c.l.b16 %v65
    %v330 = vunpack.c.l.b16 %v66
    %v331 = vunpack.c.l.b16 %v67
    %v332 = vunpack.c.l.b16 %v68
    %v333 = vunpack.c.l.b16 %v69
    %v334 = vunpack.c.l.b16 %v70
    %v335 = vunpack.c.l.b16 %v71
    %v336 = vunpack.c.l.b16 %v72
    %v337 = vunpack.c.l.b16 %v73
    %v338 = vunpack.c.l.b16 %v74
    %v339 = vunpack.c.l.b16 %v75
    %v340 = vunpack.c.l.b16 %v76
    %v341 = vunpack.c.l.b16 %v77
    %v342 = vunpack.c.l.b16 %v78
    %v343 = vunpack.c.l.b16 %v79
    %v344 = vunpack.c.l.b16 %v80
    %v345 = vunpack.c.l.b16 %v81
    %v346 = vunpack.c.l.b16 %v82
    %v347 = vunpack.c.l.b16 %v83
    %v348 = vunpack.c.l.b16 %v84
    %v349 = vunpack.c.l.b16 %v85
    %v350 = vunpack.c.l.b16 %v86
    %v351 = vunpack.c.l.b16 %v87
    %v352 = vunpack.c.l.b16 %v88
    %v353 = vunpack.c.l.b16 %v89
    %v354 = vunpack.c.l.b16 %v90
    %v355 = vunpack.c.l.b16 %v91
    %v356 = vunpack.c.l.b16 %v92
    %v357 = vunpack.c.l.b16 %v93
    %v358 = vunpack.c.l.b16 %v94
    %v359 = vunpack.c.l.b16 %v95
    %v360 = vunpack.c.l.b16 %v96
    %v361 = vunpack.c.l.b16 %v97
    %v362 = vunpack.c.l.b16 %v98
    %v363 = vunpack.c.l.b16 %v99
    %v364 = vunpack.c.l.b16 %v100
    %v365 = vunpack.c.l.b16 %v101
    %v366 = vunpack.c.l.b16 %v102
    %v367 = vunpack.c.l.b16 %v103
    %v368 = vunpack.c.l.b16 %v104
    %v369 = vunpack.c.l.b16 %v105
    %v370 = vunpack.c.l.b16 %v106
    %v371 = vunpack.c.l.b16 %v107
    %v372 = vunpack.c.l.b16 %v108
    %v373 = vunpack.c.l.b16 %v109
    %v374 = vunpack.c.l.b16 %v110
    %v375 = vunpack.c.l.b16 %v111
    %v376 = vunpack.c.l.b16 %v112
    %v377 = vunpack.c.l.b16 %v113
    %v378 = vunpack.c.l.b16 %v114
    %v379 = vunpack.c.l.b16 %v115
    %v380 = vunpack.c.l.b16 %v116
    %v381 = vunpack.c.l.b16 %v117
    %v382 = vunpack.c.l.b16 %v118
    %v383 = vunpack.c.l.b16 %v119
    %v384 = vunpack.c.l.b16 %v120
    %v385 = vunpack.c.l.b16 %v121
    %v386 = vunpack.c.l.b16 %v122
    %v387 = vunpack.c.l.b16 %v123
    %v388 = vunpack.c.l.b16 %v124
    %v389 = vunpack.c.l.b16 %v125
    %v390 = vunpack.c.l.b16 %v126
    %v391 = vunpack.c.l.b16 %v127
    %v392 = vunpack.c.l.b16 %v128
    %v393 = vunpack.c.l.b16 %v129
    %v394 = vunpack.c.l.b16 %v130
    %v395 = vunpack.c.l.b16 %v131
    %v396 = vunpack.c.l.b16 %v132
    %v397 = vunpack.c.l.b16 %v133
    %v398 = vunpack.c.l.b16 %v134
    %v399 = vunpack.c.l.b16 %v135
    %v400 = vunpack.c.l.b16 %v136
    %v401 = vunpack.c.l.b16 %v137
    %v402 = vunpack.c.l.b16 %v138
    %v403 = vunpack.c.l.b16 %v139
    %v404 = vunpack.c.l.b16 %v140
    %v405 = vunpack.c.l.b16 %v141
    %v406 = vunpack.c.l.b16 %v142
    %v407 = vunpack.c.l.b16 %v143
    %v408 = vunpack.c.l.b16 %v144
    %v409 = vunpack.c.l.b16 %v145
    %v410 = vunpack.c.l.b16 %v146
    %v411 = vunpack.c.l.b16 %v147
    %v412 = vunpack.c.l.b16 %v148
    %v413 = vunpack.c.l.b16 %v149
    %v414 = vunpack.c.l.b16 %v150
    %v415 = vunpack.c.l.b16 %v151
    %v416 = vunpack.c.l.b16 %v152
    %v417 = vunpack.c.l.b16 %v153
    %v418 = vunpack.c.l.b16 %v154
    %v419 = vunpack.c.l.b16 %v155
    %v420 = vpack.c.b16 %v293, %v292
    %v421 = vpack.c.b16 %v295, %v294
    %v422 = vpack.c.b16 %v297, %v296
    %v423 = vpack.c.b16 %v299, %v298
    %v424 = vpack.c.b16 %v301, %v300
    %v425 = vpack.c.b16 %v303, %v302
    %v426 = vpack.c.b16 %v305, %v304
    %v427 = vpack.c.b16 %v307, %v306
    %v428 = vpack.c.b16 %v309, %v308
    %v429 = vpack.c.b16 %v311, %v310
    %v430 = vpack.c.b16 %v313, %v312
    %v431 = vpack.c.b16 %v315, %v314
    %v432 = vpack.c.b16 %v317, %v316
    %v433 = vpack.c.b16 %v319, %v318
    %v434 = vpack.c.b16 %v321, %v320
    %v435 = vpack.c.b16 %v323, %v322
    %v436 = vpack.c.b16 %v325, %v324
    %v437 = vpack.c.b16 %v327, %v326
    %v438 = vpack.c.b16 %v329, %v328
    %v439 = vpack.c.b16 %v331, %v330
    %v440 = vpack.c.b16 %v333, %v332
    %v441 = vpack.c.b16 %v335, %v334
    %v442 = vpack.c.b16 %v337, %v336
    %v443 = vpack.c.b16 %v339, %v338
    %v444 = vpack.c.b16 %v341, %v340
    %v445 = vpack.c.b16 %v343, %v342
    %v446 = vpack.c.b16 %v345, %v344
    %v447 = vpack.c.b16 %v347, %v346
    %v448 = vpack.c.b16 %v349, %v348
    %v449 = vpack.c.b16 %v351, %v350
    %v450 = vpack.c.b16 %v353, %v352
    %v451 = vpack.c.b16 %v355, %v354
    %v452 = vpack.c.b16 %v357, %v356
    %v453 = vpack.c.b16 %v359, %v358
    %v454 = vpack.c.b16 %v361, %v360
    %v455 = vpack.c.b16 %v363, %v362
    %v456 = vpack.c.b16 %v365, %v364
    %v457 = vpack.c.b16 %v367, %v366
    %v458 = vpack.c.b16 %v369, %v368
    %v459 = vpack.c.b16 %v371, %v370
    %v460 = vpack.c.b16 %v373, %v372
    %v461 = vpack.c.b16 %v375, %v374
    %v462 = vpack.c.b16 %v377, %v376
    %v463 = vpack.c.b16 %v379, %v378
    %v464 = vpack.c.b16 %v381, %v380
    %v465 = vpack.c.b16 %v383, %v382
    %v466 = vpack.c.b16 %v385, %v384
    %v467 = vpack.c.b16 %v387, %v386
    %v468 = vpack.c.b16 %v389, %v388
    %v469 = vpack.c.b16 %v391, %v390
    %v470 = vpack.c.b16 %v393, %v392
    %v471 = vpack.c.b16 %v395, %v394
    %v472 = vpack.c.b16 %v397, %v396
    %v473 = vpack.c.b16 %v399, %v398
    %v474 = vpack.c.b16 %v401, %v400
    %v475 = vpack.c.b16 %v403, %v402
    %v476 = vpack.c.b16 %v405, %v404
    %v477 = vpack.c.b16 %v407, %v406
    %v478 = vpack.c.b16 %v409, %v408
    %v479 = vpack.c.b16 %v411, %v410
    %v480 = vpack.c.b16 %v413, %v412
    %v481 = vpack.c.b16 %v415, %v414
    %v482 = vpack.c.b16 %v417, %v416
    %v483 = vpack.c.b16 %v419, %v418
    %v486 = vunpack.c.l.b16 %v156
    %v487 = vunpack.c.h.b16 %v156
    %v488 = vunpack.c.l.b16 %v157
    %v489 = vunpack.c.h.b16 %v157
    %v490 = vpack.c.b16 %v488, %v486
    %v491 = vpack.c.b16 %v489, %v487
    %vm494 = vcmask 130048
    %v496 = vsel %vm494, %v420, 0
    %v499 = vsel %vm494, %v421, 0
    %v502 = vsel %vm494, %v422, 0
    %v505 = vsel %vm494, %v423, 0
    %v508 = vsel %vm494, %v424, 0
    %v511 = vsel %vm494, %v425, 0
    %v514 = vsel %vm494, %v426, 0
    %v517 = vsel %vm494, %v427, 0
    %v520 = vsel %vm494, %v428, 0
    %v523 = vsel %vm494, %v429, 0
    %v526 = vsel %vm494, %v430, 0
    %v529 = vsel %vm494, %v431, 0
    %v532 = vsel %vm494, %v432, 0
    %v535 = vsel %vm494, %v433, 0
    %v538 = vsel %vm494, %v434, 0
    %v541 = vsel %vm494, %v435, 0
    %v544 = vsel %vm494, %v436, 0
    %v547 = vsel %vm494, %v437, 0
    %v550 = vsel %vm494, %v438, 0
    %v553 = vsel %vm494, %v439, 0
    %v556 = vsel %vm494, %v440, 0
    %v559 = vsel %vm494, %v441, 0
    %v562 = vsel %vm494, %v442, 0
    %v565 = vsel %vm494, %v443, 0
    %v568 = vsel %vm494, %v444, 0
    %v571 = vsel %vm494, %v445, 0
    %v574 = vsel %vm494, %v446, 0
    %v577 = vsel %vm494, %v447, 0
    %v580 = vsel %vm494, %v448, 0
    %v583 = vsel %vm494, %v449, 0
    %v586 = vsel %vm494, %v450, 0
    %v589 = vsel %vm494, %v451, 0
    %v592 = vsel %vm494, %v452, 0
    %v595 = vsel %vm494, %v453, 0
    %v598 = vsel %vm494, %v454, 0
    %v601 = vsel %vm494, %v455, 0
    %v604 = vsel %vm494, %v456, 0
    %v607 = vsel %vm494, %v457, 0
    %v610 = vsel %vm494, %v458, 0
    %v613 = vsel %vm494, %v459, 0
    %v616 = vsel %vm494, %v460, 0
    %v619 = vsel %vm494, %v461, 0
    %v622 = vsel %vm494, %v462, 0
    %v625 = vsel %vm494, %v463, 0
    %v628 = vsel %vm494, %v464, 0
    %v631 = vsel %vm494, %v465, 0
    %v634 = vsel %vm494, %v466, 0
    %v637 = vsel %vm494, %v467, 0
    %v640 = vsel %vm494, %v468, 0
    %v643 = vsel %vm494, %v469, 0
    %v646 = vsel %vm494, %v470, 0
    %v649 = vsel %vm494, %v471, 0
    %v652 = vsel %vm494, %v472, 0
    %v655 = vsel %vm494, %v473, 0
    %v658 = vsel %vm494, %v474, 0
    %v661 = vsel %vm494, %v475, 0
    %v664 = vsel %vm494, %v476, 0
    %v667 = vsel %vm494, %v477, 0
    %v670 = vsel %vm494, %v478, 0
    %v673 = vsel %vm494, %v479, 0
    %v676 = vsel %vm494, %v480, 0
    %v679 = vsel %vm494, %v481, 0
    %v682 = vsel %vm494, %v482, 0
    %v685 = vsel %vm494, %v483, 0
    %687 = vmatpush.bf16.msra.mxu0 0
    %688 = vmatpush.bf16.msra.mxu0 0
    %689 = vmatpush.bf16.msra.mxu0 0
    %690 = vmatpush.bf16.msra.mxu0 0
    %691 = vmatpush.bf16.msra.mxu0 0
    %692 = vmatpush.bf16.msra.mxu0 0
    %693 = vmatpush.bf16.msra.mxu0 0
    %694 = vmatpush.bf16.msra.mxu0 %v490
    %695 = vmatmul.bf16.gmra.mxu0 %v496
    %v696 = vpop.f32.mrf.mxu0
    %v697 = vadd.f32 %v160, %v696
    %v698 = vpop.f32.mrf.mxu0
    %v699 = vadd.f32 %v160, %v698
    %700 = vmatmul.bf16.gmra.mxu0 %v499
    %v701 = vpop.f32.mrf.mxu0
    %v702 = vadd.f32 %v160, %v701
    %v703 = vpop.f32.mrf.mxu0
    %v704 = vadd.f32 %v160, %v703
    %705 = vmatmul.bf16.gmra.mxu0 %v502
    %v706 = vpop.f32.mrf.mxu0
    %v707 = vadd.f32 %v160, %v706
    %v708 = vpop.f32.mrf.mxu0
    %v709 = vadd.f32 %v160, %v708
    %710 = vmatmul.bf16.gmra.mxu0 %v505
    %v711 = vpop.f32.mrf.mxu0
    %v712 = vadd.f32 %v160, %v711
    %v713 = vpop.f32.mrf.mxu0
    %v714 = vadd.f32 %v160, %v713
    %715 = vmatmul.bf16.gmra.mxu0 %v508
    %v716 = vpop.f32.mrf.mxu0
    %v717 = vadd.f32 %v160, %v716
    %v718 = vpop.f32.mrf.mxu0
    %v719 = vadd.f32 %v160, %v718
    %720 = vmatmul.bf16.gmra.mxu0 %v511
    %v721 = vpop.f32.mrf.mxu0
    %v722 = vadd.f32 %v160, %v721
    %v723 = vpop.f32.mrf.mxu0
    %v724 = vadd.f32 %v160, %v723
    %725 = vmatmul.bf16.gmra.mxu0 %v514
    %v726 = vpop.f32.mrf.mxu0
    %v727 = vadd.f32 %v160, %v726
    %v728 = vpop.f32.mrf.mxu0
    %v729 = vadd.f32 %v160, %v728
    %730 = vmatmul.bf16.gmra.mxu0 %v517
    %v731 = vpop.f32.mrf.mxu0
    %v732 = vadd.f32 %v160, %v731
    %v733 = vpop.f32.mrf.mxu0
    %v734 = vadd.f32 %v160, %v733
    %735 = vmatmul.bf16.gmra.mxu0 %v520
    %v736 = vpop.f32.mrf.mxu0
    %v737 = vadd.f32 %v160, %v736
    %v738 = vpop.f32.mrf.mxu0
    %v739 = vadd.f32 %v160, %v738
    %740 = vmatmul.bf16.gmra.mxu0 %v523
    %v741 = vpop.f32.mrf.mxu0
    %v742 = vadd.f32 %v160, %v741
    %v743 = vpop.f32.mrf.mxu0
    %v744 = vadd.f32 %v160, %v743
    %745 = vmatmul.bf16.gmra.mxu0 %v526
    %v746 = vpop.f32.mrf.mxu0
    %v747 = vadd.f32 %v160, %v746
    %v748 = vpop.f32.mrf.mxu0
    %v749 = vadd.f32 %v160, %v748
    %750 = vmatmul.bf16.gmra.mxu0 %v529
    %v751 = vpop.f32.mrf.mxu0
    %v752 = vadd.f32 %v160, %v751
    %v753 = vpop.f32.mrf.mxu0
    %v754 = vadd.f32 %v160, %v753
    %755 = vmatmul.bf16.gmra.mxu0 %v532
    %v756 = vpop.f32.mrf.mxu0
    %v757 = vadd.f32 %v160, %v756
    %v758 = vpop.f32.mrf.mxu0
    %v759 = vadd.f32 %v160, %v758
    %760 = vmatmul.bf16.gmra.mxu0 %v535
    %v761 = vpop.f32.mrf.mxu0
    %v762 = vadd.f32 %v160, %v761
    %v763 = vpop.f32.mrf.mxu0
    %v764 = vadd.f32 %v160, %v763
    %765 = vmatmul.bf16.gmra.mxu0 %v538
    %v766 = vpop.f32.mrf.mxu0
    %v767 = vadd.f32 %v160, %v766
    %v768 = vpop.f32.mrf.mxu0
    %v769 = vadd.f32 %v160, %v768
    %770 = vmatmul.bf16.gmra.mxu0 %v541
    %v771 = vpop.f32.mrf.mxu0
    %v772 = vadd.f32 %v160, %v771
    %v773 = vpop.f32.mrf.mxu0
    %v774 = vadd.f32 %v160, %v773
    %775 = vmatmul.bf16.gmra.mxu0 %v544
    %v776 = vpop.f32.mrf.mxu0
    %v777 = vadd.f32 %v160, %v776
    %v778 = vpop.f32.mrf.mxu0
    %v779 = vadd.f32 %v160, %v778
    %780 = vmatmul.bf16.gmra.mxu0 %v547
    %v781 = vpop.f32.mrf.mxu0
    %v782 = vadd.f32 %v160, %v781
    %v783 = vpop.f32.mrf.mxu0
    %v784 = vadd.f32 %v160, %v783
    %785 = vmatmul.bf16.gmra.mxu0 %v550
    %v786 = vpop.f32.mrf.mxu0
    %v787 = vadd.f32 %v160, %v786
    %v788 = vpop.f32.mrf.mxu0
    %v789 = vadd.f32 %v160, %v788
    %790 = vmatmul.bf16.gmra.mxu0 %v553
    %v791 = vpop.f32.mrf.mxu0
    %v792 = vadd.f32 %v160, %v791
    %v793 = vpop.f32.mrf.mxu0
    %v794 = vadd.f32 %v160, %v793
    %795 = vmatmul.bf16.gmra.mxu0 %v556
    %v796 = vpop.f32.mrf.mxu0
    %v797 = vadd.f32 %v160, %v796
    %v798 = vpop.f32.mrf.mxu0
    %v799 = vadd.f32 %v160, %v798
    %800 = vmatmul.bf16.gmra.mxu0 %v559
    %v801 = vpop.f32.mrf.mxu0
    %v802 = vadd.f32 %v160, %v801
    %v803 = vpop.f32.mrf.mxu0
    %v804 = vadd.f32 %v160, %v803
    %805 = vmatmul.bf16.gmra.mxu0 %v562
    %v806 = vpop.f32.mrf.mxu0
    %v807 = vadd.f32 %v160, %v806
    %v808 = vpop.f32.mrf.mxu0
    %v809 = vadd.f32 %v160, %v808
    %810 = vmatmul.bf16.gmra.mxu0 %v565
    %v811 = vpop.f32.mrf.mxu0
    %v812 = vadd.f32 %v160, %v811
    %v813 = vpop.f32.mrf.mxu0
    %v814 = vadd.f32 %v160, %v813
    %815 = vmatmul.bf16.gmra.mxu0 %v568
    %v816 = vpop.f32.mrf.mxu0
    %v817 = vadd.f32 %v160, %v816
    %v818 = vpop.f32.mrf.mxu0
    %v819 = vadd.f32 %v160, %v818
    %820 = vmatmul.bf16.gmra.mxu0 %v571
    %v821 = vpop.f32.mrf.mxu0
    %v822 = vadd.f32 %v160, %v821
    %v823 = vpop.f32.mrf.mxu0
    %v824 = vadd.f32 %v160, %v823
    %825 = vmatmul.bf16.gmra.mxu0 %v574
    %v826 = vpop.f32.mrf.mxu0
    %v827 = vadd.f32 %v160, %v826
    %v828 = vpop.f32.mrf.mxu0
    %v829 = vadd.f32 %v160, %v828
    %830 = vmatmul.bf16.gmra.mxu0 %v577
    %v831 = vpop.f32.mrf.mxu0
    %v832 = vadd.f32 %v160, %v831
    %v833 = vpop.f32.mrf.mxu0
    %v834 = vadd.f32 %v160, %v833
    %835 = vmatmul.bf16.gmra.mxu0 %v580
    %v836 = vpop.f32.mrf.mxu0
    %v837 = vadd.f32 %v160, %v836
    %v838 = vpop.f32.mrf.mxu0
    %v839 = vadd.f32 %v160, %v838
    %840 = vmatmul.bf16.gmra.mxu0 %v583
    %v841 = vpop.f32.mrf.mxu0
    %v842 = vadd.f32 %v160, %v841
    %v843 = vpop.f32.mrf.mxu0
    %v844 = vadd.f32 %v160, %v843
    %845 = vmatmul.bf16.gmra.mxu0 %v586
    %v846 = vpop.f32.mrf.mxu0
    %v847 = vadd.f32 %v160, %v846
    %v848 = vpop.f32.mrf.mxu0
    %v849 = vadd.f32 %v160, %v848
    %850 = vmatmul.bf16.gmra.mxu0 %v589
    %v851 = vpop.f32.mrf.mxu0
    %v852 = vadd.f32 %v160, %v851
    %v853 = vpop.f32.mrf.mxu0
    %v854 = vadd.f32 %v160, %v853
    %855 = vmatmul.bf16.gmra.mxu0 %v592
    %v856 = vpop.f32.mrf.mxu0
    %v857 = vadd.f32 %v160, %v856
    %v858 = vpop.f32.mrf.mxu0
    %v859 = vadd.f32 %v160, %v858
    %860 = vmatmul.bf16.gmra.mxu0 %v595
    %v861 = vpop.f32.mrf.mxu0
    %v862 = vadd.f32 %v160, %v861
    %v863 = vpop.f32.mrf.mxu0
    %v864 = vadd.f32 %v160, %v863
    %865 = vmatmul.bf16.gmra.mxu0 %v598
    %v866 = vpop.f32.mrf.mxu0
    %v867 = vadd.f32 %v160, %v866
    %v868 = vpop.f32.mrf.mxu0
    %v869 = vadd.f32 %v160, %v868
    %870 = vmatmul.bf16.gmra.mxu0 %v601
    %v871 = vpop.f32.mrf.mxu0
    %v872 = vadd.f32 %v160, %v871
    %v873 = vpop.f32.mrf.mxu0
    %v874 = vadd.f32 %v160, %v873
    %875 = vmatmul.bf16.gmra.mxu0 %v604
    %v876 = vpop.f32.mrf.mxu0
    %v877 = vadd.f32 %v160, %v876
    %v878 = vpop.f32.mrf.mxu0
    %v879 = vadd.f32 %v160, %v878
    %880 = vmatmul.bf16.gmra.mxu0 %v607
    %v881 = vpop.f32.mrf.mxu0
    %v882 = vadd.f32 %v160, %v881
    %v883 = vpop.f32.mrf.mxu0
    %v884 = vadd.f32 %v160, %v883
    %885 = vmatmul.bf16.gmra.mxu0 %v610
    %v886 = vpop.f32.mrf.mxu0
    %v887 = vadd.f32 %v160, %v886
    %v888 = vpop.f32.mrf.mxu0
    %v889 = vadd.f32 %v160, %v888
    %890 = vmatmul.bf16.gmra.mxu0 %v613
    %v891 = vpop.f32.mrf.mxu0
    %v892 = vadd.f32 %v160, %v891
    %v893 = vpop.f32.mrf.mxu0
    %v894 = vadd.f32 %v160, %v893
    %895 = vmatmul.bf16.gmra.mxu0 %v616
    %v896 = vpop.f32.mrf.mxu0
    %v897 = vadd.f32 %v160, %v896
    %v898 = vpop.f32.mrf.mxu0
    %v899 = vadd.f32 %v160, %v898
    %900 = vmatmul.bf16.gmra.mxu0 %v619
    %v901 = vpop.f32.mrf.mxu0
    %v902 = vadd.f32 %v160, %v901
    %v903 = vpop.f32.mrf.mxu0
    %v904 = vadd.f32 %v160, %v903
    %905 = vmatmul.bf16.gmra.mxu0 %v622
    %v906 = vpop.f32.mrf.mxu0
    %v907 = vadd.f32 %v160, %v906
    %v908 = vpop.f32.mrf.mxu0
    %v909 = vadd.f32 %v160, %v908
    %910 = vmatmul.bf16.gmra.mxu0 %v625
    %v911 = vpop.f32.mrf.mxu0
    %v912 = vadd.f32 %v160, %v911
    %v913 = vpop.f32.mrf.mxu0
    %v914 = vadd.f32 %v160, %v913
    %915 = vmatmul.bf16.gmra.mxu0 %v628
    %v916 = vpop.f32.mrf.mxu0
    %v917 = vadd.f32 %v160, %v916
    %v918 = vpop.f32.mrf.mxu0
    %v919 = vadd.f32 %v160, %v918
    %920 = vmatmul.bf16.gmra.mxu0 %v631
    %v921 = vpop.f32.mrf.mxu0
    %v922 = vadd.f32 %v160, %v921
    %v923 = vpop.f32.mrf.mxu0
    %v924 = vadd.f32 %v160, %v923
    %925 = vmatmul.bf16.gmra.mxu0 %v634
    %v926 = vpop.f32.mrf.mxu0
    %v927 = vadd.f32 %v160, %v926
    %v928 = vpop.f32.mrf.mxu0
    %v929 = vadd.f32 %v160, %v928
    %930 = vmatmul.bf16.gmra.mxu0 %v637
    %v931 = vpop.f32.mrf.mxu0
    %v932 = vadd.f32 %v160, %v931
    %v933 = vpop.f32.mrf.mxu0
    %v934 = vadd.f32 %v160, %v933
    %935 = vmatmul.bf16.gmra.mxu0 %v640
    %v936 = vpop.f32.mrf.mxu0
    %v937 = vadd.f32 %v160, %v936
    %v938 = vpop.f32.mrf.mxu0
    %v939 = vadd.f32 %v160, %v938
    %940 = vmatmul.bf16.gmra.mxu0 %v643
    %v941 = vpop.f32.mrf.mxu0
    %v942 = vadd.f32 %v160, %v941
    %v943 = vpop.f32.mrf.mxu0
    %v944 = vadd.f32 %v160, %v943
    %945 = vmatmul.bf16.gmra.mxu0 %v646
    %v946 = vpop.f32.mrf.mxu0
    %v947 = vadd.f32 %v160, %v946
    %v948 = vpop.f32.mrf.mxu0
    %v949 = vadd.f32 %v160, %v948
    %950 = vmatmul.bf16.gmra.mxu0 %v649
    %v951 = vpop.f32.mrf.mxu0
    %v952 = vadd.f32 %v160, %v951
    %v953 = vpop.f32.mrf.mxu0
    %v954 = vadd.f32 %v160, %v953
    %955 = vmatmul.bf16.gmra.mxu0 %v652
    %v956 = vpop.f32.mrf.mxu0
    %v957 = vadd.f32 %v160, %v956
    %v958 = vpop.f32.mrf.mxu0
    %v959 = vadd.f32 %v160, %v958
    %960 = vmatmul.bf16.gmra.mxu0 %v655
    %v961 = vpop.f32.mrf.mxu0
    %v962 = vadd.f32 %v160, %v961
    %v963 = vpop.f32.mrf.mxu0
    %v964 = vadd.f32 %v160, %v963
    %965 = vmatmul.bf16.gmra.mxu0 %v658
    %v966 = vpop.f32.mrf.mxu0
    %v967 = vadd.f32 %v160, %v966
    %v968 = vpop.f32.mrf.mxu0
    %v969 = vadd.f32 %v160, %v968
    %970 = vmatmul.bf16.gmra.mxu0 %v661
    %v971 = vpop.f32.mrf.mxu0
    %v972 = vadd.f32 %v160, %v971
    %v973 = vpop.f32.mrf.mxu0
    %v974 = vadd.f32 %v160, %v973
    %975 = vmatmul.bf16.gmra.mxu0 %v664
    %v976 = vpop.f32.mrf.mxu0
    %v977 = vadd.f32 %v160, %v976
    %v978 = vpop.f32.mrf.mxu0
    %v979 = vadd.f32 %v160, %v978
    %980 = vmatmul.bf16.gmra.mxu0 %v667
    %v981 = vpop.f32.mrf.mxu0
    %v982 = vadd.f32 %v160, %v981
    %v983 = vpop.f32.mrf.mxu0
    %v984 = vadd.f32 %v160, %v983
    %985 = vmatmul.bf16.gmra.mxu0 %v670
    %v986 = vpop.f32.mrf.mxu0
    %v987 = vadd.f32 %v160, %v986
    %v988 = vpop.f32.mrf.mxu0
    %v989 = vadd.f32 %v160, %v988
    %990 = vmatmul.bf16.gmra.mxu0 %v673
    %v991 = vpop.f32.mrf.mxu0
    %v992 = vadd.f32 %v160, %v991
    %v993 = vpop.f32.mrf.mxu0
    %v994 = vadd.f32 %v160, %v993
    %995 = vmatmul.bf16.gmra.mxu0 %v676
    %v996 = vpop.f32.mrf.mxu0
    %v997 = vadd.f32 %v160, %v996
    %v998 = vpop.f32.mrf.mxu0
    %v999 = vadd.f32 %v160, %v998
    %1000 = vmatmul.bf16.gmra.mxu0 %v679
    %v1001 = vpop.f32.mrf.mxu0
    %v1002 = vadd.f32 %v160, %v1001
    %v1003 = vpop.f32.mrf.mxu0
    %v1004 = vadd.f32 %v160, %v1003
    %1005 = vmatmul.bf16.gmra.mxu0 %v682
    %v1006 = vpop.f32.mrf.mxu0
    %v1007 = vadd.f32 %v160, %v1006
    %v1008 = vpop.f32.mrf.mxu0
    %v1009 = vadd.f32 %v160, %v1008
    %1010 = vmatmul.bf16.gmra.mxu0 %v685
    %v1011 = vpop.f32.mrf.mxu0
    %v1012 = vadd.f32 %v160, %v1011
    %v1013 = vpop.f32.mrf.mxu0
    %v1014 = vadd.f32 %v160, %v1013
    %1015 = vdwg.mxu0
    %1016 = vmatpush.bf16.msra.mxu0 0
    %1017 = vmatpush.bf16.msra.mxu0 0
    %1018 = vmatpush.bf16.msra.mxu0 0
    %1019 = vmatpush.bf16.msra.mxu0 0
    %1020 = vmatpush.bf16.msra.mxu0 0
    %1021 = vmatpush.bf16.msra.mxu0 0
    %1022 = vmatpush.bf16.msra.mxu0 0
    %1023 = vmatpush.bf16.msra.mxu0 %v491
    %1024 = vmatmul.bf16.gmra.mxu0 %v496
    %v1025 = vpop.f32.mrf.mxu0
    %v1026 = vadd.f32 %v161, %v1025
    %v1027 = vpop.f32.mrf.mxu0
    %v1028 = vadd.f32 %v161, %v1027
    %1029 = vmatmul.bf16.gmra.mxu0 %v499
    %v1030 = vpop.f32.mrf.mxu0
    %v1031 = vadd.f32 %v161, %v1030
    %v1032 = vpop.f32.mrf.mxu0
    %v1033 = vadd.f32 %v161, %v1032
    %1034 = vmatmul.bf16.gmra.mxu0 %v502
    %v1035 = vpop.f32.mrf.mxu0
    %v1036 = vadd.f32 %v161, %v1035
    %v1037 = vpop.f32.mrf.mxu0
    %v1038 = vadd.f32 %v161, %v1037
    %1039 = vmatmul.bf16.gmra.mxu0 %v505
    %v1040 = vpop.f32.mrf.mxu0
    %v1041 = vadd.f32 %v161, %v1040
    %v1042 = vpop.f32.mrf.mxu0
    %v1043 = vadd.f32 %v161, %v1042
    %1044 = vmatmul.bf16.gmra.mxu0 %v508
    %v1045 = vpop.f32.mrf.mxu0
    %v1046 = vadd.f32 %v161, %v1045
    %v1047 = vpop.f32.mrf.mxu0
    %v1048 = vadd.f32 %v161, %v1047
    %1049 = vmatmul.bf16.gmra.mxu0 %v511
    %v1050 = vpop.f32.mrf.mxu0
    %v1051 = vadd.f32 %v161, %v1050
    %v1052 = vpop.f32.mrf.mxu0
    %v1053 = vadd.f32 %v161, %v1052
    %1054 = vmatmul.bf16.gmra.mxu0 %v514
    %v1055 = vpop.f32.mrf.mxu0
    %v1056 = vadd.f32 %v161, %v1055
    %v1057 = vpop.f32.mrf.mxu0
    %v1058 = vadd.f32 %v161, %v1057
    %1059 = vmatmul.bf16.gmra.mxu0 %v517
    %v1060 = vpop.f32.mrf.mxu0
    %v1061 = vadd.f32 %v161, %v1060
    %v1062 = vpop.f32.mrf.mxu0
    %v1063 = vadd.f32 %v161, %v1062
    %1064 = vmatmul.bf16.gmra.mxu0 %v520
    %v1065 = vpop.f32.mrf.mxu0
    %v1066 = vadd.f32 %v161, %v1065
    %v1067 = vpop.f32.mrf.mxu0
    %v1068 = vadd.f32 %v161, %v1067
    %1069 = vmatmul.bf16.gmra.mxu0 %v523
    %v1070 = vpop.f32.mrf.mxu0
    %v1071 = vadd.f32 %v161, %v1070
    %v1072 = vpop.f32.mrf.mxu0
    %v1073 = vadd.f32 %v161, %v1072
    %1074 = vmatmul.bf16.gmra.mxu0 %v526
    %v1075 = vpop.f32.mrf.mxu0
    %v1076 = vadd.f32 %v161, %v1075
    %v1077 = vpop.f32.mrf.mxu0
    %v1078 = vadd.f32 %v161, %v1077
    %1079 = vmatmul.bf16.gmra.mxu0 %v529
    %v1080 = vpop.f32.mrf.mxu0
    %v1081 = vadd.f32 %v161, %v1080
    %v1082 = vpop.f32.mrf.mxu0
    %v1083 = vadd.f32 %v161, %v1082
    %1084 = vmatmul.bf16.gmra.mxu0 %v532
    %v1085 = vpop.f32.mrf.mxu0
    %v1086 = vadd.f32 %v161, %v1085
    %v1087 = vpop.f32.mrf.mxu0
    %v1088 = vadd.f32 %v161, %v1087
    %1089 = vmatmul.bf16.gmra.mxu0 %v535
    %v1090 = vpop.f32.mrf.mxu0
    %v1091 = vadd.f32 %v161, %v1090
    %v1092 = vpop.f32.mrf.mxu0
    %v1093 = vadd.f32 %v161, %v1092
    %1094 = vmatmul.bf16.gmra.mxu0 %v538
    %v1095 = vpop.f32.mrf.mxu0
    %v1096 = vadd.f32 %v161, %v1095
    %v1097 = vpop.f32.mrf.mxu0
    %v1098 = vadd.f32 %v161, %v1097
    %1099 = vmatmul.bf16.gmra.mxu0 %v541
    %v1100 = vpop.f32.mrf.mxu0
    %v1101 = vadd.f32 %v161, %v1100
    %v1102 = vpop.f32.mrf.mxu0
    %v1103 = vadd.f32 %v161, %v1102
    %1104 = vmatmul.bf16.gmra.mxu0 %v544
    %v1105 = vpop.f32.mrf.mxu0
    %v1106 = vadd.f32 %v161, %v1105
    %v1107 = vpop.f32.mrf.mxu0
    %v1108 = vadd.f32 %v161, %v1107
    %1109 = vmatmul.bf16.gmra.mxu0 %v547
    %v1110 = vpop.f32.mrf.mxu0
    %v1111 = vadd.f32 %v161, %v1110
    %v1112 = vpop.f32.mrf.mxu0
    %v1113 = vadd.f32 %v161, %v1112
    %1114 = vmatmul.bf16.gmra.mxu0 %v550
    %v1115 = vpop.f32.mrf.mxu0
    %v1116 = vadd.f32 %v161, %v1115
    %v1117 = vpop.f32.mrf.mxu0
    %v1118 = vadd.f32 %v161, %v1117
    %1119 = vmatmul.bf16.gmra.mxu0 %v553
    %v1120 = vpop.f32.mrf.mxu0
    %v1121 = vadd.f32 %v161, %v1120
    %v1122 = vpop.f32.mrf.mxu0
    %v1123 = vadd.f32 %v161, %v1122
    %1124 = vmatmul.bf16.gmra.mxu0 %v556
    %v1125 = vpop.f32.mrf.mxu0
    %v1126 = vadd.f32 %v161, %v1125
    %v1127 = vpop.f32.mrf.mxu0
    %v1128 = vadd.f32 %v161, %v1127
    %1129 = vmatmul.bf16.gmra.mxu0 %v559
    %v1130 = vpop.f32.mrf.mxu0
    %v1131 = vadd.f32 %v161, %v1130
    %v1132 = vpop.f32.mrf.mxu0
    %v1133 = vadd.f32 %v161, %v1132
    %1134 = vmatmul.bf16.gmra.mxu0 %v562
    %v1135 = vpop.f32.mrf.mxu0
    %v1136 = vadd.f32 %v161, %v1135
    %v1137 = vpop.f32.mrf.mxu0
    %v1138 = vadd.f32 %v161, %v1137
    %1139 = vmatmul.bf16.gmra.mxu0 %v565
    %v1140 = vpop.f32.mrf.mxu0
    %v1141 = vadd.f32 %v161, %v1140
    %v1142 = vpop.f32.mrf.mxu0
    %v1143 = vadd.f32 %v161, %v1142
    %1144 = vmatmul.bf16.gmra.mxu0 %v568
    %v1145 = vpop.f32.mrf.mxu0
    %v1146 = vadd.f32 %v161, %v1145
    %v1147 = vpop.f32.mrf.mxu0
    %v1148 = vadd.f32 %v161, %v1147
    %1149 = vmatmul.bf16.gmra.mxu0 %v571
    %v1150 = vpop.f32.mrf.mxu0
    %v1151 = vadd.f32 %v161, %v1150
    %v1152 = vpop.f32.mrf.mxu0
    %v1153 = vadd.f32 %v161, %v1152
    %1154 = vmatmul.bf16.gmra.mxu0 %v574
    %v1155 = vpop.f32.mrf.mxu0
    %v1156 = vadd.f32 %v161, %v1155
    %v1157 = vpop.f32.mrf.mxu0
    %v1158 = vadd.f32 %v161, %v1157
    %1159 = vmatmul.bf16.gmra.mxu0 %v577
    %v1160 = vpop.f32.mrf.mxu0
    %v1161 = vadd.f32 %v161, %v1160
    %v1162 = vpop.f32.mrf.mxu0
    %v1163 = vadd.f32 %v161, %v1162
    %1164 = vmatmul.bf16.gmra.mxu0 %v580
    %v1165 = vpop.f32.mrf.mxu0
    %v1166 = vadd.f32 %v161, %v1165
    %v1167 = vpop.f32.mrf.mxu0
    %v1168 = vadd.f32 %v161, %v1167
    %1169 = vmatmul.bf16.gmra.mxu0 %v583
    %v1170 = vpop.f32.mrf.mxu0
    %v1171 = vadd.f32 %v161, %v1170
    %v1172 = vpop.f32.mrf.mxu0
    %v1173 = vadd.f32 %v161, %v1172
    %1174 = vmatmul.bf16.gmra.mxu0 %v586
    %v1175 = vpop.f32.mrf.mxu0
    %v1176 = vadd.f32 %v161, %v1175
    %v1177 = vpop.f32.mrf.mxu0
    %v1178 = vadd.f32 %v161, %v1177
    %1179 = vmatmul.bf16.gmra.mxu0 %v589
    %v1180 = vpop.f32.mrf.mxu0
    %v1181 = vadd.f32 %v161, %v1180
    %v1182 = vpop.f32.mrf.mxu0
    %v1183 = vadd.f32 %v161, %v1182
    %1184 = vmatmul.bf16.gmra.mxu0 %v592
    %v1185 = vpop.f32.mrf.mxu0
    %v1186 = vadd.f32 %v161, %v1185
    %v1187 = vpop.f32.mrf.mxu0
    %v1188 = vadd.f32 %v161, %v1187
    %1189 = vmatmul.bf16.gmra.mxu0 %v595
    %v1190 = vpop.f32.mrf.mxu0
    %v1191 = vadd.f32 %v161, %v1190
    %v1192 = vpop.f32.mrf.mxu0
    %v1193 = vadd.f32 %v161, %v1192
    %1194 = vmatmul.bf16.gmra.mxu0 %v598
    %v1195 = vpop.f32.mrf.mxu0
    %v1196 = vadd.f32 %v161, %v1195
    %v1197 = vpop.f32.mrf.mxu0
    %v1198 = vadd.f32 %v161, %v1197
    %1199 = vmatmul.bf16.gmra.mxu0 %v601
    %v1200 = vpop.f32.mrf.mxu0
    %v1201 = vadd.f32 %v161, %v1200
    %v1202 = vpop.f32.mrf.mxu0
    %v1203 = vadd.f32 %v161, %v1202
    %1204 = vmatmul.bf16.gmra.mxu0 %v604
    %v1205 = vpop.f32.mrf.mxu0
    %v1206 = vadd.f32 %v161, %v1205
    %v1207 = vpop.f32.mrf.mxu0
    %v1208 = vadd.f32 %v161, %v1207
    %1209 = vmatmul.bf16.gmra.mxu0 %v607
    %v1210 = vpop.f32.mrf.mxu0
    %v1211 = vadd.f32 %v161, %v1210
    %v1212 = vpop.f32.mrf.mxu0
    %v1213 = vadd.f32 %v161, %v1212
    %1214 = vmatmul.bf16.gmra.mxu0 %v610
    %v1215 = vpop.f32.mrf.mxu0
    %v1216 = vadd.f32 %v161, %v1215
    %v1217 = vpop.f32.mrf.mxu0
    %v1218 = vadd.f32 %v161, %v1217
    %1219 = vmatmul.bf16.gmra.mxu0 %v613
    %v1220 = vpop.f32.mrf.mxu0
    %v1221 = vadd.f32 %v161, %v1220
    %v1222 = vpop.f32.mrf.mxu0
    %v1223 = vadd.f32 %v161, %v1222
    %1224 = vmatmul.bf16.gmra.mxu0 %v616
    %v1225 = vpop.f32.mrf.mxu0
    %v1226 = vadd.f32 %v161, %v1225
    %v1227 = vpop.f32.mrf.mxu0
    %v1228 = vadd.f32 %v161, %v1227
    %1229 = vmatmul.bf16.gmra.mxu0 %v619
    %v1230 = vpop.f32.mrf.mxu0
    %v1231 = vadd.f32 %v161, %v1230
    %v1232 = vpop.f32.mrf.mxu0
    %v1233 = vadd.f32 %v161, %v1232
    %1234 = vmatmul.bf16.gmra.mxu0 %v622
    %v1235 = vpop.f32.mrf.mxu0
    %v1236 = vadd.f32 %v161, %v1235
    %v1237 = vpop.f32.mrf.mxu0
    %v1238 = vadd.f32 %v161, %v1237
    %1239 = vmatmul.bf16.gmra.mxu0 %v625
    %v1240 = vpop.f32.mrf.mxu0
    %v1241 = vadd.f32 %v161, %v1240
    %v1242 = vpop.f32.mrf.mxu0
    %v1243 = vadd.f32 %v161, %v1242
    %1244 = vmatmul.bf16.gmra.mxu0 %v628
    %v1245 = vpop.f32.mrf.mxu0
    %v1246 = vadd.f32 %v161, %v1245
    %v1247 = vpop.f32.mrf.mxu0
    %v1248 = vadd.f32 %v161, %v1247
    %1249 = vmatmul.bf16.gmra.mxu0 %v631
    %v1250 = vpop.f32.mrf.mxu0
    %v1251 = vadd.f32 %v161, %v1250
    %v1252 = vpop.f32.mrf.mxu0
    %v1253 = vadd.f32 %v161, %v1252
    %1254 = vmatmul.bf16.gmra.mxu0 %v634
    %v1255 = vpop.f32.mrf.mxu0
    %v1256 = vadd.f32 %v161, %v1255
    %v1257 = vpop.f32.mrf.mxu0
    %v1258 = vadd.f32 %v161, %v1257
    %1259 = vmatmul.bf16.gmra.mxu0 %v637
    %v1260 = vpop.f32.mrf.mxu0
    %v1261 = vadd.f32 %v161, %v1260
    %v1262 = vpop.f32.mrf.mxu0
    %v1263 = vadd.f32 %v161, %v1262
    %1264 = vmatmul.bf16.gmra.mxu0 %v640
    %v1265 = vpop.f32.mrf.mxu0
    %v1266 = vadd.f32 %v161, %v1265
    %v1267 = vpop.f32.mrf.mxu0
    %v1268 = vadd.f32 %v161, %v1267
    %1269 = vmatmul.bf16.gmra.mxu0 %v643
    %v1270 = vpop.f32.mrf.mxu0
    %v1271 = vadd.f32 %v161, %v1270
    %v1272 = vpop.f32.mrf.mxu0
    %v1273 = vadd.f32 %v161, %v1272
    %1274 = vmatmul.bf16.gmra.mxu0 %v646
    %v1275 = vpop.f32.mrf.mxu0
    %v1276 = vadd.f32 %v161, %v1275
    %v1277 = vpop.f32.mrf.mxu0
    %v1278 = vadd.f32 %v161, %v1277
    %1279 = vmatmul.bf16.gmra.mxu0 %v649
    %v1280 = vpop.f32.mrf.mxu0
    %v1281 = vadd.f32 %v161, %v1280
    %v1282 = vpop.f32.mrf.mxu0
    %v1283 = vadd.f32 %v161, %v1282
    %1284 = vmatmul.bf16.gmra.mxu0 %v652
    %v1285 = vpop.f32.mrf.mxu0
    %v1286 = vadd.f32 %v161, %v1285
    %v1287 = vpop.f32.mrf.mxu0
    %v1288 = vadd.f32 %v161, %v1287
    %1289 = vmatmul.bf16.gmra.mxu0 %v655
    %v1290 = vpop.f32.mrf.mxu0
    %v1291 = vadd.f32 %v161, %v1290
    %v1292 = vpop.f32.mrf.mxu0
    %v1293 = vadd.f32 %v161, %v1292
    %1294 = vmatmul.bf16.gmra.mxu0 %v658
    %v1295 = vpop.f32.mrf.mxu0
    %v1296 = vadd.f32 %v161, %v1295
    %v1297 = vpop.f32.mrf.mxu0
    %v1298 = vadd.f32 %v161, %v1297
    %1299 = vmatmul.bf16.gmra.mxu0 %v661
    %v1300 = vpop.f32.mrf.mxu0
    %v1301 = vadd.f32 %v161, %v1300
    %v1302 = vpop.f32.mrf.mxu0
    %v1303 = vadd.f32 %v161, %v1302
    %1304 = vmatmul.bf16.gmra.mxu0 %v664
    %v1305 = vpop.f32.mrf.mxu0
    %v1306 = vadd.f32 %v161, %v1305
    %v1307 = vpop.f32.mrf.mxu0
    %v1308 = vadd.f32 %v161, %v1307
    %1309 = vmatmul.bf16.gmra.mxu0 %v667
    %v1310 = vpop.f32.mrf.mxu0
    %v1311 = vadd.f32 %v161, %v1310
    %v1312 = vpop.f32.mrf.mxu0
    %v1313 = vadd.f32 %v161, %v1312
    %1314 = vmatmul.bf16.gmra.mxu0 %v670
    %v1315 = vpop.f32.mrf.mxu0
    %v1316 = vadd.f32 %v161, %v1315
    %v1317 = vpop.f32.mrf.mxu0
    %v1318 = vadd.f32 %v161, %v1317
    %1319 = vmatmul.bf16.gmra.mxu0 %v673
    %v1320 = vpop.f32.mrf.mxu0
    %v1321 = vadd.f32 %v161, %v1320
    %v1322 = vpop.f32.mrf.mxu0
    %v1323 = vadd.f32 %v161, %v1322
    %1324 = vmatmul.bf16.gmra.mxu0 %v676
    %v1325 = vpop.f32.mrf.mxu0
    %v1326 = vadd.f32 %v161, %v1325
    %v1327 = vpop.f32.mrf.mxu0
    %v1328 = vadd.f32 %v161, %v1327
    %1329 = vmatmul.bf16.gmra.mxu0 %v679
    %v1330 = vpop.f32.mrf.mxu0
    %v1331 = vadd.f32 %v161, %v1330
    %v1332 = vpop.f32.mrf.mxu0
    %v1333 = vadd.f32 %v161, %v1332
    %1334 = vmatmul.bf16.gmra.mxu0 %v682
    %v1335 = vpop.f32.mrf.mxu0
    %v1336 = vadd.f32 %v161, %v1335
    %v1337 = vpop.f32.mrf.mxu0
    %v1338 = vadd.f32 %v161, %v1337
    %1339 = vmatmul.bf16.gmra.mxu0 %v685
    %v1340 = vpop.f32.mrf.mxu0
    %v1341 = vadd.f32 %v161, %v1340
    %v1342 = vpop.f32.mrf.mxu0
    %v1343 = vadd.f32 %v161, %v1342
    %1344 = vdwg.mxu0
    %v1345 = vmax.f32 %v697, 0.0
    %v1346 = vmax.f32 %v1026, 0.0
    %v1347 = vmax.f32 %v699, 0.0
    %v1348 = vmax.f32 %v1028, 0.0
    %v1349 = vmax.f32 %v702, 0.0
    %v1350 = vmax.f32 %v1031, 0.0
    %v1351 = vmax.f32 %v704, 0.0
    %v1352 = vmax.f32 %v1033, 0.0
    %v1353 = vmax.f32 %v707, 0.0
    %v1354 = vmax.f32 %v1036, 0.0
    %v1355 = vmax.f32 %v709, 0.0
    %v1356 = vmax.f32 %v1038, 0.0
    %v1357 = vmax.f32 %v712, 0.0
    %v1358 = vmax.f32 %v1041, 0.0
    %v1359 = vmax.f32 %v714, 0.0
    %v1360 = vmax.f32 %v1043, 0.0
    %v1361 = vmax.f32 %v717, 0.0
    %v1362 = vmax.f32 %v1046, 0.0
    %v1363 = vmax.f32 %v719, 0.0
    %v1364 = vmax.f32 %v1048, 0.0
    %v1365 = vmax.f32 %v722, 0.0
    %v1366 = vmax.f32 %v1051, 0.0
    %v1367 = vmax.f32 %v724, 0.0
    %v1368 = vmax.f32 %v1053, 0.0
    %v1369 = vmax.f32 %v727, 0.0
    %v1370 = vmax.f32 %v1056, 0.0
    %v1371 = vmax.f32 %v729, 0.0
    %v1372 = vmax.f32 %v1058, 0.0
    %v1373 = vmax.f32 %v732, 0.0
    %v1374 = vmax.f32 %v1061, 0.0
    %v1375 = vmax.f32 %v734, 0.0
    %v1376 = vmax.f32 %v1063, 0.0
    %v1377 = vmax.f32 %v737, 0.0
    %v1378 = vmax.f32 %v1066, 0.0
    %v1379 = vmax.f32 %v739, 0.0
    %v1380 = vmax.f32 %v1068, 0.0
    %v1381 = vmax.f32 %v742, 0.0
    %v1382 = vmax.f32 %v1071, 0.0
    %v1383 = vmax.f32 %v744, 0.0
    %v1384 = vmax.f32 %v1073, 0.0
    %v1385 = vmax.f32 %v747, 0.0
    %v1386 = vmax.f32 %v1076, 0.0
    %v1387 = vmax.f32 %v749, 0.0
    %v1388 = vmax.f32 %v1078, 0.0
    %v1389 = vmax.f32 %v752, 0.0
    %v1390 = vmax.f32 %v1081, 0.0
    %v1391 = vmax.f32 %v754, 0.0
    %v1392 = vmax.f32 %v1083, 0.0
    %v1393 = vmax.f32 %v757, 0.0
    %v1394 = vmax.f32 %v1086, 0.0
    %v1395 = vmax.f32 %v759, 0.0
    %v1396 = vmax.f32 %v1088, 0.0
    %v1397 = vmax.f32 %v762, 0.0
    %v1398 = vmax.f32 %v1091, 0.0
    %v1399 = vmax.f32 %v764, 0.0
    %v1400 = vmax.f32 %v1093, 0.0
    %v1401 = vmax.f32 %v767, 0.0
    %v1402 = vmax.f32 %v1096, 0.0
    %v1403 = vmax.f32 %v769, 0.0
    %v1404 = vmax.f32 %v1098, 0.0
    %v1405 = vmax.f32 %v772, 0.0
    %v1406 = vmax.f32 %v1101, 0.0
    %v1407 = vmax.f32 %v774, 0.0
    %v1408 = vmax.f32 %v1103, 0.0
    %v1409 = vmax.f32 %v777, 0.0
    %v1410 = vmax.f32 %v1106, 0.0
    %v1411 = vmax.f32 %v779, 0.0
    %v1412 = vmax.f32 %v1108, 0.0
    %v1413 = vmax.f32 %v782, 0.0
    %v1414 = vmax.f32 %v1111, 0.0
    %v1415 = vmax.f32 %v784, 0.0
    %v1416 = vmax.f32 %v1113, 0.0
    %v1417 = vmax.f32 %v787, 0.0
    %v1418 = vmax.f32 %v1116, 0.0
    %v1419 = vmax.f32 %v789, 0.0
    %v1420 = vmax.f32 %v1118, 0.0
    %v1421 = vmax.f32 %v792, 0.0
    %v1422 = vmax.f32 %v1121, 0.0
    %v1423 = vmax.f32 %v794, 0.0
    %v1424 = vmax.f32 %v1123, 0.0
    %v1425 = vmax.f32 %v797, 0.0
    %v1426 = vmax.f32 %v1126, 0.0
    %v1427 = vmax.f32 %v799, 0.0
    %v1428 = vmax.f32 %v1128, 0.0
    %v1429 = vmax.f32 %v802, 0.0
    %v1430 = vmax.f32 %v1131, 0.0
    %v1431 = vmax.f32 %v804, 0.0
    %v1432 = vmax.f32 %v1133, 0.0
    %v1433 = vmax.f32 %v807, 0.0
    %v1434 = vmax.f32 %v1136, 0.0
    %v1435 = vmax.f32 %v809, 0.0
    %v1436 = vmax.f32 %v1138, 0.0
    %v1437 = vmax.f32 %v812, 0.0
    %v1438 = vmax.f32 %v1141, 0.0
    %v1439 = vmax.f32 %v814, 0.0
    %v1440 = vmax.f32 %v1143, 0.0
    %v1441 = vmax.f32 %v817, 0.0
    %v1442 = vmax.f32 %v1146, 0.0
    %v1443 = vmax.f32 %v819, 0.0
    %v1444 = vmax.f32 %v1148, 0.0
    %v1445 = vmax.f32 %v822, 0.0
    %v1446 = vmax.f32 %v1151, 0.0
    %v1447 = vmax.f32 %v824, 0.0
    %v1448 = vmax.f32 %v1153, 0.0
    %v1449 = vmax.f32 %v827, 0.0
    %v1450 = vmax.f32 %v1156, 0.0
    %v1451 = vmax.f32 %v829, 0.0
    %v1452 = vmax.f32 %v1158, 0.0
    %v1453 = vmax.f32 %v832, 0.0
    %v1454 = vmax.f32 %v1161, 0.0
    %v1455 = vmax.f32 %v834, 0.0
    %v1456 = vmax.f32 %v1163, 0.0
    %v1457 = vmax.f32 %v837, 0.0
    %v1458 = vmax.f32 %v1166, 0.0
    %v1459 = vmax.f32 %v839, 0.0
    %v1460 = vmax.f32 %v1168, 0.0
    %v1461 = vmax.f32 %v842, 0.0
    %v1462 = vmax.f32 %v1171, 0.0
    %v1463 = vmax.f32 %v844, 0.0
    %v1464 = vmax.f32 %v1173, 0.0
    %v1465 = vmax.f32 %v847, 0.0
    %v1466 = vmax.f32 %v1176, 0.0
    %v1467 = vmax.f32 %v849, 0.0
    %v1468 = vmax.f32 %v1178, 0.0
    %v1469 = vmax.f32 %v852, 0.0
    %v1470 = vmax.f32 %v1181, 0.0
    %v1471 = vmax.f32 %v854, 0.0
    %v1472 = vmax.f32 %v1183, 0.0
    %v1473 = vmax.f32 %v857, 0.0
    %v1474 = vmax.f32 %v1186, 0.0
    %v1475 = vmax.f32 %v859, 0.0
    %v1476 = vmax.f32 %v1188, 0.0
    %v1477 = vmax.f32 %v862, 0.0
    %v1478 = vmax.f32 %v1191, 0.0
    %v1479 = vmax.f32 %v864, 0.0
    %v1480 = vmax.f32 %v1193, 0.0
    %v1481 = vmax.f32 %v867, 0.0
    %v1482 = vmax.f32 %v1196, 0.0
    %v1483 = vmax.f32 %v869, 0.0
    %v1484 = vmax.f32 %v1198, 0.0
    %v1485 = vmax.f32 %v872, 0.0
    %v1486 = vmax.f32 %v1201, 0.0
    %v1487 = vmax.f32 %v874, 0.0
    %v1488 = vmax.f32 %v1203, 0.0
    %v1489 = vmax.f32 %v877, 0.0
    %v1490 = vmax.f32 %v1206, 0.0
    %v1491 = vmax.f32 %v879, 0.0
    %v1492 = vmax.f32 %v1208, 0.0
    %v1493 = vmax.f32 %v882, 0.0
    %v1494 = vmax.f32 %v1211, 0.0
    %v1495 = vmax.f32 %v884, 0.0
    %v1496 = vmax.f32 %v1213, 0.0
    %v1497 = vmax.f32 %v887, 0.0
    %v1498 = vmax.f32 %v1216, 0.0
    %v1499 = vmax.f32 %v889, 0.0
    %v1500 = vmax.f32 %v1218, 0.0
    %v1501 = vmax.f32 %v892, 0.0
    %v1502 = vmax.f32 %v1221, 0.0
    %v1503 = vmax.f32 %v894, 0.0
    %v1504 = vmax.f32 %v1223, 0.0
    %v1505 = vmax.f32 %v897, 0.0
    %v1506 = vmax.f32 %v1226, 0.0
    %v1507 = vmax.f32 %v899, 0.0
    %v1508 = vmax.f32 %v1228, 0.0
    %v1509 = vmax.f32 %v902, 0.0
    %v1510 = vmax.f32 %v1231, 0.0
    %v1511 = vmax.f32 %v904, 0.0
    %v1512 = vmax.f32 %v1233, 0.0
    %v1513 = vmax.f32 %v907, 0.0
    %v1514 = vmax.f32 %v1236, 0.0
    %v1515 = vmax.f32 %v909, 0.0
    %v1516 = vmax.f32 %v1238, 0.0
    %v1517 = vmax.f32 %v912, 0.0
    %v1518 = vmax.f32 %v1241, 0.0
    %v1519 = vmax.f32 %v914, 0.0
    %v1520 = vmax.f32 %v1243, 0.0
    %v1521 = vmax.f32 %v917, 0.0
    %v1522 = vmax.f32 %v1246, 0.0
    %v1523 = vmax.f32 %v919, 0.0
    %v1524 = vmax.f32 %v1248, 0.0
    %v1525 = vmax.f32 %v922, 0.0
    %v1526 = vmax.f32 %v1251, 0.0
    %v1527 = vmax.f32 %v924, 0.0
    %v1528 = vmax.f32 %v1253, 0.0
    %v1529 = vmax.f32 %v927, 0.0
    %v1530 = vmax.f32 %v1256, 0.0
    %v1531 = vmax.f32 %v929, 0.0
    %v1532 = vmax.f32 %v1258, 0.0
    %v1533 = vmax.f32 %v932, 0.0
    %v1534 = vmax.f32 %v1261, 0.0
    %v1535 = vmax.f32 %v934, 0.0
    %v1536 = vmax.f32 %v1263, 0.0
    %v1537 = vmax.f32 %v937, 0.0
    %v1538 = vmax.f32 %v1266, 0.0
    %v1539 = vmax.f32 %v939, 0.0
    %v1540 = vmax.f32 %v1268, 0.0
    %v1541 = vmax.f32 %v942, 0.0
    %v1542 = vmax.f32 %v1271, 0.0
    %v1543 = vmax.f32 %v944, 0.0
    %v1544 = vmax.f32 %v1273, 0.0
    %v1545 = vmax.f32 %v947, 0.0
    %v1546 = vmax.f32 %v1276, 0.0
    %v1547 = vmax.f32 %v949, 0.0
    %v1548 = vmax.f32 %v1278, 0.0
    %v1549 = vmax.f32 %v952, 0.0
    %v1550 = vmax.f32 %v1281, 0.0
    %v1551 = vmax.f32 %v954, 0.0
    %v1552 = vmax.f32 %v1283, 0.0
    %v1553 = vmax.f32 %v957, 0.0
    %v1554 = vmax.f32 %v1286, 0.0
    %v1555 = vmax.f32 %v959, 0.0
    %v1556 = vmax.f32 %v1288, 0.0
    %v1557 = vmax.f32 %v962, 0.0
    %v1558 = vmax.f32 %v1291, 0.0
    %v1559 = vmax.f32 %v964, 0.0
    %v1560 = vmax.f32 %v1293, 0.0
    %v1561 = vmax.f32 %v967, 0.0
    %v1562 = vmax.f32 %v1296, 0.0
    %v1563 = vmax.f32 %v969, 0.0
    %v1564 = vmax.f32 %v1298, 0.0
    %v1565 = vmax.f32 %v972, 0.0
    %v1566 = vmax.f32 %v1301, 0.0
    %v1567 = vmax.f32 %v974, 0.0
    %v1568 = vmax.f32 %v1303, 0.0
    %v1569 = vmax.f32 %v977, 0.0
    %v1570 = vmax.f32 %v1306, 0.0
    %v1571 = vmax.f32 %v979, 0.0
    %v1572 = vmax.f32 %v1308, 0.0
    %v1573 = vmax.f32 %v982, 0.0
    %v1574 = vmax.f32 %v1311, 0.0
    %v1575 = vmax.f32 %v984, 0.0
    %v1576 = vmax.f32 %v1313, 0.0
    %v1577 = vmax.f32 %v987, 0.0
    %v1578 = vmax.f32 %v1316, 0.0
    %v1579 = vmax.f32 %v989, 0.0
    %v1580 = vmax.f32 %v1318, 0.0
    %v1581 = vmax.f32 %v992, 0.0
    %v1582 = vmax.f32 %v1321, 0.0
    %v1583 = vmax.f32 %v994, 0.0
    %v1584 = vmax.f32 %v1323, 0.0
    %v1585 = vmax.f32 %v997, 0.0
    %v1586 = vmax.f32 %v1326, 0.0
    %v1587 = vmax.f32 %v999, 0.0
    %v1588 = vmax.f32 %v1328, 0.0
    %v1589 = vmax.f32 %v1002, 0.0
    %v1590 = vmax.f32 %v1331, 0.0
    %v1591 = vmax.f32 %v1004, 0.0
    %v1592 = vmax.f32 %v1333, 0.0
    %v1593 = vmax.f32 %v1007, 0.0
    %v1594 = vmax.f32 %v1336, 0.0
    %v1595 = vmax.f32 %v1009, 0.0
    %v1596 = vmax.f32 %v1338, 0.0
    %v1597 = vmax.f32 %v1012, 0.0
    %v1598 = vmax.f32 %v1341, 0.0
    %v1599 = vmax.f32 %v1014, 0.0
    %v1600 = vmax.f32 %v1343, 0.0
    %v1601 = vpack.c.bf16 %v1347, %v1345
    %v1602 = vpack.c.bf16 %v1348, %v1346
    %v1603 = vpack.c.bf16 %v1351, %v1349
    %v1604 = vpack.c.bf16 %v1352, %v1350
    %v1605 = vpack.c.bf16 %v1355, %v1353
    %v1606 = vpack.c.bf16 %v1356, %v1354
    %v1607 = vpack.c.bf16 %v1359, %v1357
    %v1608 = vpack.c.bf16 %v1360, %v1358
    %v1609 = vpack.c.bf16 %v1363, %v1361
    %v1610 = vpack.c.bf16 %v1364, %v1362
    %v1611 = vpack.c.bf16 %v1367, %v1365
    %v1612 = vpack.c.bf16 %v1368, %v1366
    %v1613 = vpack.c.bf16 %v1371, %v1369
    %v1614 = vpack.c.bf16 %v1372, %v1370
    %v1615 = vpack.c.bf16 %v1375, %v1373
    %v1616 = vpack.c.bf16 %v1376, %v1374
    %v1617 = vpack.c.bf16 %v1379, %v1377
    %v1618 = vpack.c.bf16 %v1380, %v1378
    %v1619 = vpack.c.bf16 %v1383, %v1381
    %v1620 = vpack.c.bf16 %v1384, %v1382
    %v1621 = vpack.c.bf16 %v1387, %v1385
    %v1622 = vpack.c.bf16 %v1388, %v1386
    %v1623 = vpack.c.bf16 %v1391, %v1389
    %v1624 = vpack.c.bf16 %v1392, %v1390
    %v1625 = vpack.c.bf16 %v1395, %v1393
    %v1626 = vpack.c.bf16 %v1396, %v1394
    %v1627 = vpack.c.bf16 %v1399, %v1397
    %v1628 = vpack.c.bf16 %v1400, %v1398
    %v1629 = vpack.c.bf16 %v1403, %v1401
    %v1630 = vpack.c.bf16 %v1404, %v1402
    %v1631 = vpack.c.bf16 %v1407, %v1405
    %v1632 = vpack.c.bf16 %v1408, %v1406
    %v1633 = vpack.c.bf16 %v1411, %v1409
    %v1634 = vpack.c.bf16 %v1412, %v1410
    %v1635 = vpack.c.bf16 %v1415, %v1413
    %v1636 = vpack.c.bf16 %v1416, %v1414
    %v1637 = vpack.c.bf16 %v1419, %v1417
    %v1638 = vpack.c.bf16 %v1420, %v1418
    %v1639 = vpack.c.bf16 %v1423, %v1421
    %v1640 = vpack.c.bf16 %v1424, %v1422
    %v1641 = vpack.c.bf16 %v1427, %v1425
    %v1642 = vpack.c.bf16 %v1428, %v1426
    %v1643 = vpack.c.bf16 %v1431, %v1429
    %v1644 = vpack.c.bf16 %v1432, %v1430
    %v1645 = vpack.c.bf16 %v1435, %v1433
    %v1646 = vpack.c.bf16 %v1436, %v1434
    %v1647 = vpack.c.bf16 %v1439, %v1437
    %v1648 = vpack.c.bf16 %v1440, %v1438
    %v1649 = vpack.c.bf16 %v1443, %v1441
    %v1650 = vpack.c.bf16 %v1444, %v1442
    %v1651 = vpack.c.bf16 %v1447, %v1445
    %v1652 = vpack.c.bf16 %v1448, %v1446
    %v1653 = vpack.c.bf16 %v1451, %v1449
    %v1654 = vpack.c.bf16 %v1452, %v1450
    %v1655 = vpack.c.bf16 %v1455, %v1453
    %v1656 = vpack.c.bf16 %v1456, %v1454
    %v1657 = vpack.c.bf16 %v1459, %v1457
    %v1658 = vpack.c.bf16 %v1460, %v1458
    %v1659 = vpack.c.bf16 %v1463, %v1461
    %v1660 = vpack.c.bf16 %v1464, %v1462
    %v1661 = vpack.c.bf16 %v1467, %v1465
    %v1662 = vpack.c.bf16 %v1468, %v1466
    %v1663 = vpack.c.bf16 %v1471, %v1469
    %v1664 = vpack.c.bf16 %v1472, %v1470
    %v1665 = vpack.c.bf16 %v1475, %v1473
    %v1666 = vpack.c.bf16 %v1476, %v1474
    %v1667 = vpack.c.bf16 %v1479, %v1477
    %v1668 = vpack.c.bf16 %v1480, %v1478
    %v1669 = vpack.c.bf16 %v1483, %v1481
    %v1670 = vpack.c.bf16 %v1484, %v1482
    %v1671 = vpack.c.bf16 %v1487, %v1485
    %v1672 = vpack.c.bf16 %v1488, %v1486
    %v1673 = vpack.c.bf16 %v1491, %v1489
    %v1674 = vpack.c.bf16 %v1492, %v1490
    %v1675 = vpack.c.bf16 %v1495, %v1493
    %v1676 = vpack.c.bf16 %v1496, %v1494
    %v1677 = vpack.c.bf16 %v1499, %v1497
    %v1678 = vpack.c.bf16 %v1500, %v1498
    %v1679 = vpack.c.bf16 %v1503, %v1501
    %v1680 = vpack.c.bf16 %v1504, %v1502
    %v1681 = vpack.c.bf16 %v1507, %v1505
    %v1682 = vpack.c.bf16 %v1508, %v1506
    %v1683 = vpack.c.bf16 %v1511, %v1509
    %v1684 = vpack.c.bf16 %v1512, %v1510
    %v1685 = vpack.c.bf16 %v1515, %v1513
    %v1686 = vpack.c.bf16 %v1516, %v1514
    %v1687 = vpack.c.bf16 %v1519, %v1517
    %v1688 = vpack.c.bf16 %v1520, %v1518
    %v1689 = vpack.c.bf16 %v1523, %v1521
    %v1690 = vpack.c.bf16 %v1524, %v1522
    %v1691 = vpack.c.bf16 %v1527, %v1525
    %v1692 = vpack.c.bf16 %v1528, %v1526
    %v1693 = vpack.c.bf16 %v1531, %v1529
    %v1694 = vpack.c.bf16 %v1532, %v1530
    %v1695 = vpack.c.bf16 %v1535, %v1533
    %v1696 = vpack.c.bf16 %v1536, %v1534
    %v1697 = vpack.c.bf16 %v1539, %v1537
    %v1698 = vpack.c.bf16 %v1540, %v1538
    %v1699 = vpack.c.bf16 %v1543, %v1541
    %v1700 = vpack.c.bf16 %v1544, %v1542
    %v1701 = vpack.c.bf16 %v1547, %v1545
    %v1702 = vpack.c.bf16 %v1548, %v1546
    %v1703 = vpack.c.bf16 %v1551, %v1549
    %v1704 = vpack.c.bf16 %v1552, %v1550
    %v1705 = vpack.c.bf16 %v1555, %v1553
    %v1706 = vpack.c.bf16 %v1556, %v1554
    %v1707 = vpack.c.bf16 %v1559, %v1557
    %v1708 = vpack.c.bf16 %v1560, %v1558
    %v1709 = vpack.c.bf16 %v1563, %v1561
    %v1710 = vpack.c.bf16 %v1564, %v1562
    %v1711 = vpack.c.bf16 %v1567, %v1565
    %v1712 = vpack.c.bf16 %v1568, %v1566
    %v1713 = vpack.c.bf16 %v1571, %v1569
    %v1714 = vpack.c.bf16 %v1572, %v1570
    %v1715 = vpack.c.bf16 %v1575, %v1573
    %v1716 = vpack.c.bf16 %v1576, %v1574
    %v1717 = vpack.c.bf16 %v1579, %v1577
    %v1718 = vpack.c.bf16 %v1580, %v1578
    %v1719 = vpack.c.bf16 %v1583, %v1581
    %v1720 = vpack.c.bf16 %v1584, %v1582
    %v1721 = vpack.c.bf16 %v1587, %v1585
    %v1722 = vpack.c.bf16 %v1588, %v1586
    %v1723 = vpack.c.bf16 %v1591, %v1589
    %v1724 = vpack.c.bf16 %v1592, %v1590
    %v1725 = vpack.c.bf16 %v1595, %v1593
    %v1726 = vpack.c.bf16 %v1596, %v1594
    %v1727 = vpack.c.bf16 %v1599, %v1597
    %v1728 = vpack.c.bf16 %v1600, %v1598
    %v1729 = vld [vmem:[%s3] sm:$0xff]
    %v1730 = vld [vmem:[%s3 + $0x8] sm:$0xff]
    %v1731 = vld [vmem:[%s3 + $0x10] sm:$0xff]
    %v1732 = vld [vmem:[%s3 + $0x18] sm:$0xff]
    %v1733 = vld [vmem:[%s3 + $0x20] sm:$0xff]
    %v1734 = vld [vmem:[%s3 + $0x28] sm:$0xff]
    %v1735 = vld [vmem:[%s3 + $0x30] sm:$0xff]
    %v1736 = vld [vmem:[%s3 + $0x38] sm:$0xff]
    %v1737 = vld [vmem:[%s3 + $0x40] sm:$0xff]
    %v1738 = vld [vmem:[%s3 + $0x48] sm:$0xff]
    %v1739 = vld [vmem:[%s3 + $0x50] sm:$0xff]
    %v1740 = vld [vmem:[%s3 + $0x58] sm:$0xff]
    %v1741 = vld [vmem:[%s3 + $0x60] sm:$0xff]
    %v1742 = vld [vmem:[%s3 + $0x68] sm:$0xff]
    %v1743 = vld [vmem:[%s3 + $0x70] sm:$0xff]
    %v1744 = vld [vmem:[%s3 + $0x78] sm:$0xff]
    %v1745 = vld [vmem:[%s3 + $0x80] sm:$0xff]
    %v1746 = vld [vmem:[%s3 + $0x88] sm:$0xff]
    %v1747 = vld [vmem:[%s3 + $0x90] sm:$0xff]
    %v1748 = vld [vmem:[%s3 + $0x98] sm:$0xff]
    %v1749 = vld [vmem:[%s3 + $0xa0] sm:$0xff]
    %v1750 = vld [vmem:[%s3 + $0xa8] sm:$0xff]
    %v1751 = vld [vmem:[%s3 + $0xb0] sm:$0xff]
    %v1752 = vld [vmem:[%s3 + $0xb8] sm:$0xff]
    %v1753 = vld [vmem:[%s3 + $0xc0] sm:$0xff]
    %v1754 = vld [vmem:[%s3 + $0xc8] sm:$0xff]
    %v1755 = vld [vmem:[%s3 + $0xd0] sm:$0xff]
    %v1756 = vld [vmem:[%s3 + $0xd8] sm:$0xff]
    %v1757 = vld [vmem:[%s3 + $0xe0] sm:$0xff]
    %v1758 = vld [vmem:[%s3 + $0xe8] sm:$0xff]
    %v1759 = vld [vmem:[%s3 + $0xf0] sm:$0xff]
    %v1760 = vld [vmem:[%s3 + $0xf8] sm:$0xff]
    %v1761 = vld [vmem:[%s4] sm:$0x3]
    %v1763 = vperm.slane %v1761, 0
    %v1764 = vperm.slane %v1761, 1
    %v1799 = vunpack.c.l.b16 %v1729
    %v1800 = vunpack.c.h.b16 %v1729
    %v1801 = vunpack.c.l.b16 %v1730
    %v1802 = vunpack.c.h.b16 %v1730
    %v1803 = vunpack.c.l.b16 %v1731
    %v1804 = vunpack.c.h.b16 %v1731
    %v1805 = vunpack.c.l.b16 %v1732
    %v1806 = vunpack.c.h.b16 %v1732
    %v1807 = vunpack.c.l.b16 %v1733
    %v1808 = vunpack.c.h.b16 %v1733
    %v1809 = vunpack.c.l.b16 %v1734
    %v1810 = vunpack.c.h.b16 %v1734
    %v1811 = vunpack.c.l.b16 %v1735
    %v1812 = vunpack.c.h.b16 %v1735
    %v1813 = vunpack.c.l.b16 %v1736
    %v1814 = vunpack.c.h.b16 %v1736
    %v1815 = vunpack.c.l.b16 %v1737
    %v1816 = vunpack.c.h.b16 %v1737
    %v1817 = vunpack.c.l.b16 %v1738
    %v1818 = vunpack.c.h.b16 %v1738
    %v1819 = vunpack.c.l.b16 %v1739
    %v1820 = vunpack.c.h.b16 %v1739
    %v1821 = vunpack.c.l.b16 %v1740
    %v1822 = vunpack.c.h.b16 %v1740
    %v1823 = vunpack.c.l.b16 %v1741
    %v1824 = vunpack.c.h.b16 %v1741
    %v1825 = vunpack.c.l.b16 %v1742
    %v1826 = vunpack.c.h.b16 %v1742
    %v1827 = vunpack.c.l.b16 %v1743
    %v1828 = vunpack.c.h.b16 %v1743
    %v1829 = vunpack.c.l.b16 %v1744
    %v1830 = vunpack.c.h.b16 %v1744
    %v1831 = vunpack.c.l.b16 %v1745
    %v1832 = vunpack.c.h.b16 %v1745
    %v1833 = vunpack.c.l.b16 %v1746
    %v1834 = vunpack.c.h.b16 %v1746
    %v1835 = vunpack.c.l.b16 %v1747
    %v1836 = vunpack.c.h.b16 %v1747
    %v1837 = vunpack.c.l.b16 %v1748
    %v1838 = vunpack.c.h.b16 %v1748
    %v1839 = vunpack.c.l.b16 %v1749
    %v1840 = vunpack.c.h.b16 %v1749
    %v1841 = vunpack.c.l.b16 %v1750
    %v1842 = vunpack.c.h.b16 %v1750
    %v1843 = vunpack.c.l.b16 %v1751
    %v1844 = vunpack.c.h.b16 %v1751
    %v1845 = vunpack.c.l.b16 %v1752
    %v1846 = vunpack.c.h.b16 %v1752
    %v1847 = vunpack.c.l.b16 %v1753
    %v1848 = vunpack.c.h.b16 %v1753
    %v1849 = vunpack.c.l.b16 %v1754
    %v1850 = vunpack.c.h.b16 %v1754
    %v1851 = vunpack.c.l.b16 %v1755
    %v1852 = vunpack.c.h.b16 %v1755
    %v1853 = vunpack.c.l.b16 %v1756
    %v1854 = vunpack.c.h.b16 %v1756
    %v1855 = vunpack.c.l.b16 %v1757
    %v1856 = vunpack.c.h.b16 %v1757
    %v1857 = vunpack.c.l.b16 %v1758
    %v1858 = vunpack.c.h.b16 %v1758
    %v1859 = vunpack.c.l.b16 %v1759
    %v1860 = vunpack.c.h.b16 %v1759
    %v1861 = vunpack.c.l.b16 %v1760
    %v1862 = vunpack.c.h.b16 %v1760
    %v1863 = vpack.c.b16 %v1801, %v1799
    %v1864 = vpack.c.b16 %v1802, %v1800
    %v1865 = vpack.c.b16 %v1805, %v1803
    %v1866 = vpack.c.b16 %v1806, %v1804
    %v1867 = vpack.c.b16 %v1809, %v1807
    %v1868 = vpack.c.b16 %v1810, %v1808
    %v1869 = vpack.c.b16 %v1813, %v1811
    %v1870 = vpack.c.b16 %v1814, %v1812
    %v1871 = vpack.c.b16 %v1817, %v1815
    %v1872 = vpack.c.b16 %v1818, %v1816
    %v1873 = vpack.c.b16 %v1821, %v1819
    %v1874 = vpack.c.b16 %v1822, %v1820
    %v1875 = vpack.c.b16 %v1825, %v1823
    %v1876 = vpack.c.b16 %v1826, %v1824
    %v1877 = vpack.c.b16 %v1829, %v1827
    %v1878 = vpack.c.b16 %v1830, %v1828
    %v1879 = vpack.c.b16 %v1833, %v1831
    %v1880 = vpack.c.b16 %v1834, %v1832
    %v1881 = vpack.c.b16 %v1837, %v1835
    %v1882 = vpack.c.b16 %v1838, %v1836
    %v1883 = vpack.c.b16 %v1841, %v1839
    %v1884 = vpack.c.b16 %v1842, %v1840
    %v1885 = vpack.c.b16 %v1845, %v1843
    %v1886 = vpack.c.b16 %v1846, %v1844
    %v1887 = vpack.c.b16 %v1849, %v1847
    %v1888 = vpack.c.b16 %v1850, %v1848
    %v1889 = vpack.c.b16 %v1853, %v1851
    %v1890 = vpack.c.b16 %v1854, %v1852
    %v1891 = vpack.c.b16 %v1857, %v1855
    %v1892 = vpack.c.b16 %v1858, %v1856
    %v1893 = vpack.c.b16 %v1861, %v1859
    %v1894 = vpack.c.b16 %v1862, %v1860
    %1927 = vmatpush.bf16.msra.mxu0 %v1877
    %1928 = vmatpush.bf16.msra.mxu0 %v1875
    %1929 = vmatpush.bf16.msra.mxu0 %v1873
    %1930 = vmatpush.bf16.msra.mxu0 %v1871
    %1931 = vmatpush.bf16.msra.mxu0 %v1869
    %1932 = vmatpush.bf16.msra.mxu0 %v1867
    %1933 = vmatpush.bf16.msra.mxu0 %v1865
    %1934 = vmatpush.bf16.msra.mxu0 %v1863
    %1935 = vmatmul.bf16.gmra.mxu0 %v1601
    %v1936 = vpop.f32.mrf.mxu0
    %v1937 = vadd.f32 %v1763, %v1936
    %v1938 = vpop.f32.mrf.mxu0
    %v1939 = vadd.f32 %v1763, %v1938
    %1940 = vmatmul.bf16.gmra.mxu0 %v1603
    %v1941 = vpop.f32.mrf.mxu0
    %v1942 = vadd.f32 %v1763, %v1941
    %v1943 = vpop.f32.mrf.mxu0
    %v1944 = vadd.f32 %v1763, %v1943
    %1945 = vmatmul.bf16.gmra.mxu0 %v1605
    %v1946 = vpop.f32.mrf.mxu0
    %v1947 = vadd.f32 %v1763, %v1946
    %v1948 = vpop.f32.mrf.mxu0
    %v1949 = vadd.f32 %v1763, %v1948
    %1950 = vmatmul.bf16.gmra.mxu0 %v1607
    %v1951 = vpop.f32.mrf.mxu0
    %v1952 = vadd.f32 %v1763, %v1951
    %v1953 = vpop.f32.mrf.mxu0
    %v1954 = vadd.f32 %v1763, %v1953
    %1955 = vmatmul.bf16.gmra.mxu0 %v1609
    %v1956 = vpop.f32.mrf.mxu0
    %v1957 = vadd.f32 %v1763, %v1956
    %v1958 = vpop.f32.mrf.mxu0
    %v1959 = vadd.f32 %v1763, %v1958
    %1960 = vmatmul.bf16.gmra.mxu0 %v1611
    %v1961 = vpop.f32.mrf.mxu0
    %v1962 = vadd.f32 %v1763, %v1961
    %v1963 = vpop.f32.mrf.mxu0
    %v1964 = vadd.f32 %v1763, %v1963
    %1965 = vmatmul.bf16.gmra.mxu0 %v1613
    %v1966 = vpop.f32.mrf.mxu0
    %v1967 = vadd.f32 %v1763, %v1966
    %v1968 = vpop.f32.mrf.mxu0
    %v1969 = vadd.f32 %v1763, %v1968
    %1970 = vmatmul.bf16.gmra.mxu0 %v1615
    %v1971 = vpop.f32.mrf.mxu0
    %v1972 = vadd.f32 %v1763, %v1971
    %v1973 = vpop.f32.mrf.mxu0
    %v1974 = vadd.f32 %v1763, %v1973
    %1975 = vmatmul.bf16.gmra.mxu0 %v1617
    %v1976 = vpop.f32.mrf.mxu0
    %v1977 = vadd.f32 %v1763, %v1976
    %v1978 = vpop.f32.mrf.mxu0
    %v1979 = vadd.f32 %v1763, %v1978
    %1980 = vmatmul.bf16.gmra.mxu0 %v1619
    %v1981 = vpop.f32.mrf.mxu0
    %v1982 = vadd.f32 %v1763, %v1981
    %v1983 = vpop.f32.mrf.mxu0
    %v1984 = vadd.f32 %v1763, %v1983
    %1985 = vmatmul.bf16.gmra.mxu0 %v1621
    %v1986 = vpop.f32.mrf.mxu0
    %v1987 = vadd.f32 %v1763, %v1986
    %v1988 = vpop.f32.mrf.mxu0
    %v1989 = vadd.f32 %v1763, %v1988
    %1990 = vmatmul.bf16.gmra.mxu0 %v1623
    %v1991 = vpop.f32.mrf.mxu0
    %v1992 = vadd.f32 %v1763, %v1991
    %v1993 = vpop.f32.mrf.mxu0
    %v1994 = vadd.f32 %v1763, %v1993
    %1995 = vmatmul.bf16.gmra.mxu0 %v1625
    %v1996 = vpop.f32.mrf.mxu0
    %v1997 = vadd.f32 %v1763, %v1996
    %v1998 = vpop.f32.mrf.mxu0
    %v1999 = vadd.f32 %v1763, %v1998
    %2000 = vmatmul.bf16.gmra.mxu0 %v1627
    %v2001 = vpop.f32.mrf.mxu0
    %v2002 = vadd.f32 %v1763, %v2001
    %v2003 = vpop.f32.mrf.mxu0
    %v2004 = vadd.f32 %v1763, %v2003
    %2005 = vmatmul.bf16.gmra.mxu0 %v1629
    %v2006 = vpop.f32.mrf.mxu0
    %v2007 = vadd.f32 %v1763, %v2006
    %v2008 = vpop.f32.mrf.mxu0
    %v2009 = vadd.f32 %v1763, %v2008
    %2010 = vmatmul.bf16.gmra.mxu0 %v1631
    %v2011 = vpop.f32.mrf.mxu0
    %v2012 = vadd.f32 %v1763, %v2011
    %v2013 = vpop.f32.mrf.mxu0
    %v2014 = vadd.f32 %v1763, %v2013
    %2015 = vmatmul.bf16.gmra.mxu0 %v1633
    %v2016 = vpop.f32.mrf.mxu0
    %v2017 = vadd.f32 %v1763, %v2016
    %v2018 = vpop.f32.mrf.mxu0
    %v2019 = vadd.f32 %v1763, %v2018
    %2020 = vmatmul.bf16.gmra.mxu0 %v1635
    %v2021 = vpop.f32.mrf.mxu0
    %v2022 = vadd.f32 %v1763, %v2021
    %v2023 = vpop.f32.mrf.mxu0
    %v2024 = vadd.f32 %v1763, %v2023
    %2025 = vmatmul.bf16.gmra.mxu0 %v1637
    %v2026 = vpop.f32.mrf.mxu0
    %v2027 = vadd.f32 %v1763, %v2026
    %v2028 = vpop.f32.mrf.mxu0
    %v2029 = vadd.f32 %v1763, %v2028
    %2030 = vmatmul.bf16.gmra.mxu0 %v1639
    %v2031 = vpop.f32.mrf.mxu0
    %v2032 = vadd.f32 %v1763, %v2031
    %v2033 = vpop.f32.mrf.mxu0
    %v2034 = vadd.f32 %v1763, %v2033
    %2035 = vmatmul.bf16.gmra.mxu0 %v1641
    %v2036 = vpop.f32.mrf.mxu0
    %v2037 = vadd.f32 %v1763, %v2036
    %v2038 = vpop.f32.mrf.mxu0
    %v2039 = vadd.f32 %v1763, %v2038
    %2040 = vmatmul.bf16.gmra.mxu0 %v1643
    %v2041 = vpop.f32.mrf.mxu0
    %v2042 = vadd.f32 %v1763, %v2041
    %v2043 = vpop.f32.mrf.mxu0
    %v2044 = vadd.f32 %v1763, %v2043
    %2045 = vmatmul.bf16.gmra.mxu0 %v1645
    %v2046 = vpop.f32.mrf.mxu0
    %v2047 = vadd.f32 %v1763, %v2046
    %v2048 = vpop.f32.mrf.mxu0
    %v2049 = vadd.f32 %v1763, %v2048
    %2050 = vmatmul.bf16.gmra.mxu0 %v1647
    %v2051 = vpop.f32.mrf.mxu0
    %v2052 = vadd.f32 %v1763, %v2051
    %v2053 = vpop.f32.mrf.mxu0
    %v2054 = vadd.f32 %v1763, %v2053
    %2055 = vmatmul.bf16.gmra.mxu0 %v1649
    %v2056 = vpop.f32.mrf.mxu0
    %v2057 = vadd.f32 %v1763, %v2056
    %v2058 = vpop.f32.mrf.mxu0
    %v2059 = vadd.f32 %v1763, %v2058
    %2060 = vmatmul.bf16.gmra.mxu0 %v1651
    %v2061 = vpop.f32.mrf.mxu0
    %v2062 = vadd.f32 %v1763, %v2061
    %v2063 = vpop.f32.mrf.mxu0
    %v2064 = vadd.f32 %v1763, %v2063
    %2065 = vmatmul.bf16.gmra.mxu0 %v1653
    %v2066 = vpop.f32.mrf.mxu0
    %v2067 = vadd.f32 %v1763, %v2066
    %v2068 = vpop.f32.mrf.mxu0
    %v2069 = vadd.f32 %v1763, %v2068
    %2070 = vmatmul.bf16.gmra.mxu0 %v1655
    %v2071 = vpop.f32.mrf.mxu0
    %v2072 = vadd.f32 %v1763, %v2071
    %v2073 = vpop.f32.mrf.mxu0
    %v2074 = vadd.f32 %v1763, %v2073
    %2075 = vmatmul.bf16.gmra.mxu0 %v1657
    %v2076 = vpop.f32.mrf.mxu0
    %v2077 = vadd.f32 %v1763, %v2076
    %v2078 = vpop.f32.mrf.mxu0
    %v2079 = vadd.f32 %v1763, %v2078
    %2080 = vmatmul.bf16.gmra.mxu0 %v1659
    %v2081 = vpop.f32.mrf.mxu0
    %v2082 = vadd.f32 %v1763, %v2081
    %v2083 = vpop.f32.mrf.mxu0
    %v2084 = vadd.f32 %v1763, %v2083
    %2085 = vmatmul.bf16.gmra.mxu0 %v1661
    %v2086 = vpop.f32.mrf.mxu0
    %v2087 = vadd.f32 %v1763, %v2086
    %v2088 = vpop.f32.mrf.mxu0
    %v2089 = vadd.f32 %v1763, %v2088
    %2090 = vmatmul.bf16.gmra.mxu0 %v1663
    %v2091 = vpop.f32.mrf.mxu0
    %v2092 = vadd.f32 %v1763, %v2091
    %v2093 = vpop.f32.mrf.mxu0
    %v2094 = vadd.f32 %v1763, %v2093
    %2095 = vmatmul.bf16.gmra.mxu0 %v1665
    %v2096 = vpop.f32.mrf.mxu0
    %v2097 = vadd.f32 %v1763, %v2096
    %v2098 = vpop.f32.mrf.mxu0
    %v2099 = vadd.f32 %v1763, %v2098
    %2100 = vmatmul.bf16.gmra.mxu0 %v1667
    %v2101 = vpop.f32.mrf.mxu0
    %v2102 = vadd.f32 %v1763, %v2101
    %v2103 = vpop.f32.mrf.mxu0
    %v2104 = vadd.f32 %v1763, %v2103
    %2105 = vmatmul.bf16.gmra.mxu0 %v1669
    %v2106 = vpop.f32.mrf.mxu0
    %v2107 = vadd.f32 %v1763, %v2106
    %v2108 = vpop.f32.mrf.mxu0
    %v2109 = vadd.f32 %v1763, %v2108
    %2110 = vmatmul.bf16.gmra.mxu0 %v1671
    %v2111 = vpop.f32.mrf.mxu0
    %v2112 = vadd.f32 %v1763, %v2111
    %v2113 = vpop.f32.mrf.mxu0
    %v2114 = vadd.f32 %v1763, %v2113
    %2115 = vmatmul.bf16.gmra.mxu0 %v1673
    %v2116 = vpop.f32.mrf.mxu0
    %v2117 = vadd.f32 %v1763, %v2116
    %v2118 = vpop.f32.mrf.mxu0
    %v2119 = vadd.f32 %v1763, %v2118
    %2120 = vmatmul.bf16.gmra.mxu0 %v1675
    %v2121 = vpop.f32.mrf.mxu0
    %v2122 = vadd.f32 %v1763, %v2121
    %v2123 = vpop.f32.mrf.mxu0
    %v2124 = vadd.f32 %v1763, %v2123
    %2125 = vmatmul.bf16.gmra.mxu0 %v1677
    %v2126 = vpop.f32.mrf.mxu0
    %v2127 = vadd.f32 %v1763, %v2126
    %v2128 = vpop.f32.mrf.mxu0
    %v2129 = vadd.f32 %v1763, %v2128
    %2130 = vmatmul.bf16.gmra.mxu0 %v1679
    %v2131 = vpop.f32.mrf.mxu0
    %v2132 = vadd.f32 %v1763, %v2131
    %v2133 = vpop.f32.mrf.mxu0
    %v2134 = vadd.f32 %v1763, %v2133
    %2135 = vmatmul.bf16.gmra.mxu0 %v1681
    %v2136 = vpop.f32.mrf.mxu0
    %v2137 = vadd.f32 %v1763, %v2136
    %v2138 = vpop.f32.mrf.mxu0
    %v2139 = vadd.f32 %v1763, %v2138
    %2140 = vmatmul.bf16.gmra.mxu0 %v1683
    %v2141 = vpop.f32.mrf.mxu0
    %v2142 = vadd.f32 %v1763, %v2141
    %v2143 = vpop.f32.mrf.mxu0
    %v2144 = vadd.f32 %v1763, %v2143
    %2145 = vmatmul.bf16.gmra.mxu0 %v1685
    %v2146 = vpop.f32.mrf.mxu0
    %v2147 = vadd.f32 %v1763, %v2146
    %v2148 = vpop.f32.mrf.mxu0
    %v2149 = vadd.f32 %v1763, %v2148
    %2150 = vmatmul.bf16.gmra.mxu0 %v1687
    %v2151 = vpop.f32.mrf.mxu0
    %v2152 = vadd.f32 %v1763, %v2151
    %v2153 = vpop.f32.mrf.mxu0
    %v2154 = vadd.f32 %v1763, %v2153
    %2155 = vmatmul.bf16.gmra.mxu0 %v1689
    %v2156 = vpop.f32.mrf.mxu0
    %v2157 = vadd.f32 %v1763, %v2156
    %v2158 = vpop.f32.mrf.mxu0
    %v2159 = vadd.f32 %v1763, %v2158
    %2160 = vmatmul.bf16.gmra.mxu0 %v1691
    %v2161 = vpop.f32.mrf.mxu0
    %v2162 = vadd.f32 %v1763, %v2161
    %v2163 = vpop.f32.mrf.mxu0
    %v2164 = vadd.f32 %v1763, %v2163
    %2165 = vmatmul.bf16.gmra.mxu0 %v1693
    %v2166 = vpop.f32.mrf.mxu0
    %v2167 = vadd.f32 %v1763, %v2166
    %v2168 = vpop.f32.mrf.mxu0
    %v2169 = vadd.f32 %v1763, %v2168
    %2170 = vmatmul.bf16.gmra.mxu0 %v1695
    %v2171 = vpop.f32.mrf.mxu0
    %v2172 = vadd.f32 %v1763, %v2171
    %v2173 = vpop.f32.mrf.mxu0
    %v2174 = vadd.f32 %v1763, %v2173
    %2175 = vmatmul.bf16.gmra.mxu0 %v1697
    %v2176 = vpop.f32.mrf.mxu0
    %v2177 = vadd.f32 %v1763, %v2176
    %v2178 = vpop.f32.mrf.mxu0
    %v2179 = vadd.f32 %v1763, %v2178
    %2180 = vmatmul.bf16.gmra.mxu0 %v1699
    %v2181 = vpop.f32.mrf.mxu0
    %v2182 = vadd.f32 %v1763, %v2181
    %v2183 = vpop.f32.mrf.mxu0
    %v2184 = vadd.f32 %v1763, %v2183
    %2185 = vmatmul.bf16.gmra.mxu0 %v1701
    %v2186 = vpop.f32.mrf.mxu0
    %v2187 = vadd.f32 %v1763, %v2186
    %v2188 = vpop.f32.mrf.mxu0
    %v2189 = vadd.f32 %v1763, %v2188
    %2190 = vmatmul.bf16.gmra.mxu0 %v1703
    %v2191 = vpop.f32.mrf.mxu0
    %v2192 = vadd.f32 %v1763, %v2191
    %v2193 = vpop.f32.mrf.mxu0
    %v2194 = vadd.f32 %v1763, %v2193
    %2195 = vmatmul.bf16.gmra.mxu0 %v1705
    %v2196 = vpop.f32.mrf.mxu0
    %v2197 = vadd.f32 %v1763, %v2196
    %v2198 = vpop.f32.mrf.mxu0
    %v2199 = vadd.f32 %v1763, %v2198
    %2200 = vmatmul.bf16.gmra.mxu0 %v1707
    %v2201 = vpop.f32.mrf.mxu0
    %v2202 = vadd.f32 %v1763, %v2201
    %v2203 = vpop.f32.mrf.mxu0
    %v2204 = vadd.f32 %v1763, %v2203
    %2205 = vmatmul.bf16.gmra.mxu0 %v1709
    %v2206 = vpop.f32.mrf.mxu0
    %v2207 = vadd.f32 %v1763, %v2206
    %v2208 = vpop.f32.mrf.mxu0
    %v2209 = vadd.f32 %v1763, %v2208
    %2210 = vmatmul.bf16.gmra.mxu0 %v1711
    %v2211 = vpop.f32.mrf.mxu0
    %v2212 = vadd.f32 %v1763, %v2211
    %v2213 = vpop.f32.mrf.mxu0
    %v2214 = vadd.f32 %v1763, %v2213
    %2215 = vmatmul.bf16.gmra.mxu0 %v1713
    %v2216 = vpop.f32.mrf.mxu0
    %v2217 = vadd.f32 %v1763, %v2216
    %v2218 = vpop.f32.mrf.mxu0
    %v2219 = vadd.f32 %v1763, %v2218
    %2220 = vmatmul.bf16.gmra.mxu0 %v1715
    %v2221 = vpop.f32.mrf.mxu0
    %v2222 = vadd.f32 %v1763, %v2221
    %v2223 = vpop.f32.mrf.mxu0
    %v2224 = vadd.f32 %v1763, %v2223
    %2225 = vmatmul.bf16.gmra.mxu0 %v1717
    %v2226 = vpop.f32.mrf.mxu0
    %v2227 = vadd.f32 %v1763, %v2226
    %v2228 = vpop.f32.mrf.mxu0
    %v2229 = vadd.f32 %v1763, %v2228
    %2230 = vmatmul.bf16.gmra.mxu0 %v1719
    %v2231 = vpop.f32.mrf.mxu0
    %v2232 = vadd.f32 %v1763, %v2231
    %v2233 = vpop.f32.mrf.mxu0
    %v2234 = vadd.f32 %v1763, %v2233
    %2235 = vmatmul.bf16.gmra.mxu0 %v1721
    %v2236 = vpop.f32.mrf.mxu0
    %v2237 = vadd.f32 %v1763, %v2236
    %v2238 = vpop.f32.mrf.mxu0
    %v2239 = vadd.f32 %v1763, %v2238
    %2240 = vmatmul.bf16.gmra.mxu0 %v1723
    %v2241 = vpop.f32.mrf.mxu0
    %v2242 = vadd.f32 %v1763, %v2241
    %v2243 = vpop.f32.mrf.mxu0
    %v2244 = vadd.f32 %v1763, %v2243
    %2245 = vmatmul.bf16.gmra.mxu0 %v1725
    %v2246 = vpop.f32.mrf.mxu0
    %v2247 = vadd.f32 %v1763, %v2246
    %v2248 = vpop.f32.mrf.mxu0
    %v2249 = vadd.f32 %v1763, %v2248
    %2250 = vmatmul.bf16.gmra.mxu0 %v1727
    %v2251 = vpop.f32.mrf.mxu0
    %v2252 = vadd.f32 %v1763, %v2251
    %v2253 = vpop.f32.mrf.mxu0
    %v2254 = vadd.f32 %v1763, %v2253
    %2255 = vdwg.mxu0
    %2256 = vmatpush.bf16.msra.mxu0 %v1893
    %2257 = vmatpush.bf16.msra.mxu0 %v1891
    %2258 = vmatpush.bf16.msra.mxu0 %v1889
    %2259 = vmatpush.bf16.msra.mxu0 %v1887
    %2260 = vmatpush.bf16.msra.mxu0 %v1885
    %2261 = vmatpush.bf16.msra.mxu0 %v1883
    %2262 = vmatpush.bf16.msra.mxu0 %v1881
    %2263 = vmatpush.bf16.msra.mxu0 %v1879
    %2264 = vmatmul.bf16.gmra.mxu0 %v1602
    %v2265 = vpop.f32.mrf.mxu0
    %v2266 = vadd.f32 %v1937, %v2265
    %v2267 = vpop.f32.mrf.mxu0
    %v2268 = vadd.f32 %v1939, %v2267
    %2269 = vmatmul.bf16.gmra.mxu0 %v1604
    %v2270 = vpop.f32.mrf.mxu0
    %v2271 = vadd.f32 %v1942, %v2270
    %v2272 = vpop.f32.mrf.mxu0
    %v2273 = vadd.f32 %v1944, %v2272
    %2274 = vmatmul.bf16.gmra.mxu0 %v1606
    %v2275 = vpop.f32.mrf.mxu0
    %v2276 = vadd.f32 %v1947, %v2275
    %v2277 = vpop.f32.mrf.mxu0
    %v2278 = vadd.f32 %v1949, %v2277
    %2279 = vmatmul.bf16.gmra.mxu0 %v1608
    %v2280 = vpop.f32.mrf.mxu0
    %v2281 = vadd.f32 %v1952, %v2280
    %v2282 = vpop.f32.mrf.mxu0
    %v2283 = vadd.f32 %v1954, %v2282
    %2284 = vmatmul.bf16.gmra.mxu0 %v1610
    %v2285 = vpop.f32.mrf.mxu0
    %v2286 = vadd.f32 %v1957, %v2285
    %v2287 = vpop.f32.mrf.mxu0
    %v2288 = vadd.f32 %v1959, %v2287
    %2289 = vmatmul.bf16.gmra.mxu0 %v1612
    %v2290 = vpop.f32.mrf.mxu0
    %v2291 = vadd.f32 %v1962, %v2290
    %v2292 = vpop.f32.mrf.mxu0
    %v2293 = vadd.f32 %v1964, %v2292
    %2294 = vmatmul.bf16.gmra.mxu0 %v1614
    %v2295 = vpop.f32.mrf.mxu0
    %v2296 = vadd.f32 %v1967, %v2295
    %v2297 = vpop.f32.mrf.mxu0
    %v2298 = vadd.f32 %v1969, %v2297
    %2299 = vmatmul.bf16.gmra.mxu0 %v1616
    %v2300 = vpop.f32.mrf.mxu0
    %v2301 = vadd.f32 %v1972, %v2300
    %v2302 = vpop.f32.mrf.mxu0
    %v2303 = vadd.f32 %v1974, %v2302
    %2304 = vmatmul.bf16.gmra.mxu0 %v1618
    %v2305 = vpop.f32.mrf.mxu0
    %v2306 = vadd.f32 %v1977, %v2305
    %v2307 = vpop.f32.mrf.mxu0
    %v2308 = vadd.f32 %v1979, %v2307
    %2309 = vmatmul.bf16.gmra.mxu0 %v1620
    %v2310 = vpop.f32.mrf.mxu0
    %v2311 = vadd.f32 %v1982, %v2310
    %v2312 = vpop.f32.mrf.mxu0
    %v2313 = vadd.f32 %v1984, %v2312
    %2314 = vmatmul.bf16.gmra.mxu0 %v1622
    %v2315 = vpop.f32.mrf.mxu0
    %v2316 = vadd.f32 %v1987, %v2315
    %v2317 = vpop.f32.mrf.mxu0
    %v2318 = vadd.f32 %v1989, %v2317
    %2319 = vmatmul.bf16.gmra.mxu0 %v1624
    %v2320 = vpop.f32.mrf.mxu0
    %v2321 = vadd.f32 %v1992, %v2320
    %v2322 = vpop.f32.mrf.mxu0
    %v2323 = vadd.f32 %v1994, %v2322
    %2324 = vmatmul.bf16.gmra.mxu0 %v1626
    %v2325 = vpop.f32.mrf.mxu0
    %v2326 = vadd.f32 %v1997, %v2325
    %v2327 = vpop.f32.mrf.mxu0
    %v2328 = vadd.f32 %v1999, %v2327
    %2329 = vmatmul.bf16.gmra.mxu0 %v1628
    %v2330 = vpop.f32.mrf.mxu0
    %v2331 = vadd.f32 %v2002, %v2330
    %v2332 = vpop.f32.mrf.mxu0
    %v2333 = vadd.f32 %v2004, %v2332
    %2334 = vmatmul.bf16.gmra.mxu0 %v1630
    %v2335 = vpop.f32.mrf.mxu0
    %v2336 = vadd.f32 %v2007, %v2335
    %v2337 = vpop.f32.mrf.mxu0
    %v2338 = vadd.f32 %v2009, %v2337
    %2339 = vmatmul.bf16.gmra.mxu0 %v1632
    %v2340 = vpop.f32.mrf.mxu0
    %v2341 = vadd.f32 %v2012, %v2340
    %v2342 = vpop.f32.mrf.mxu0
    %v2343 = vadd.f32 %v2014, %v2342
    %2344 = vmatmul.bf16.gmra.mxu0 %v1634
    %v2345 = vpop.f32.mrf.mxu0
    %v2346 = vadd.f32 %v2017, %v2345
    %v2347 = vpop.f32.mrf.mxu0
    %v2348 = vadd.f32 %v2019, %v2347
    %2349 = vmatmul.bf16.gmra.mxu0 %v1636
    %v2350 = vpop.f32.mrf.mxu0
    %v2351 = vadd.f32 %v2022, %v2350
    %v2352 = vpop.f32.mrf.mxu0
    %v2353 = vadd.f32 %v2024, %v2352
    %2354 = vmatmul.bf16.gmra.mxu0 %v1638
    %v2355 = vpop.f32.mrf.mxu0
    %v2356 = vadd.f32 %v2027, %v2355
    %v2357 = vpop.f32.mrf.mxu0
    %v2358 = vadd.f32 %v2029, %v2357
    %2359 = vmatmul.bf16.gmra.mxu0 %v1640
    %v2360 = vpop.f32.mrf.mxu0
    %v2361 = vadd.f32 %v2032, %v2360
    %v2362 = vpop.f32.mrf.mxu0
    %v2363 = vadd.f32 %v2034, %v2362
    %2364 = vmatmul.bf16.gmra.mxu0 %v1642
    %v2365 = vpop.f32.mrf.mxu0
    %v2366 = vadd.f32 %v2037, %v2365
    %v2367 = vpop.f32.mrf.mxu0
    %v2368 = vadd.f32 %v2039, %v2367
    %2369 = vmatmul.bf16.gmra.mxu0 %v1644
    %v2370 = vpop.f32.mrf.mxu0
    %v2371 = vadd.f32 %v2042, %v2370
    %v2372 = vpop.f32.mrf.mxu0
    %v2373 = vadd.f32 %v2044, %v2372
    %2374 = vmatmul.bf16.gmra.mxu0 %v1646
    %v2375 = vpop.f32.mrf.mxu0
    %v2376 = vadd.f32 %v2047, %v2375
    %v2377 = vpop.f32.mrf.mxu0
    %v2378 = vadd.f32 %v2049, %v2377
    %2379 = vmatmul.bf16.gmra.mxu0 %v1648
    %v2380 = vpop.f32.mrf.mxu0
    %v2381 = vadd.f32 %v2052, %v2380
    %v2382 = vpop.f32.mrf.mxu0
    %v2383 = vadd.f32 %v2054, %v2382
    %2384 = vmatmul.bf16.gmra.mxu0 %v1650
    %v2385 = vpop.f32.mrf.mxu0
    %v2386 = vadd.f32 %v2057, %v2385
    %v2387 = vpop.f32.mrf.mxu0
    %v2388 = vadd.f32 %v2059, %v2387
    %2389 = vmatmul.bf16.gmra.mxu0 %v1652
    %v2390 = vpop.f32.mrf.mxu0
    %v2391 = vadd.f32 %v2062, %v2390
    %v2392 = vpop.f32.mrf.mxu0
    %v2393 = vadd.f32 %v2064, %v2392
    %2394 = vmatmul.bf16.gmra.mxu0 %v1654
    %v2395 = vpop.f32.mrf.mxu0
    %v2396 = vadd.f32 %v2067, %v2395
    %v2397 = vpop.f32.mrf.mxu0
    %v2398 = vadd.f32 %v2069, %v2397
    %2399 = vmatmul.bf16.gmra.mxu0 %v1656
    %v2400 = vpop.f32.mrf.mxu0
    %v2401 = vadd.f32 %v2072, %v2400
    %v2402 = vpop.f32.mrf.mxu0
    %v2403 = vadd.f32 %v2074, %v2402
    %2404 = vmatmul.bf16.gmra.mxu0 %v1658
    %v2405 = vpop.f32.mrf.mxu0
    %v2406 = vadd.f32 %v2077, %v2405
    %v2407 = vpop.f32.mrf.mxu0
    %v2408 = vadd.f32 %v2079, %v2407
    %2409 = vmatmul.bf16.gmra.mxu0 %v1660
    %v2410 = vpop.f32.mrf.mxu0
    %v2411 = vadd.f32 %v2082, %v2410
    %v2412 = vpop.f32.mrf.mxu0
    %v2413 = vadd.f32 %v2084, %v2412
    %2414 = vmatmul.bf16.gmra.mxu0 %v1662
    %v2415 = vpop.f32.mrf.mxu0
    %v2416 = vadd.f32 %v2087, %v2415
    %v2417 = vpop.f32.mrf.mxu0
    %v2418 = vadd.f32 %v2089, %v2417
    %2419 = vmatmul.bf16.gmra.mxu0 %v1664
    %v2420 = vpop.f32.mrf.mxu0
    %v2421 = vadd.f32 %v2092, %v2420
    %v2422 = vpop.f32.mrf.mxu0
    %v2423 = vadd.f32 %v2094, %v2422
    %2424 = vmatmul.bf16.gmra.mxu0 %v1666
    %v2425 = vpop.f32.mrf.mxu0
    %v2426 = vadd.f32 %v2097, %v2425
    %v2427 = vpop.f32.mrf.mxu0
    %v2428 = vadd.f32 %v2099, %v2427
    %2429 = vmatmul.bf16.gmra.mxu0 %v1668
    %v2430 = vpop.f32.mrf.mxu0
    %v2431 = vadd.f32 %v2102, %v2430
    %v2432 = vpop.f32.mrf.mxu0
    %v2433 = vadd.f32 %v2104, %v2432
    %2434 = vmatmul.bf16.gmra.mxu0 %v1670
    %v2435 = vpop.f32.mrf.mxu0
    %v2436 = vadd.f32 %v2107, %v2435
    %v2437 = vpop.f32.mrf.mxu0
    %v2438 = vadd.f32 %v2109, %v2437
    %2439 = vmatmul.bf16.gmra.mxu0 %v1672
    %v2440 = vpop.f32.mrf.mxu0
    %v2441 = vadd.f32 %v2112, %v2440
    %v2442 = vpop.f32.mrf.mxu0
    %v2443 = vadd.f32 %v2114, %v2442
    %2444 = vmatmul.bf16.gmra.mxu0 %v1674
    %v2445 = vpop.f32.mrf.mxu0
    %v2446 = vadd.f32 %v2117, %v2445
    %v2447 = vpop.f32.mrf.mxu0
    %v2448 = vadd.f32 %v2119, %v2447
    %2449 = vmatmul.bf16.gmra.mxu0 %v1676
    %v2450 = vpop.f32.mrf.mxu0
    %v2451 = vadd.f32 %v2122, %v2450
    %v2452 = vpop.f32.mrf.mxu0
    %v2453 = vadd.f32 %v2124, %v2452
    %2454 = vmatmul.bf16.gmra.mxu0 %v1678
    %v2455 = vpop.f32.mrf.mxu0
    %v2456 = vadd.f32 %v2127, %v2455
    %v2457 = vpop.f32.mrf.mxu0
    %v2458 = vadd.f32 %v2129, %v2457
    %2459 = vmatmul.bf16.gmra.mxu0 %v1680
    %v2460 = vpop.f32.mrf.mxu0
    %v2461 = vadd.f32 %v2132, %v2460
    %v2462 = vpop.f32.mrf.mxu0
    %v2463 = vadd.f32 %v2134, %v2462
    %2464 = vmatmul.bf16.gmra.mxu0 %v1682
    %v2465 = vpop.f32.mrf.mxu0
    %v2466 = vadd.f32 %v2137, %v2465
    %v2467 = vpop.f32.mrf.mxu0
    %v2468 = vadd.f32 %v2139, %v2467
    %2469 = vmatmul.bf16.gmra.mxu0 %v1684
    %v2470 = vpop.f32.mrf.mxu0
    %v2471 = vadd.f32 %v2142, %v2470
    %v2472 = vpop.f32.mrf.mxu0
    %v2473 = vadd.f32 %v2144, %v2472
    %2474 = vmatmul.bf16.gmra.mxu0 %v1686
    %v2475 = vpop.f32.mrf.mxu0
    %v2476 = vadd.f32 %v2147, %v2475
    %v2477 = vpop.f32.mrf.mxu0
    %v2478 = vadd.f32 %v2149, %v2477
    %2479 = vmatmul.bf16.gmra.mxu0 %v1688
    %v2480 = vpop.f32.mrf.mxu0
    %v2481 = vadd.f32 %v2152, %v2480
    %v2482 = vpop.f32.mrf.mxu0
    %v2483 = vadd.f32 %v2154, %v2482
    %2484 = vmatmul.bf16.gmra.mxu0 %v1690
    %v2485 = vpop.f32.mrf.mxu0
    %v2486 = vadd.f32 %v2157, %v2485
    %v2487 = vpop.f32.mrf.mxu0
    %v2488 = vadd.f32 %v2159, %v2487
    %2489 = vmatmul.bf16.gmra.mxu0 %v1692
    %v2490 = vpop.f32.mrf.mxu0
    %v2491 = vadd.f32 %v2162, %v2490
    %v2492 = vpop.f32.mrf.mxu0
    %v2493 = vadd.f32 %v2164, %v2492
    %2494 = vmatmul.bf16.gmra.mxu0 %v1694
    %v2495 = vpop.f32.mrf.mxu0
    %v2496 = vadd.f32 %v2167, %v2495
    %v2497 = vpop.f32.mrf.mxu0
    %v2498 = vadd.f32 %v2169, %v2497
    %2499 = vmatmul.bf16.gmra.mxu0 %v1696
    %v2500 = vpop.f32.mrf.mxu0
    %v2501 = vadd.f32 %v2172, %v2500
    %v2502 = vpop.f32.mrf.mxu0
    %v2503 = vadd.f32 %v2174, %v2502
    %2504 = vmatmul.bf16.gmra.mxu0 %v1698
    %v2505 = vpop.f32.mrf.mxu0
    %v2506 = vadd.f32 %v2177, %v2505
    %v2507 = vpop.f32.mrf.mxu0
    %v2508 = vadd.f32 %v2179, %v2507
    %2509 = vmatmul.bf16.gmra.mxu0 %v1700
    %v2510 = vpop.f32.mrf.mxu0
    %v2511 = vadd.f32 %v2182, %v2510
    %v2512 = vpop.f32.mrf.mxu0
    %v2513 = vadd.f32 %v2184, %v2512
    %2514 = vmatmul.bf16.gmra.mxu0 %v1702
    %v2515 = vpop.f32.mrf.mxu0
    %v2516 = vadd.f32 %v2187, %v2515
    %v2517 = vpop.f32.mrf.mxu0
    %v2518 = vadd.f32 %v2189, %v2517
    %2519 = vmatmul.bf16.gmra.mxu0 %v1704
    %v2520 = vpop.f32.mrf.mxu0
    %v2521 = vadd.f32 %v2192, %v2520
    %v2522 = vpop.f32.mrf.mxu0
    %v2523 = vadd.f32 %v2194, %v2522
    %2524 = vmatmul.bf16.gmra.mxu0 %v1706
    %v2525 = vpop.f32.mrf.mxu0
    %v2526 = vadd.f32 %v2197, %v2525
    %v2527 = vpop.f32.mrf.mxu0
    %v2528 = vadd.f32 %v2199, %v2527
    %2529 = vmatmul.bf16.gmra.mxu0 %v1708
    %v2530 = vpop.f32.mrf.mxu0
    %v2531 = vadd.f32 %v2202, %v2530
    %v2532 = vpop.f32.mrf.mxu0
    %v2533 = vadd.f32 %v2204, %v2532
    %2534 = vmatmul.bf16.gmra.mxu0 %v1710
    %v2535 = vpop.f32.mrf.mxu0
    %v2536 = vadd.f32 %v2207, %v2535
    %v2537 = vpop.f32.mrf.mxu0
    %v2538 = vadd.f32 %v2209, %v2537
    %2539 = vmatmul.bf16.gmra.mxu0 %v1712
    %v2540 = vpop.f32.mrf.mxu0
    %v2541 = vadd.f32 %v2212, %v2540
    %v2542 = vpop.f32.mrf.mxu0
    %v2543 = vadd.f32 %v2214, %v2542
    %2544 = vmatmul.bf16.gmra.mxu0 %v1714
    %v2545 = vpop.f32.mrf.mxu0
    %v2546 = vadd.f32 %v2217, %v2545
    %v2547 = vpop.f32.mrf.mxu0
    %v2548 = vadd.f32 %v2219, %v2547
    %2549 = vmatmul.bf16.gmra.mxu0 %v1716
    %v2550 = vpop.f32.mrf.mxu0
    %v2551 = vadd.f32 %v2222, %v2550
    %v2552 = vpop.f32.mrf.mxu0
    %v2553 = vadd.f32 %v2224, %v2552
    %2554 = vmatmul.bf16.gmra.mxu0 %v1718
    %v2555 = vpop.f32.mrf.mxu0
    %v2556 = vadd.f32 %v2227, %v2555
    %v2557 = vpop.f32.mrf.mxu0
    %v2558 = vadd.f32 %v2229, %v2557
    %2559 = vmatmul.bf16.gmra.mxu0 %v1720
    %v2560 = vpop.f32.mrf.mxu0
    %v2561 = vadd.f32 %v2232, %v2560
    %v2562 = vpop.f32.mrf.mxu0
    %v2563 = vadd.f32 %v2234, %v2562
    %2564 = vmatmul.bf16.gmra.mxu0 %v1722
    %v2565 = vpop.f32.mrf.mxu0
    %v2566 = vadd.f32 %v2237, %v2565
    %v2567 = vpop.f32.mrf.mxu0
    %v2568 = vadd.f32 %v2239, %v2567
    %2569 = vmatmul.bf16.gmra.mxu0 %v1724
    %v2570 = vpop.f32.mrf.mxu0
    %v2571 = vadd.f32 %v2242, %v2570
    %v2572 = vpop.f32.mrf.mxu0
    %v2573 = vadd.f32 %v2244, %v2572
    %2574 = vmatmul.bf16.gmra.mxu0 %v1726
    %v2575 = vpop.f32.mrf.mxu0
    %v2576 = vadd.f32 %v2247, %v2575
    %v2577 = vpop.f32.mrf.mxu0
    %v2578 = vadd.f32 %v2249, %v2577
    %2579 = vmatmul.bf16.gmra.mxu0 %v1728
    %v2580 = vpop.f32.mrf.mxu0
    %v2581 = vadd.f32 %v2252, %v2580
    %v2582 = vpop.f32.mrf.mxu0
    %v2583 = vadd.f32 %v2254, %v2582
    %2584 = vdwg.mxu0
    %2585 = vmatpush.bf16.msra.mxu0 %v1878
    %2586 = vmatpush.bf16.msra.mxu0 %v1876
    %2587 = vmatpush.bf16.msra.mxu0 %v1874
    %2588 = vmatpush.bf16.msra.mxu0 %v1872
    %2589 = vmatpush.bf16.msra.mxu0 %v1870
    %2590 = vmatpush.bf16.msra.mxu0 %v1868
    %2591 = vmatpush.bf16.msra.mxu0 %v1866
    %2592 = vmatpush.bf16.msra.mxu0 %v1864
    %2593 = vmatmul.bf16.gmra.mxu0 %v1601
    %v2594 = vpop.f32.mrf.mxu0
    %v2595 = vadd.f32 %v1764, %v2594
    %v2596 = vpop.f32.mrf.mxu0
    %v2597 = vadd.f32 %v1764, %v2596
    %2598 = vmatmul.bf16.gmra.mxu0 %v1603
    %v2599 = vpop.f32.mrf.mxu0
    %v2600 = vadd.f32 %v1764, %v2599
    %v2601 = vpop.f32.mrf.mxu0
    %v2602 = vadd.f32 %v1764, %v2601
    %2603 = vmatmul.bf16.gmra.mxu0 %v1605
    %v2604 = vpop.f32.mrf.mxu0
    %v2605 = vadd.f32 %v1764, %v2604
    %v2606 = vpop.f32.mrf.mxu0
    %v2607 = vadd.f32 %v1764, %v2606
    %2608 = vmatmul.bf16.gmra.mxu0 %v1607
    %v2609 = vpop.f32.mrf.mxu0
    %v2610 = vadd.f32 %v1764, %v2609
    %v2611 = vpop.f32.mrf.mxu0
    %v2612 = vadd.f32 %v1764, %v2611
    %2613 = vmatmul.bf16.gmra.mxu0 %v1609
    %v2614 = vpop.f32.mrf.mxu0
    %v2615 = vadd.f32 %v1764, %v2614
    %v2616 = vpop.f32.mrf.mxu0
    %v2617 = vadd.f32 %v1764, %v2616
    %2618 = vmatmul.bf16.gmra.mxu0 %v1611
    %v2619 = vpop.f32.mrf.mxu0
    %v2620 = vadd.f32 %v1764, %v2619
    %v2621 = vpop.f32.mrf.mxu0
    %v2622 = vadd.f32 %v1764, %v2621
    %2623 = vmatmul.bf16.gmra.mxu0 %v1613
    %v2624 = vpop.f32.mrf.mxu0
    %v2625 = vadd.f32 %v1764, %v2624
    %v2626 = vpop.f32.mrf.mxu0
    %v2627 = vadd.f32 %v1764, %v2626
    %2628 = vmatmul.bf16.gmra.mxu0 %v1615
    %v2629 = vpop.f32.mrf.mxu0
    %v2630 = vadd.f32 %v1764, %v2629
    %v2631 = vpop.f32.mrf.mxu0
    %v2632 = vadd.f32 %v1764, %v2631
    %2633 = vmatmul.bf16.gmra.mxu0 %v1617
    %v2634 = vpop.f32.mrf.mxu0
    %v2635 = vadd.f32 %v1764, %v2634
    %v2636 = vpop.f32.mrf.mxu0
    %v2637 = vadd.f32 %v1764, %v2636
    %2638 = vmatmul.bf16.gmra.mxu0 %v1619
    %v2639 = vpop.f32.mrf.mxu0
    %v2640 = vadd.f32 %v1764, %v2639
    %v2641 = vpop.f32.mrf.mxu0
    %v2642 = vadd.f32 %v1764, %v2641
    %2643 = vmatmul.bf16.gmra.mxu0 %v1621
    %v2644 = vpop.f32.mrf.mxu0
    %v2645 = vadd.f32 %v1764, %v2644
    %v2646 = vpop.f32.mrf.mxu0
    %v2647 = vadd.f32 %v1764, %v2646
    %2648 = vmatmul.bf16.gmra.mxu0 %v1623
    %v2649 = vpop.f32.mrf.mxu0
    %v2650 = vadd.f32 %v1764, %v2649
    %v2651 = vpop.f32.mrf.mxu0
    %v2652 = vadd.f32 %v1764, %v2651
    %2653 = vmatmul.bf16.gmra.mxu0 %v1625
    %v2654 = vpop.f32.mrf.mxu0
    %v2655 = vadd.f32 %v1764, %v2654
    %v2656 = vpop.f32.mrf.mxu0
    %v2657 = vadd.f32 %v1764, %v2656
    %2658 = vmatmul.bf16.gmra.mxu0 %v1627
    %v2659 = vpop.f32.mrf.mxu0
    %v2660 = vadd.f32 %v1764, %v2659
    %v2661 = vpop.f32.mrf.mxu0
    %v2662 = vadd.f32 %v1764, %v2661
    %2663 = vmatmul.bf16.gmra.mxu0 %v1629
    %v2664 = vpop.f32.mrf.mxu0
    %v2665 = vadd.f32 %v1764, %v2664
    %v2666 = vpop.f32.mrf.mxu0
    %v2667 = vadd.f32 %v1764, %v2666
    %2668 = vmatmul.bf16.gmra.mxu0 %v1631
    %v2669 = vpop.f32.mrf.mxu0
    %v2670 = vadd.f32 %v1764, %v2669
    %v2671 = vpop.f32.mrf.mxu0
    %v2672 = vadd.f32 %v1764, %v2671
    %2673 = vmatmul.bf16.gmra.mxu0 %v1633
    %v2674 = vpop.f32.mrf.mxu0
    %v2675 = vadd.f32 %v1764, %v2674
    %v2676 = vpop.f32.mrf.mxu0
    %v2677 = vadd.f32 %v1764, %v2676
    %2678 = vmatmul.bf16.gmra.mxu0 %v1635
    %v2679 = vpop.f32.mrf.mxu0
    %v2680 = vadd.f32 %v1764, %v2679
    %v2681 = vpop.f32.mrf.mxu0
    %v2682 = vadd.f32 %v1764, %v2681
    %2683 = vmatmul.bf16.gmra.mxu0 %v1637
    %v2684 = vpop.f32.mrf.mxu0
    %v2685 = vadd.f32 %v1764, %v2684
    %v2686 = vpop.f32.mrf.mxu0
    %v2687 = vadd.f32 %v1764, %v2686
    %2688 = vmatmul.bf16.gmra.mxu0 %v1639
    %v2689 = vpop.f32.mrf.mxu0
    %v2690 = vadd.f32 %v1764, %v2689
    %v2691 = vpop.f32.mrf.mxu0
    %v2692 = vadd.f32 %v1764, %v2691
    %2693 = vmatmul.bf16.gmra.mxu0 %v1641
    %v2694 = vpop.f32.mrf.mxu0
    %v2695 = vadd.f32 %v1764, %v2694
    %v2696 = vpop.f32.mrf.mxu0
    %v2697 = vadd.f32 %v1764, %v2696
    %2698 = vmatmul.bf16.gmra.mxu0 %v1643
    %v2699 = vpop.f32.mrf.mxu0
    %v2700 = vadd.f32 %v1764, %v2699
    %v2701 = vpop.f32.mrf.mxu0
    %v2702 = vadd.f32 %v1764, %v2701
    %2703 = vmatmul.bf16.gmra.mxu0 %v1645
    %v2704 = vpop.f32.mrf.mxu0
    %v2705 = vadd.f32 %v1764, %v2704
    %v2706 = vpop.f32.mrf.mxu0
    %v2707 = vadd.f32 %v1764, %v2706
    %2708 = vmatmul.bf16.gmra.mxu0 %v1647
    %v2709 = vpop.f32.mrf.mxu0
    %v2710 = vadd.f32 %v1764, %v2709
    %v2711 = vpop.f32.mrf.mxu0
    %v2712 = vadd.f32 %v1764, %v2711
    %2713 = vmatmul.bf16.gmra.mxu0 %v1649
    %v2714 = vpop.f32.mrf.mxu0
    %v2715 = vadd.f32 %v1764, %v2714
    %v2716 = vpop.f32.mrf.mxu0
    %v2717 = vadd.f32 %v1764, %v2716
    %2718 = vmatmul.bf16.gmra.mxu0 %v1651
    %v2719 = vpop.f32.mrf.mxu0
    %v2720 = vadd.f32 %v1764, %v2719
    %v2721 = vpop.f32.mrf.mxu0
    %v2722 = vadd.f32 %v1764, %v2721
    %2723 = vmatmul.bf16.gmra.mxu0 %v1653
    %v2724 = vpop.f32.mrf.mxu0
    %v2725 = vadd.f32 %v1764, %v2724
    %v2726 = vpop.f32.mrf.mxu0
    %v2727 = vadd.f32 %v1764, %v2726
    %2728 = vmatmul.bf16.gmra.mxu0 %v1655
    %v2729 = vpop.f32.mrf.mxu0
    %v2730 = vadd.f32 %v1764, %v2729
    %v2731 = vpop.f32.mrf.mxu0
    %v2732 = vadd.f32 %v1764, %v2731
    %2733 = vmatmul.bf16.gmra.mxu0 %v1657
    %v2734 = vpop.f32.mrf.mxu0
    %v2735 = vadd.f32 %v1764, %v2734
    %v2736 = vpop.f32.mrf.mxu0
    %v2737 = vadd.f32 %v1764, %v2736
    %2738 = vmatmul.bf16.gmra.mxu0 %v1659
    %v2739 = vpop.f32.mrf.mxu0
    %v2740 = vadd.f32 %v1764, %v2739
    %v2741 = vpop.f32.mrf.mxu0
    %v2742 = vadd.f32 %v1764, %v2741
    %2743 = vmatmul.bf16.gmra.mxu0 %v1661
    %v2744 = vpop.f32.mrf.mxu0
    %v2745 = vadd.f32 %v1764, %v2744
    %v2746 = vpop.f32.mrf.mxu0
    %v2747 = vadd.f32 %v1764, %v2746
    %2748 = vmatmul.bf16.gmra.mxu0 %v1663
    %v2749 = vpop.f32.mrf.mxu0
    %v2750 = vadd.f32 %v1764, %v2749
    %v2751 = vpop.f32.mrf.mxu0
    %v2752 = vadd.f32 %v1764, %v2751
    %2753 = vmatmul.bf16.gmra.mxu0 %v1665
    %v2754 = vpop.f32.mrf.mxu0
    %v2755 = vadd.f32 %v1764, %v2754
    %v2756 = vpop.f32.mrf.mxu0
    %v2757 = vadd.f32 %v1764, %v2756
    %2758 = vmatmul.bf16.gmra.mxu0 %v1667
    %v2759 = vpop.f32.mrf.mxu0
    %v2760 = vadd.f32 %v1764, %v2759
    %v2761 = vpop.f32.mrf.mxu0
    %v2762 = vadd.f32 %v1764, %v2761
    %2763 = vmatmul.bf16.gmra.mxu0 %v1669
    %v2764 = vpop.f32.mrf.mxu0
    %v2765 = vadd.f32 %v1764, %v2764
    %v2766 = vpop.f32.mrf.mxu0
    %v2767 = vadd.f32 %v1764, %v2766
    %2768 = vmatmul.bf16.gmra.mxu0 %v1671
    %v2769 = vpop.f32.mrf.mxu0
    %v2770 = vadd.f32 %v1764, %v2769
    %v2771 = vpop.f32.mrf.mxu0
    %v2772 = vadd.f32 %v1764, %v2771
    %2773 = vmatmul.bf16.gmra.mxu0 %v1673
    %v2774 = vpop.f32.mrf.mxu0
    %v2775 = vadd.f32 %v1764, %v2774
    %v2776 = vpop.f32.mrf.mxu0
    %v2777 = vadd.f32 %v1764, %v2776
    %2778 = vmatmul.bf16.gmra.mxu0 %v1675
    %v2779 = vpop.f32.mrf.mxu0
    %v2780 = vadd.f32 %v1764, %v2779
    %v2781 = vpop.f32.mrf.mxu0
    %v2782 = vadd.f32 %v1764, %v2781
    %2783 = vmatmul.bf16.gmra.mxu0 %v1677
    %v2784 = vpop.f32.mrf.mxu0
    %v2785 = vadd.f32 %v1764, %v2784
    %v2786 = vpop.f32.mrf.mxu0
    %v2787 = vadd.f32 %v1764, %v2786
    %2788 = vmatmul.bf16.gmra.mxu0 %v1679
    %v2789 = vpop.f32.mrf.mxu0
    %v2790 = vadd.f32 %v1764, %v2789
    %v2791 = vpop.f32.mrf.mxu0
    %v2792 = vadd.f32 %v1764, %v2791
    %2793 = vmatmul.bf16.gmra.mxu0 %v1681
    %v2794 = vpop.f32.mrf.mxu0
    %v2795 = vadd.f32 %v1764, %v2794
    %v2796 = vpop.f32.mrf.mxu0
    %v2797 = vadd.f32 %v1764, %v2796
    %2798 = vmatmul.bf16.gmra.mxu0 %v1683
    %v2799 = vpop.f32.mrf.mxu0
    %v2800 = vadd.f32 %v1764, %v2799
    %v2801 = vpop.f32.mrf.mxu0
    %v2802 = vadd.f32 %v1764, %v2801
    %2803 = vmatmul.bf16.gmra.mxu0 %v1685
    %v2804 = vpop.f32.mrf.mxu0
    %v2805 = vadd.f32 %v1764, %v2804
    %v2806 = vpop.f32.mrf.mxu0
    %v2807 = vadd.f32 %v1764, %v2806
    %2808 = vmatmul.bf16.gmra.mxu0 %v1687
    %v2809 = vpop.f32.mrf.mxu0
    %v2810 = vadd.f32 %v1764, %v2809
    %v2811 = vpop.f32.mrf.mxu0
    %v2812 = vadd.f32 %v1764, %v2811
    %2813 = vmatmul.bf16.gmra.mxu0 %v1689
    %v2814 = vpop.f32.mrf.mxu0
    %v2815 = vadd.f32 %v1764, %v2814
    %v2816 = vpop.f32.mrf.mxu0
    %v2817 = vadd.f32 %v1764, %v2816
    %2818 = vmatmul.bf16.gmra.mxu0 %v1691
    %v2819 = vpop.f32.mrf.mxu0
    %v2820 = vadd.f32 %v1764, %v2819
    %v2821 = vpop.f32.mrf.mxu0
    %v2822 = vadd.f32 %v1764, %v2821
    %2823 = vmatmul.bf16.gmra.mxu0 %v1693
    %v2824 = vpop.f32.mrf.mxu0
    %v2825 = vadd.f32 %v1764, %v2824
    %v2826 = vpop.f32.mrf.mxu0
    %v2827 = vadd.f32 %v1764, %v2826
    %2828 = vmatmul.bf16.gmra.mxu0 %v1695
    %v2829 = vpop.f32.mrf.mxu0
    %v2830 = vadd.f32 %v1764, %v2829
    %v2831 = vpop.f32.mrf.mxu0
    %v2832 = vadd.f32 %v1764, %v2831
    %2833 = vmatmul.bf16.gmra.mxu0 %v1697
    %v2834 = vpop.f32.mrf.mxu0
    %v2835 = vadd.f32 %v1764, %v2834
    %v2836 = vpop.f32.mrf.mxu0
    %v2837 = vadd.f32 %v1764, %v2836
    %2838 = vmatmul.bf16.gmra.mxu0 %v1699
    %v2839 = vpop.f32.mrf.mxu0
    %v2840 = vadd.f32 %v1764, %v2839
    %v2841 = vpop.f32.mrf.mxu0
    %v2842 = vadd.f32 %v1764, %v2841
    %2843 = vmatmul.bf16.gmra.mxu0 %v1701
    %v2844 = vpop.f32.mrf.mxu0
    %v2845 = vadd.f32 %v1764, %v2844
    %v2846 = vpop.f32.mrf.mxu0
    %v2847 = vadd.f32 %v1764, %v2846
    %2848 = vmatmul.bf16.gmra.mxu0 %v1703
    %v2849 = vpop.f32.mrf.mxu0
    %v2850 = vadd.f32 %v1764, %v2849
    %v2851 = vpop.f32.mrf.mxu0
    %v2852 = vadd.f32 %v1764, %v2851
    %2853 = vmatmul.bf16.gmra.mxu0 %v1705
    %v2854 = vpop.f32.mrf.mxu0
    %v2855 = vadd.f32 %v1764, %v2854
    %v2856 = vpop.f32.mrf.mxu0
    %v2857 = vadd.f32 %v1764, %v2856
    %2858 = vmatmul.bf16.gmra.mxu0 %v1707
    %v2859 = vpop.f32.mrf.mxu0
    %v2860 = vadd.f32 %v1764, %v2859
    %v2861 = vpop.f32.mrf.mxu0
    %v2862 = vadd.f32 %v1764, %v2861
    %2863 = vmatmul.bf16.gmra.mxu0 %v1709
    %v2864 = vpop.f32.mrf.mxu0
    %v2865 = vadd.f32 %v1764, %v2864
    %v2866 = vpop.f32.mrf.mxu0
    %v2867 = vadd.f32 %v1764, %v2866
    %2868 = vmatmul.bf16.gmra.mxu0 %v1711
    %v2869 = vpop.f32.mrf.mxu0
    %v2870 = vadd.f32 %v1764, %v2869
    %v2871 = vpop.f32.mrf.mxu0
    %v2872 = vadd.f32 %v1764, %v2871
    %2873 = vmatmul.bf16.gmra.mxu0 %v1713
    %v2874 = vpop.f32.mrf.mxu0
    %v2875 = vadd.f32 %v1764, %v2874
    %v2876 = vpop.f32.mrf.mxu0
    %v2877 = vadd.f32 %v1764, %v2876
    %2878 = vmatmul.bf16.gmra.mxu0 %v1715
    %v2879 = vpop.f32.mrf.mxu0
    %v2880 = vadd.f32 %v1764, %v2879
    %v2881 = vpop.f32.mrf.mxu0
    %v2882 = vadd.f32 %v1764, %v2881
    %2883 = vmatmul.bf16.gmra.mxu0 %v1717
    %v2884 = vpop.f32.mrf.mxu0
    %v2885 = vadd.f32 %v1764, %v2884
    %v2886 = vpop.f32.mrf.mxu0
    %v2887 = vadd.f32 %v1764, %v2886
    %2888 = vmatmul.bf16.gmra.mxu0 %v1719
    %v2889 = vpop.f32.mrf.mxu0
    %v2890 = vadd.f32 %v1764, %v2889
    %v2891 = vpop.f32.mrf.mxu0
    %v2892 = vadd.f32 %v1764, %v2891
    %2893 = vmatmul.bf16.gmra.mxu0 %v1721
    %v2894 = vpop.f32.mrf.mxu0
    %v2895 = vadd.f32 %v1764, %v2894
    %v2896 = vpop.f32.mrf.mxu0
    %v2897 = vadd.f32 %v1764, %v2896
    %2898 = vmatmul.bf16.gmra.mxu0 %v1723
    %v2899 = vpop.f32.mrf.mxu0
    %v2900 = vadd.f32 %v1764, %v2899
    %v2901 = vpop.f32.mrf.mxu0
    %v2902 = vadd.f32 %v1764, %v2901
    %2903 = vmatmul.bf16.gmra.mxu0 %v1725
    %v2904 = vpop.f32.mrf.mxu0
    %v2905 = vadd.f32 %v1764, %v2904
    %v2906 = vpop.f32.mrf.mxu0
    %v2907 = vadd.f32 %v1764, %v2906
    %2908 = vmatmul.bf16.gmra.mxu0 %v1727
    %v2909 = vpop.f32.mrf.mxu0
    %v2910 = vadd.f32 %v1764, %v2909
    %v2911 = vpop.f32.mrf.mxu0
    %v2912 = vadd.f32 %v1764, %v2911
    %2913 = vdwg.mxu0
    %2914 = vmatpush.bf16.msra.mxu0 %v1894
    %2915 = vmatpush.bf16.msra.mxu0 %v1892
    %2916 = vmatpush.bf16.msra.mxu0 %v1890
    %2917 = vmatpush.bf16.msra.mxu0 %v1888
    %2918 = vmatpush.bf16.msra.mxu0 %v1886
    %2919 = vmatpush.bf16.msra.mxu0 %v1884
    %2920 = vmatpush.bf16.msra.mxu0 %v1882
    %2921 = vmatpush.bf16.msra.mxu0 %v1880
    %2922 = vmatmul.bf16.gmra.mxu0 %v1602
    %v2923 = vpop.f32.mrf.mxu0
    %v2924 = vadd.f32 %v2595, %v2923
    %v2925 = vpop.f32.mrf.mxu0
    %v2926 = vadd.f32 %v2597, %v2925
    %2927 = vmatmul.bf16.gmra.mxu0 %v1604
    %v2928 = vpop.f32.mrf.mxu0
    %v2929 = vadd.f32 %v2600, %v2928
    %v2930 = vpop.f32.mrf.mxu0
    %v2931 = vadd.f32 %v2602, %v2930
    %2932 = vmatmul.bf16.gmra.mxu0 %v1606
    %v2933 = vpop.f32.mrf.mxu0
    %v2934 = vadd.f32 %v2605, %v2933
    %v2935 = vpop.f32.mrf.mxu0
    %v2936 = vadd.f32 %v2607, %v2935
    %2937 = vmatmul.bf16.gmra.mxu0 %v1608
    %v2938 = vpop.f32.mrf.mxu0
    %v2939 = vadd.f32 %v2610, %v2938
    %v2940 = vpop.f32.mrf.mxu0
    %v2941 = vadd.f32 %v2612, %v2940
    %2942 = vmatmul.bf16.gmra.mxu0 %v1610
    %v2943 = vpop.f32.mrf.mxu0
    %v2944 = vadd.f32 %v2615, %v2943
    %v2945 = vpop.f32.mrf.mxu0
    %v2946 = vadd.f32 %v2617, %v2945
    %2947 = vmatmul.bf16.gmra.mxu0 %v1612
    %v2948 = vpop.f32.mrf.mxu0
    %v2949 = vadd.f32 %v2620, %v2948
    %v2950 = vpop.f32.mrf.mxu0
    %v2951 = vadd.f32 %v2622, %v2950
    %2952 = vmatmul.bf16.gmra.mxu0 %v1614
    %v2953 = vpop.f32.mrf.mxu0
    %v2954 = vadd.f32 %v2625, %v2953
    %v2955 = vpop.f32.mrf.mxu0
    %v2956 = vadd.f32 %v2627, %v2955
    %2957 = vmatmul.bf16.gmra.mxu0 %v1616
    %v2958 = vpop.f32.mrf.mxu0
    %v2959 = vadd.f32 %v2630, %v2958
    %v2960 = vpop.f32.mrf.mxu0
    %v2961 = vadd.f32 %v2632, %v2960
    %2962 = vmatmul.bf16.gmra.mxu0 %v1618
    %v2963 = vpop.f32.mrf.mxu0
    %v2964 = vadd.f32 %v2635, %v2963
    %v2965 = vpop.f32.mrf.mxu0
    %v2966 = vadd.f32 %v2637, %v2965
    %2967 = vmatmul.bf16.gmra.mxu0 %v1620
    %v2968 = vpop.f32.mrf.mxu0
    %v2969 = vadd.f32 %v2640, %v2968
    %v2970 = vpop.f32.mrf.mxu0
    %v2971 = vadd.f32 %v2642, %v2970
    %2972 = vmatmul.bf16.gmra.mxu0 %v1622
    %v2973 = vpop.f32.mrf.mxu0
    %v2974 = vadd.f32 %v2645, %v2973
    %v2975 = vpop.f32.mrf.mxu0
    %v2976 = vadd.f32 %v2647, %v2975
    %2977 = vmatmul.bf16.gmra.mxu0 %v1624
    %v2978 = vpop.f32.mrf.mxu0
    %v2979 = vadd.f32 %v2650, %v2978
    %v2980 = vpop.f32.mrf.mxu0
    %v2981 = vadd.f32 %v2652, %v2980
    %2982 = vmatmul.bf16.gmra.mxu0 %v1626
    %v2983 = vpop.f32.mrf.mxu0
    %v2984 = vadd.f32 %v2655, %v2983
    %v2985 = vpop.f32.mrf.mxu0
    %v2986 = vadd.f32 %v2657, %v2985
    %2987 = vmatmul.bf16.gmra.mxu0 %v1628
    %v2988 = vpop.f32.mrf.mxu0
    %v2989 = vadd.f32 %v2660, %v2988
    %v2990 = vpop.f32.mrf.mxu0
    %v2991 = vadd.f32 %v2662, %v2990
    %2992 = vmatmul.bf16.gmra.mxu0 %v1630
    %v2993 = vpop.f32.mrf.mxu0
    %v2994 = vadd.f32 %v2665, %v2993
    %v2995 = vpop.f32.mrf.mxu0
    %v2996 = vadd.f32 %v2667, %v2995
    %2997 = vmatmul.bf16.gmra.mxu0 %v1632
    %v2998 = vpop.f32.mrf.mxu0
    %v2999 = vadd.f32 %v2670, %v2998
    %v3000 = vpop.f32.mrf.mxu0
    %v3001 = vadd.f32 %v2672, %v3000
    %3002 = vmatmul.bf16.gmra.mxu0 %v1634
    %v3003 = vpop.f32.mrf.mxu0
    %v3004 = vadd.f32 %v2675, %v3003
    %v3005 = vpop.f32.mrf.mxu0
    %v3006 = vadd.f32 %v2677, %v3005
    %3007 = vmatmul.bf16.gmra.mxu0 %v1636
    %v3008 = vpop.f32.mrf.mxu0
    %v3009 = vadd.f32 %v2680, %v3008
    %v3010 = vpop.f32.mrf.mxu0
    %v3011 = vadd.f32 %v2682, %v3010
    %3012 = vmatmul.bf16.gmra.mxu0 %v1638
    %v3013 = vpop.f32.mrf.mxu0
    %v3014 = vadd.f32 %v2685, %v3013
    %v3015 = vpop.f32.mrf.mxu0
    %v3016 = vadd.f32 %v2687, %v3015
    %3017 = vmatmul.bf16.gmra.mxu0 %v1640
    %v3018 = vpop.f32.mrf.mxu0
    %v3019 = vadd.f32 %v2690, %v3018
    %v3020 = vpop.f32.mrf.mxu0
    %v3021 = vadd.f32 %v2692, %v3020
    %3022 = vmatmul.bf16.gmra.mxu0 %v1642
    %v3023 = vpop.f32.mrf.mxu0
    %v3024 = vadd.f32 %v2695, %v3023
    %v3025 = vpop.f32.mrf.mxu0
    %v3026 = vadd.f32 %v2697, %v3025
    %3027 = vmatmul.bf16.gmra.mxu0 %v1644
    %v3028 = vpop.f32.mrf.mxu0
    %v3029 = vadd.f32 %v2700, %v3028
    %v3030 = vpop.f32.mrf.mxu0
    %v3031 = vadd.f32 %v2702, %v3030
    %3032 = vmatmul.bf16.gmra.mxu0 %v1646
    %v3033 = vpop.f32.mrf.mxu0
    %v3034 = vadd.f32 %v2705, %v3033
    %v3035 = vpop.f32.mrf.mxu0
    %v3036 = vadd.f32 %v2707, %v3035
    %3037 = vmatmul.bf16.gmra.mxu0 %v1648
    %v3038 = vpop.f32.mrf.mxu0
    %v3039 = vadd.f32 %v2710, %v3038
    %v3040 = vpop.f32.mrf.mxu0
    %v3041 = vadd.f32 %v2712, %v3040
    %3042 = vmatmul.bf16.gmra.mxu0 %v1650
    %v3043 = vpop.f32.mrf.mxu0
    %v3044 = vadd.f32 %v2715, %v3043
    %v3045 = vpop.f32.mrf.mxu0
    %v3046 = vadd.f32 %v2717, %v3045
    %3047 = vmatmul.bf16.gmra.mxu0 %v1652
    %v3048 = vpop.f32.mrf.mxu0
    %v3049 = vadd.f32 %v2720, %v3048
    %v3050 = vpop.f32.mrf.mxu0
    %v3051 = vadd.f32 %v2722, %v3050
    %3052 = vmatmul.bf16.gmra.mxu0 %v1654
    %v3053 = vpop.f32.mrf.mxu0
    %v3054 = vadd.f32 %v2725, %v3053
    %v3055 = vpop.f32.mrf.mxu0
    %v3056 = vadd.f32 %v2727, %v3055
    %3057 = vmatmul.bf16.gmra.mxu0 %v1656
    %v3058 = vpop.f32.mrf.mxu0
    %v3059 = vadd.f32 %v2730, %v3058
    %v3060 = vpop.f32.mrf.mxu0
    %v3061 = vadd.f32 %v2732, %v3060
    %3062 = vmatmul.bf16.gmra.mxu0 %v1658
    %v3063 = vpop.f32.mrf.mxu0
    %v3064 = vadd.f32 %v2735, %v3063
    %v3065 = vpop.f32.mrf.mxu0
    %v3066 = vadd.f32 %v2737, %v3065
    %3067 = vmatmul.bf16.gmra.mxu0 %v1660
    %v3068 = vpop.f32.mrf.mxu0
    %v3069 = vadd.f32 %v2740, %v3068
    %v3070 = vpop.f32.mrf.mxu0
    %v3071 = vadd.f32 %v2742, %v3070
    %3072 = vmatmul.bf16.gmra.mxu0 %v1662
    %v3073 = vpop.f32.mrf.mxu0
    %v3074 = vadd.f32 %v2745, %v3073
    %v3075 = vpop.f32.mrf.mxu0
    %v3076 = vadd.f32 %v2747, %v3075
    %3077 = vmatmul.bf16.gmra.mxu0 %v1664
    %v3078 = vpop.f32.mrf.mxu0
    %v3079 = vadd.f32 %v2750, %v3078
    %v3080 = vpop.f32.mrf.mxu0
    %v3081 = vadd.f32 %v2752, %v3080
    %3082 = vmatmul.bf16.gmra.mxu0 %v1666
    %v3083 = vpop.f32.mrf.mxu0
    %v3084 = vadd.f32 %v2755, %v3083
    %v3085 = vpop.f32.mrf.mxu0
    %v3086 = vadd.f32 %v2757, %v3085
    %3087 = vmatmul.bf16.gmra.mxu0 %v1668
    %v3088 = vpop.f32.mrf.mxu0
    %v3089 = vadd.f32 %v2760, %v3088
    %v3090 = vpop.f32.mrf.mxu0
    %v3091 = vadd.f32 %v2762, %v3090
    %3092 = vmatmul.bf16.gmra.mxu0 %v1670
    %v3093 = vpop.f32.mrf.mxu0
    %v3094 = vadd.f32 %v2765, %v3093
    %v3095 = vpop.f32.mrf.mxu0
    %v3096 = vadd.f32 %v2767, %v3095
    %3097 = vmatmul.bf16.gmra.mxu0 %v1672
    %v3098 = vpop.f32.mrf.mxu0
    %v3099 = vadd.f32 %v2770, %v3098
    %v3100 = vpop.f32.mrf.mxu0
    %v3101 = vadd.f32 %v2772, %v3100
    %3102 = vmatmul.bf16.gmra.mxu0 %v1674
    %v3103 = vpop.f32.mrf.mxu0
    %v3104 = vadd.f32 %v2775, %v3103
    %v3105 = vpop.f32.mrf.mxu0
    %v3106 = vadd.f32 %v2777, %v3105
    %3107 = vmatmul.bf16.gmra.mxu0 %v1676
    %v3108 = vpop.f32.mrf.mxu0
    %v3109 = vadd.f32 %v2780, %v3108
    %v3110 = vpop.f32.mrf.mxu0
    %v3111 = vadd.f32 %v2782, %v3110
    %3112 = vmatmul.bf16.gmra.mxu0 %v1678
    %v3113 = vpop.f32.mrf.mxu0
    %v3114 = vadd.f32 %v2785, %v3113
    %v3115 = vpop.f32.mrf.mxu0
    %v3116 = vadd.f32 %v2787, %v3115
    %3117 = vmatmul.bf16.gmra.mxu0 %v1680
    %v3118 = vpop.f32.mrf.mxu0
    %v3119 = vadd.f32 %v2790, %v3118
    %v3120 = vpop.f32.mrf.mxu0
    %v3121 = vadd.f32 %v2792, %v3120
    %3122 = vmatmul.bf16.gmra.mxu0 %v1682
    %v3123 = vpop.f32.mrf.mxu0
    %v3124 = vadd.f32 %v2795, %v3123
    %v3125 = vpop.f32.mrf.mxu0
    %v3126 = vadd.f32 %v2797, %v3125
    %3127 = vmatmul.bf16.gmra.mxu0 %v1684
    %v3128 = vpop.f32.mrf.mxu0
    %v3129 = vadd.f32 %v2800, %v3128
    %v3130 = vpop.f32.mrf.mxu0
    %v3131 = vadd.f32 %v2802, %v3130
    %3132 = vmatmul.bf16.gmra.mxu0 %v1686
    %v3133 = vpop.f32.mrf.mxu0
    %v3134 = vadd.f32 %v2805, %v3133
    %v3135 = vpop.f32.mrf.mxu0
    %v3136 = vadd.f32 %v2807, %v3135
    %3137 = vmatmul.bf16.gmra.mxu0 %v1688
    %v3138 = vpop.f32.mrf.mxu0
    %v3139 = vadd.f32 %v2810, %v3138
    %v3140 = vpop.f32.mrf.mxu0
    %v3141 = vadd.f32 %v2812, %v3140
    %3142 = vmatmul.bf16.gmra.mxu0 %v1690
    %v3143 = vpop.f32.mrf.mxu0
    %v3144 = vadd.f32 %v2815, %v3143
    %v3145 = vpop.f32.mrf.mxu0
    %v3146 = vadd.f32 %v2817, %v3145
    %3147 = vmatmul.bf16.gmra.mxu0 %v1692
    %v3148 = vpop.f32.mrf.mxu0
    %v3149 = vadd.f32 %v2820, %v3148
    %v3150 = vpop.f32.mrf.mxu0
    %v3151 = vadd.f32 %v2822, %v3150
    %3152 = vmatmul.bf16.gmra.mxu0 %v1694
    %v3153 = vpop.f32.mrf.mxu0
    %v3154 = vadd.f32 %v2825, %v3153
    %v3155 = vpop.f32.mrf.mxu0
    %v3156 = vadd.f32 %v2827, %v3155
    %3157 = vmatmul.bf16.gmra.mxu0 %v1696
    %v3158 = vpop.f32.mrf.mxu0
    %v3159 = vadd.f32 %v2830, %v3158
    %v3160 = vpop.f32.mrf.mxu0
    %v3161 = vadd.f32 %v2832, %v3160
    %3162 = vmatmul.bf16.gmra.mxu0 %v1698
    %v3163 = vpop.f32.mrf.mxu0
    %v3164 = vadd.f32 %v2835, %v3163
    %v3165 = vpop.f32.mrf.mxu0
    %v3166 = vadd.f32 %v2837, %v3165
    %3167 = vmatmul.bf16.gmra.mxu0 %v1700
    %v3168 = vpop.f32.mrf.mxu0
    %v3169 = vadd.f32 %v2840, %v3168
    %v3170 = vpop.f32.mrf.mxu0
    %v3171 = vadd.f32 %v2842, %v3170
    %3172 = vmatmul.bf16.gmra.mxu0 %v1702
    %v3173 = vpop.f32.mrf.mxu0
    %v3174 = vadd.f32 %v2845, %v3173
    %v3175 = vpop.f32.mrf.mxu0
    %v3176 = vadd.f32 %v2847, %v3175
    %3177 = vmatmul.bf16.gmra.mxu0 %v1704
    %v3178 = vpop.f32.mrf.mxu0
    %v3179 = vadd.f32 %v2850, %v3178
    %v3180 = vpop.f32.mrf.mxu0
    %v3181 = vadd.f32 %v2852, %v3180
    %3182 = vmatmul.bf16.gmra.mxu0 %v1706
    %v3183 = vpop.f32.mrf.mxu0
    %v3184 = vadd.f32 %v2855, %v3183
    %v3185 = vpop.f32.mrf.mxu0
    %v3186 = vadd.f32 %v2857, %v3185
    %3187 = vmatmul.bf16.gmra.mxu0 %v1708
    %v3188 = vpop.f32.mrf.mxu0
    %v3189 = vadd.f32 %v2860, %v3188
    %v3190 = vpop.f32.mrf.mxu0
    %v3191 = vadd.f32 %v2862, %v3190
    %3192 = vmatmul.bf16.gmra.mxu0 %v1710
    %v3193 = vpop.f32.mrf.mxu0
    %v3194 = vadd.f32 %v2865, %v3193
    %v3195 = vpop.f32.mrf.mxu0
    %v3196 = vadd.f32 %v2867, %v3195
    %3197 = vmatmul.bf16.gmra.mxu0 %v1712
    %v3198 = vpop.f32.mrf.mxu0
    %v3199 = vadd.f32 %v2870, %v3198
    %v3200 = vpop.f32.mrf.mxu0
    %v3201 = vadd.f32 %v2872, %v3200
    %3202 = vmatmul.bf16.gmra.mxu0 %v1714
    %v3203 = vpop.f32.mrf.mxu0
    %v3204 = vadd.f32 %v2875, %v3203
    %v3205 = vpop.f32.mrf.mxu0
    %v3206 = vadd.f32 %v2877, %v3205
    %3207 = vmatmul.bf16.gmra.mxu0 %v1716
    %v3208 = vpop.f32.mrf.mxu0
    %v3209 = vadd.f32 %v2880, %v3208
    %v3210 = vpop.f32.mrf.mxu0
    %v3211 = vadd.f32 %v2882, %v3210
    %3212 = vmatmul.bf16.gmra.mxu0 %v1718
    %v3213 = vpop.f32.mrf.mxu0
    %v3214 = vadd.f32 %v2885, %v3213
    %v3215 = vpop.f32.mrf.mxu0
    %v3216 = vadd.f32 %v2887, %v3215
    %3217 = vmatmul.bf16.gmra.mxu0 %v1720
    %v3218 = vpop.f32.mrf.mxu0
    %v3219 = vadd.f32 %v2890, %v3218
    %v3220 = vpop.f32.mrf.mxu0
    %v3221 = vadd.f32 %v2892, %v3220
    %3222 = vmatmul.bf16.gmra.mxu0 %v1722
    %v3223 = vpop.f32.mrf.mxu0
    %v3224 = vadd.f32 %v2895, %v3223
    %v3225 = vpop.f32.mrf.mxu0
    %v3226 = vadd.f32 %v2897, %v3225
    %3227 = vmatmul.bf16.gmra.mxu0 %v1724
    %v3228 = vpop.f32.mrf.mxu0
    %v3229 = vadd.f32 %v2900, %v3228
    %v3230 = vpop.f32.mrf.mxu0
    %v3231 = vadd.f32 %v2902, %v3230
    %3232 = vmatmul.bf16.gmra.mxu0 %v1726
    %v3233 = vpop.f32.mrf.mxu0
    %v3234 = vadd.f32 %v2905, %v3233
    %v3235 = vpop.f32.mrf.mxu0
    %v3236 = vadd.f32 %v2907, %v3235
    %3237 = vmatmul.bf16.gmra.mxu0 %v1728
    %v3238 = vpop.f32.mrf.mxu0
    %v3239 = vadd.f32 %v2910, %v3238
    %v3240 = vpop.f32.mrf.mxu0
    %v3241 = vadd.f32 %v2912, %v3240
    %3242 = vdwg.mxu0
    %v3243 = vmax.f32 %v2266, 0.0
    %v3244 = vmax.f32 %v2924, 0.0
    %v3245 = vmax.f32 %v2268, 0.0
    %v3246 = vmax.f32 %v2926, 0.0
    %v3247 = vmax.f32 %v2271, 0.0
    %v3248 = vmax.f32 %v2929, 0.0
    %v3249 = vmax.f32 %v2273, 0.0
    %v3250 = vmax.f32 %v2931, 0.0
    %v3251 = vmax.f32 %v2276, 0.0
    %v3252 = vmax.f32 %v2934, 0.0
    %v3253 = vmax.f32 %v2278, 0.0
    %v3254 = vmax.f32 %v2936, 0.0
    %v3255 = vmax.f32 %v2281, 0.0
    %v3256 = vmax.f32 %v2939, 0.0
    %v3257 = vmax.f32 %v2283, 0.0
    %v3258 = vmax.f32 %v2941, 0.0
    %v3259 = vmax.f32 %v2286, 0.0
    %v3260 = vmax.f32 %v2944, 0.0
    %v3261 = vmax.f32 %v2288, 0.0
    %v3262 = vmax.f32 %v2946, 0.0
    %v3263 = vmax.f32 %v2291, 0.0
    %v3264 = vmax.f32 %v2949, 0.0
    %v3265 = vmax.f32 %v2293, 0.0
    %v3266 = vmax.f32 %v2951, 0.0
    %v3267 = vmax.f32 %v2296, 0.0
    %v3268 = vmax.f32 %v2954, 0.0
    %v3269 = vmax.f32 %v2298, 0.0
    %v3270 = vmax.f32 %v2956, 0.0
    %v3271 = vmax.f32 %v2301, 0.0
    %v3272 = vmax.f32 %v2959, 0.0
    %v3273 = vmax.f32 %v2303, 0.0
    %v3274 = vmax.f32 %v2961, 0.0
    %v3275 = vmax.f32 %v2306, 0.0
    %v3276 = vmax.f32 %v2964, 0.0
    %v3277 = vmax.f32 %v2308, 0.0
    %v3278 = vmax.f32 %v2966, 0.0
    %v3279 = vmax.f32 %v2311, 0.0
    %v3280 = vmax.f32 %v2969, 0.0
    %v3281 = vmax.f32 %v2313, 0.0
    %v3282 = vmax.f32 %v2971, 0.0
    %v3283 = vmax.f32 %v2316, 0.0
    %v3284 = vmax.f32 %v2974, 0.0
    %v3285 = vmax.f32 %v2318, 0.0
    %v3286 = vmax.f32 %v2976, 0.0
    %v3287 = vmax.f32 %v2321, 0.0
    %v3288 = vmax.f32 %v2979, 0.0
    %v3289 = vmax.f32 %v2323, 0.0
    %v3290 = vmax.f32 %v2981, 0.0
    %v3291 = vmax.f32 %v2326, 0.0
    %v3292 = vmax.f32 %v2984, 0.0
    %v3293 = vmax.f32 %v2328, 0.0
    %v3294 = vmax.f32 %v2986, 0.0
    %v3295 = vmax.f32 %v2331, 0.0
    %v3296 = vmax.f32 %v2989, 0.0
    %v3297 = vmax.f32 %v2333, 0.0
    %v3298 = vmax.f32 %v2991, 0.0
    %v3299 = vmax.f32 %v2336, 0.0
    %v3300 = vmax.f32 %v2994, 0.0
    %v3301 = vmax.f32 %v2338, 0.0
    %v3302 = vmax.f32 %v2996, 0.0
    %v3303 = vmax.f32 %v2341, 0.0
    %v3304 = vmax.f32 %v2999, 0.0
    %v3305 = vmax.f32 %v2343, 0.0
    %v3306 = vmax.f32 %v3001, 0.0
    %v3307 = vmax.f32 %v2346, 0.0
    %v3308 = vmax.f32 %v3004, 0.0
    %v3309 = vmax.f32 %v2348, 0.0
    %v3310 = vmax.f32 %v3006, 0.0
    %v3311 = vmax.f32 %v2351, 0.0
    %v3312 = vmax.f32 %v3009, 0.0
    %v3313 = vmax.f32 %v2353, 0.0
    %v3314 = vmax.f32 %v3011, 0.0
    %v3315 = vmax.f32 %v2356, 0.0
    %v3316 = vmax.f32 %v3014, 0.0
    %v3317 = vmax.f32 %v2358, 0.0
    %v3318 = vmax.f32 %v3016, 0.0
    %v3319 = vmax.f32 %v2361, 0.0
    %v3320 = vmax.f32 %v3019, 0.0
    %v3321 = vmax.f32 %v2363, 0.0
    %v3322 = vmax.f32 %v3021, 0.0
    %v3323 = vmax.f32 %v2366, 0.0
    %v3324 = vmax.f32 %v3024, 0.0
    %v3325 = vmax.f32 %v2368, 0.0
    %v3326 = vmax.f32 %v3026, 0.0
    %v3327 = vmax.f32 %v2371, 0.0
    %v3328 = vmax.f32 %v3029, 0.0
    %v3329 = vmax.f32 %v2373, 0.0
    %v3330 = vmax.f32 %v3031, 0.0
    %v3331 = vmax.f32 %v2376, 0.0
    %v3332 = vmax.f32 %v3034, 0.0
    %v3333 = vmax.f32 %v2378, 0.0
    %v3334 = vmax.f32 %v3036, 0.0
    %v3335 = vmax.f32 %v2381, 0.0
    %v3336 = vmax.f32 %v3039, 0.0
    %v3337 = vmax.f32 %v2383, 0.0
    %v3338 = vmax.f32 %v3041, 0.0
    %v3339 = vmax.f32 %v2386, 0.0
    %v3340 = vmax.f32 %v3044, 0.0
    %v3341 = vmax.f32 %v2388, 0.0
    %v3342 = vmax.f32 %v3046, 0.0
    %v3343 = vmax.f32 %v2391, 0.0
    %v3344 = vmax.f32 %v3049, 0.0
    %v3345 = vmax.f32 %v2393, 0.0
    %v3346 = vmax.f32 %v3051, 0.0
    %v3347 = vmax.f32 %v2396, 0.0
    %v3348 = vmax.f32 %v3054, 0.0
    %v3349 = vmax.f32 %v2398, 0.0
    %v3350 = vmax.f32 %v3056, 0.0
    %v3351 = vmax.f32 %v2401, 0.0
    %v3352 = vmax.f32 %v3059, 0.0
    %v3353 = vmax.f32 %v2403, 0.0
    %v3354 = vmax.f32 %v3061, 0.0
    %v3355 = vmax.f32 %v2406, 0.0
    %v3356 = vmax.f32 %v3064, 0.0
    %v3357 = vmax.f32 %v2408, 0.0
    %v3358 = vmax.f32 %v3066, 0.0
    %v3359 = vmax.f32 %v2411, 0.0
    %v3360 = vmax.f32 %v3069, 0.0
    %v3361 = vmax.f32 %v2413, 0.0
    %v3362 = vmax.f32 %v3071, 0.0
    %v3363 = vmax.f32 %v2416, 0.0
    %v3364 = vmax.f32 %v3074, 0.0
    %v3365 = vmax.f32 %v2418, 0.0
    %v3366 = vmax.f32 %v3076, 0.0
    %v3367 = vmax.f32 %v2421, 0.0
    %v3368 = vmax.f32 %v3079, 0.0
    %v3369 = vmax.f32 %v2423, 0.0
    %v3370 = vmax.f32 %v3081, 0.0
    %v3371 = vmax.f32 %v2426, 0.0
    %v3372 = vmax.f32 %v3084, 0.0
    %v3373 = vmax.f32 %v2428, 0.0
    %v3374 = vmax.f32 %v3086, 0.0
    %v3375 = vmax.f32 %v2431, 0.0
    %v3376 = vmax.f32 %v3089, 0.0
    %v3377 = vmax.f32 %v2433, 0.0
    %v3378 = vmax.f32 %v3091, 0.0
    %v3379 = vmax.f32 %v2436, 0.0
    %v3380 = vmax.f32 %v3094, 0.0
    %v3381 = vmax.f32 %v2438, 0.0
    %v3382 = vmax.f32 %v3096, 0.0
    %v3383 = vmax.f32 %v2441, 0.0
    %v3384 = vmax.f32 %v3099, 0.0
    %v3385 = vmax.f32 %v2443, 0.0
    %v3386 = vmax.f32 %v3101, 0.0
    %v3387 = vmax.f32 %v2446, 0.0
    %v3388 = vmax.f32 %v3104, 0.0
    %v3389 = vmax.f32 %v2448, 0.0
    %v3390 = vmax.f32 %v3106, 0.0
    %v3391 = vmax.f32 %v2451, 0.0
    %v3392 = vmax.f32 %v3109, 0.0
    %v3393 = vmax.f32 %v2453, 0.0
    %v3394 = vmax.f32 %v3111, 0.0
    %v3395 = vmax.f32 %v2456, 0.0
    %v3396 = vmax.f32 %v3114, 0.0
    %v3397 = vmax.f32 %v2458, 0.0
    %v3398 = vmax.f32 %v3116, 0.0
    %v3399 = vmax.f32 %v2461, 0.0
    %v3400 = vmax.f32 %v3119, 0.0
    %v3401 = vmax.f32 %v2463, 0.0
    %v3402 = vmax.f32 %v3121, 0.0
    %v3403 = vmax.f32 %v2466, 0.0
    %v3404 = vmax.f32 %v3124, 0.0
    %v3405 = vmax.f32 %v2468, 0.0
    %v3406 = vmax.f32 %v3126, 0.0
    %v3407 = vmax.f32 %v2471, 0.0
    %v3408 = vmax.f32 %v3129, 0.0
    %v3409 = vmax.f32 %v2473, 0.0
    %v3410 = vmax.f32 %v3131, 0.0
    %v3411 = vmax.f32 %v2476, 0.0
    %v3412 = vmax.f32 %v3134, 0.0
    %v3413 = vmax.f32 %v2478, 0.0
    %v3414 = vmax.f32 %v3136, 0.0
    %v3415 = vmax.f32 %v2481, 0.0
    %v3416 = vmax.f32 %v3139, 0.0
    %v3417 = vmax.f32 %v2483, 0.0
    %v3418 = vmax.f32 %v3141, 0.0
    %v3419 = vmax.f32 %v2486, 0.0
    %v3420 = vmax.f32 %v3144, 0.0
    %v3421 = vmax.f32 %v2488, 0.0
    %v3422 = vmax.f32 %v3146, 0.0
    %v3423 = vmax.f32 %v2491, 0.0
    %v3424 = vmax.f32 %v3149, 0.0
    %v3425 = vmax.f32 %v2493, 0.0
    %v3426 = vmax.f32 %v3151, 0.0
    %v3427 = vmax.f32 %v2496, 0.0
    %v3428 = vmax.f32 %v3154, 0.0
    %v3429 = vmax.f32 %v2498, 0.0
    %v3430 = vmax.f32 %v3156, 0.0
    %v3431 = vmax.f32 %v2501, 0.0
    %v3432 = vmax.f32 %v3159, 0.0
    %v3433 = vmax.f32 %v2503, 0.0
    %v3434 = vmax.f32 %v3161, 0.0
    %v3435 = vmax.f32 %v2506, 0.0
    %v3436 = vmax.f32 %v3164, 0.0
    %v3437 = vmax.f32 %v2508, 0.0
    %v3438 = vmax.f32 %v3166, 0.0
    %v3439 = vmax.f32 %v2511, 0.0
    %v3440 = vmax.f32 %v3169, 0.0
    %v3441 = vmax.f32 %v2513, 0.0
    %v3442 = vmax.f32 %v3171, 0.0
    %v3443 = vmax.f32 %v2516, 0.0
    %v3444 = vmax.f32 %v3174, 0.0
    %v3445 = vmax.f32 %v2518, 0.0
    %v3446 = vmax.f32 %v3176, 0.0
    %v3447 = vmax.f32 %v2521, 0.0
    %v3448 = vmax.f32 %v3179, 0.0
    %v3449 = vmax.f32 %v2523, 0.0
    %v3450 = vmax.f32 %v3181, 0.0
    %v3451 = vmax.f32 %v2526, 0.0
    %v3452 = vmax.f32 %v3184, 0.0
    %v3453 = vmax.f32 %v2528, 0.0
    %v3454 = vmax.f32 %v3186, 0.0
    %v3455 = vmax.f32 %v2531, 0.0
    %v3456 = vmax.f32 %v3189, 0.0
    %v3457 = vmax.f32 %v2533, 0.0
    %v3458 = vmax.f32 %v3191, 0.0
    %v3459 = vmax.f32 %v2536, 0.0
    %v3460 = vmax.f32 %v3194, 0.0
    %v3461 = vmax.f32 %v2538, 0.0
    %v3462 = vmax.f32 %v3196, 0.0
    %v3463 = vmax.f32 %v2541, 0.0
    %v3464 = vmax.f32 %v3199, 0.0
    %v3465 = vmax.f32 %v2543, 0.0
    %v3466 = vmax.f32 %v3201, 0.0
    %v3467 = vmax.f32 %v2546, 0.0
    %v3468 = vmax.f32 %v3204, 0.0
    %v3469 = vmax.f32 %v2548, 0.0
    %v3470 = vmax.f32 %v3206, 0.0
    %v3471 = vmax.f32 %v2551, 0.0
    %v3472 = vmax.f32 %v3209, 0.0
    %v3473 = vmax.f32 %v2553, 0.0
    %v3474 = vmax.f32 %v3211, 0.0
    %v3475 = vmax.f32 %v2556, 0.0
    %v3476 = vmax.f32 %v3214, 0.0
    %v3477 = vmax.f32 %v2558, 0.0
    %v3478 = vmax.f32 %v3216, 0.0
    %v3479 = vmax.f32 %v2561, 0.0
    %v3480 = vmax.f32 %v3219, 0.0
    %v3481 = vmax.f32 %v2563, 0.0
    %v3482 = vmax.f32 %v3221, 0.0
    %v3483 = vmax.f32 %v2566, 0.0
    %v3484 = vmax.f32 %v3224, 0.0
    %v3485 = vmax.f32 %v2568, 0.0
    %v3486 = vmax.f32 %v3226, 0.0
    %v3487 = vmax.f32 %v2571, 0.0
    %v3488 = vmax.f32 %v3229, 0.0
    %v3489 = vmax.f32 %v2573, 0.0
    %v3490 = vmax.f32 %v3231, 0.0
    %v3491 = vmax.f32 %v2576, 0.0
    %v3492 = vmax.f32 %v3234, 0.0
    %v3493 = vmax.f32 %v2578, 0.0
    %v3494 = vmax.f32 %v3236, 0.0
    %v3495 = vmax.f32 %v2581, 0.0
    %v3496 = vmax.f32 %v3239, 0.0
    %v3497 = vmax.f32 %v2583, 0.0
    %v3498 = vmax.f32 %v3241, 0.0
    %v3499 = vpack.c.bf16 %v3245, %v3243
    %v3500 = vpack.c.bf16 %v3246, %v3244
    %v3501 = vpack.c.bf16 %v3249, %v3247
    %v3502 = vpack.c.bf16 %v3250, %v3248
    %v3503 = vpack.c.bf16 %v3253, %v3251
    %v3504 = vpack.c.bf16 %v3254, %v3252
    %v3505 = vpack.c.bf16 %v3257, %v3255
    %v3506 = vpack.c.bf16 %v3258, %v3256
    %v3507 = vpack.c.bf16 %v3261, %v3259
    %v3508 = vpack.c.bf16 %v3262, %v3260
    %v3509 = vpack.c.bf16 %v3265, %v3263
    %v3510 = vpack.c.bf16 %v3266, %v3264
    %v3511 = vpack.c.bf16 %v3269, %v3267
    %v3512 = vpack.c.bf16 %v3270, %v3268
    %v3513 = vpack.c.bf16 %v3273, %v3271
    %v3514 = vpack.c.bf16 %v3274, %v3272
    %v3515 = vpack.c.bf16 %v3277, %v3275
    %v3516 = vpack.c.bf16 %v3278, %v3276
    %v3517 = vpack.c.bf16 %v3281, %v3279
    %v3518 = vpack.c.bf16 %v3282, %v3280
    %v3519 = vpack.c.bf16 %v3285, %v3283
    %v3520 = vpack.c.bf16 %v3286, %v3284
    %v3521 = vpack.c.bf16 %v3289, %v3287
    %v3522 = vpack.c.bf16 %v3290, %v3288
    %v3523 = vpack.c.bf16 %v3293, %v3291
    %v3524 = vpack.c.bf16 %v3294, %v3292
    %v3525 = vpack.c.bf16 %v3297, %v3295
    %v3526 = vpack.c.bf16 %v3298, %v3296
    %v3527 = vpack.c.bf16 %v3301, %v3299
    %v3528 = vpack.c.bf16 %v3302, %v3300
    %v3529 = vpack.c.bf16 %v3305, %v3303
    %v3530 = vpack.c.bf16 %v3306, %v3304
    %v3531 = vpack.c.bf16 %v3309, %v3307
    %v3532 = vpack.c.bf16 %v3310, %v3308
    %v3533 = vpack.c.bf16 %v3313, %v3311
    %v3534 = vpack.c.bf16 %v3314, %v3312
    %v3535 = vpack.c.bf16 %v3317, %v3315
    %v3536 = vpack.c.bf16 %v3318, %v3316
    %v3537 = vpack.c.bf16 %v3321, %v3319
    %v3538 = vpack.c.bf16 %v3322, %v3320
    %v3539 = vpack.c.bf16 %v3325, %v3323
    %v3540 = vpack.c.bf16 %v3326, %v3324
    %v3541 = vpack.c.bf16 %v3329, %v3327
    %v3542 = vpack.c.bf16 %v3330, %v3328
    %v3543 = vpack.c.bf16 %v3333, %v3331
    %v3544 = vpack.c.bf16 %v3334, %v3332
    %v3545 = vpack.c.bf16 %v3337, %v3335
    %v3546 = vpack.c.bf16 %v3338, %v3336
    %v3547 = vpack.c.bf16 %v3341, %v3339
    %v3548 = vpack.c.bf16 %v3342, %v3340
    %v3549 = vpack.c.bf16 %v3345, %v3343
    %v3550 = vpack.c.bf16 %v3346, %v3344
    %v3551 = vpack.c.bf16 %v3349, %v3347
    %v3552 = vpack.c.bf16 %v3350, %v3348
    %v3553 = vpack.c.bf16 %v3353, %v3351
    %v3554 = vpack.c.bf16 %v3354, %v3352
    %v3555 = vpack.c.bf16 %v3357, %v3355
    %v3556 = vpack.c.bf16 %v3358, %v3356
    %v3557 = vpack.c.bf16 %v3361, %v3359
    %v3558 = vpack.c.bf16 %v3362, %v3360
    %v3559 = vpack.c.bf16 %v3365, %v3363
    %v3560 = vpack.c.bf16 %v3366, %v3364
    %v3561 = vpack.c.bf16 %v3369, %v3367
    %v3562 = vpack.c.bf16 %v3370, %v3368
    %v3563 = vpack.c.bf16 %v3373, %v3371
    %v3564 = vpack.c.bf16 %v3374, %v3372
    %v3565 = vpack.c.bf16 %v3377, %v3375
    %v3566 = vpack.c.bf16 %v3378, %v3376
    %v3567 = vpack.c.bf16 %v3381, %v3379
    %v3568 = vpack.c.bf16 %v3382, %v3380
    %v3569 = vpack.c.bf16 %v3385, %v3383
    %v3570 = vpack.c.bf16 %v3386, %v3384
    %v3571 = vpack.c.bf16 %v3389, %v3387
    %v3572 = vpack.c.bf16 %v3390, %v3388
    %v3573 = vpack.c.bf16 %v3393, %v3391
    %v3574 = vpack.c.bf16 %v3394, %v3392
    %v3575 = vpack.c.bf16 %v3397, %v3395
    %v3576 = vpack.c.bf16 %v3398, %v3396
    %v3577 = vpack.c.bf16 %v3401, %v3399
    %v3578 = vpack.c.bf16 %v3402, %v3400
    %v3579 = vpack.c.bf16 %v3405, %v3403
    %v3580 = vpack.c.bf16 %v3406, %v3404
    %v3581 = vpack.c.bf16 %v3409, %v3407
    %v3582 = vpack.c.bf16 %v3410, %v3408
    %v3583 = vpack.c.bf16 %v3413, %v3411
    %v3584 = vpack.c.bf16 %v3414, %v3412
    %v3585 = vpack.c.bf16 %v3417, %v3415
    %v3586 = vpack.c.bf16 %v3418, %v3416
    %v3587 = vpack.c.bf16 %v3421, %v3419
    %v3588 = vpack.c.bf16 %v3422, %v3420
    %v3589 = vpack.c.bf16 %v3425, %v3423
    %v3590 = vpack.c.bf16 %v3426, %v3424
    %v3591 = vpack.c.bf16 %v3429, %v3427
    %v3592 = vpack.c.bf16 %v3430, %v3428
    %v3593 = vpack.c.bf16 %v3433, %v3431
    %v3594 = vpack.c.bf16 %v3434, %v3432
    %v3595 = vpack.c.bf16 %v3437, %v3435
    %v3596 = vpack.c.bf16 %v3438, %v3436
    %v3597 = vpack.c.bf16 %v3441, %v3439
    %v3598 = vpack.c.bf16 %v3442, %v3440
    %v3599 = vpack.c.bf16 %v3445, %v3443
    %v3600 = vpack.c.bf16 %v3446, %v3444
    %v3601 = vpack.c.bf16 %v3449, %v3447
    %v3602 = vpack.c.bf16 %v3450, %v3448
    %v3603 = vpack.c.bf16 %v3453, %v3451
    %v3604 = vpack.c.bf16 %v3454, %v3452
    %v3605 = vpack.c.bf16 %v3457, %v3455
    %v3606 = vpack.c.bf16 %v3458, %v3456
    %v3607 = vpack.c.bf16 %v3461, %v3459
    %v3608 = vpack.c.bf16 %v3462, %v3460
    %v3609 = vpack.c.bf16 %v3465, %v3463
    %v3610 = vpack.c.bf16 %v3466, %v3464
    %v3611 = vpack.c.bf16 %v3469, %v3467
    %v3612 = vpack.c.bf16 %v3470, %v3468
    %v3613 = vpack.c.bf16 %v3473, %v3471
    %v3614 = vpack.c.bf16 %v3474, %v3472
    %v3615 = vpack.c.bf16 %v3477, %v3475
    %v3616 = vpack.c.bf16 %v3478, %v3476
    %v3617 = vpack.c.bf16 %v3481, %v3479
    %v3618 = vpack.c.bf16 %v3482, %v3480
    %v3619 = vpack.c.bf16 %v3485, %v3483
    %v3620 = vpack.c.bf16 %v3486, %v3484
    %v3621 = vpack.c.bf16 %v3489, %v3487
    %v3622 = vpack.c.bf16 %v3490, %v3488
    %v3623 = vpack.c.bf16 %v3493, %v3491
    %v3624 = vpack.c.bf16 %v3494, %v3492
    %v3625 = vpack.c.bf16 %v3497, %v3495
    %v3626 = vpack.c.bf16 %v3498, %v3496
    %v3627 = vld [vmem:[%s5] sm:$0xf]
    %v3628 = vld [vmem:[%s5 + $0x4] sm:$0xf]
    %v3629 = vld [vmem:[%s5 + $0x8] sm:$0xf]
    %v3630 = vld [vmem:[%s5 + $0xc] sm:$0xf]
    %v3631 = vld [vmem:[%s5 + $0x10] sm:$0xf]
    %v3632 = vld [vmem:[%s5 + $0x14] sm:$0xf]
    %v3633 = vld [vmem:[%s5 + $0x18] sm:$0xf]
    %v3634 = vld [vmem:[%s5 + $0x1c] sm:$0xf]
    %v3635 = vld [vmem:[%s5 + $0x20] sm:$0xf]
    %v3636 = vld [vmem:[%s5 + $0x24] sm:$0xf]
    %v3637 = vld [vmem:[%s5 + $0x28] sm:$0xf]
    %v3638 = vld [vmem:[%s5 + $0x2c] sm:$0xf]
    %v3639 = vld [vmem:[%s5 + $0x30] sm:$0xf]
    %v3640 = vld [vmem:[%s5 + $0x34] sm:$0xf]
    %v3641 = vld [vmem:[%s5 + $0x38] sm:$0xf]
    %v3642 = vld [vmem:[%s5 + $0x3c] sm:$0xf]
    %v3643 = vld [vmem:[%s5 + $0x40] sm:$0xf]
    %v3644 = vld [vmem:[%s5 + $0x44] sm:$0xf]
    %v3645 = vld [vmem:[%s5 + $0x48] sm:$0xf]
    %v3646 = vld [vmem:[%s5 + $0x4c] sm:$0xf]
    %v3647 = vld [vmem:[%s5 + $0x50] sm:$0xf]
    %v3648 = vld [vmem:[%s5 + $0x54] sm:$0xf]
    %v3649 = vld [vmem:[%s5 + $0x58] sm:$0xf]
    %v3650 = vld [vmem:[%s5 + $0x5c] sm:$0xf]
    %v3651 = vld [vmem:[%s5 + $0x60] sm:$0xf]
    %v3652 = vld [vmem:[%s5 + $0x64] sm:$0xf]
    %v3653 = vld [vmem:[%s5 + $0x68] sm:$0xf]
    %v3654 = vld [vmem:[%s5 + $0x6c] sm:$0xf]
    %v3655 = vld [vmem:[%s5 + $0x70] sm:$0xf]
    %v3656 = vld [vmem:[%s5 + $0x74] sm:$0xf]
    %v3657 = vld [vmem:[%s5 + $0x78] sm:$0xf]
    %v3658 = vld [vmem:[%s5 + $0x7c] sm:$0xf]
    %v3659 = vld [vmem:[%s6] sm:$0x1]
    %v3661 = vperm.slane %v3659, 0
    %v3695 = vunpack.c.l.b16 %v3627
    %v3696 = vunpack.c.l.b16 %v3628
    %v3697 = vunpack.c.l.b16 %v3629
    %v3698 = vunpack.c.l.b16 %v3630
    %v3699 = vunpack.c.l.b16 %v3631
    %v3700 = vunpack.c.l.b16 %v3632
    %v3701 = vunpack.c.l.b16 %v3633
    %v3702 = vunpack.c.l.b16 %v3634
    %v3703 = vunpack.c.l.b16 %v3635
    %v3704 = vunpack.c.l.b16 %v3636
    %v3705 = vunpack.c.l.b16 %v3637
    %v3706 = vunpack.c.l.b16 %v3638
    %v3707 = vunpack.c.l.b16 %v3639
    %v3708 = vunpack.c.l.b16 %v3640
    %v3709 = vunpack.c.l.b16 %v3641
    %v3710 = vunpack.c.l.b16 %v3642
    %v3711 = vunpack.c.l.b16 %v3643
    %v3712 = vunpack.c.l.b16 %v3644
    %v3713 = vunpack.c.l.b16 %v3645
    %v3714 = vunpack.c.l.b16 %v3646
    %v3715 = vunpack.c.l.b16 %v3647
    %v3716 = vunpack.c.l.b16 %v3648
    %v3717 = vunpack.c.l.b16 %v3649
    %v3718 = vunpack.c.l.b16 %v3650
    %v3719 = vunpack.c.l.b16 %v3651
    %v3720 = vunpack.c.l.b16 %v3652
    %v3721 = vunpack.c.l.b16 %v3653
    %v3722 = vunpack.c.l.b16 %v3654
    %v3723 = vunpack.c.l.b16 %v3655
    %v3724 = vunpack.c.l.b16 %v3656
    %v3725 = vunpack.c.l.b16 %v3657
    %v3726 = vunpack.c.l.b16 %v3658
    %v3727 = vpack.c.b16 %v3696, %v3695
    %v3728 = vpack.c.b16 %v3698, %v3697
    %v3729 = vpack.c.b16 %v3700, %v3699
    %v3730 = vpack.c.b16 %v3702, %v3701
    %v3731 = vpack.c.b16 %v3704, %v3703
    %v3732 = vpack.c.b16 %v3706, %v3705
    %v3733 = vpack.c.b16 %v3708, %v3707
    %v3734 = vpack.c.b16 %v3710, %v3709
    %v3735 = vpack.c.b16 %v3712, %v3711
    %v3736 = vpack.c.b16 %v3714, %v3713
    %v3737 = vpack.c.b16 %v3716, %v3715
    %v3738 = vpack.c.b16 %v3718, %v3717
    %v3739 = vpack.c.b16 %v3720, %v3719
    %v3740 = vpack.c.b16 %v3722, %v3721
    %v3741 = vpack.c.b16 %v3724, %v3723
    %v3742 = vpack.c.b16 %v3726, %v3725
    %3759 = vmatpush.bf16.msra.mxu0 %v3734
    %3760 = vmatpush.bf16.msra.mxu0 %v3733
    %3761 = vmatpush.bf16.msra.mxu0 %v3732
    %3762 = vmatpush.bf16.msra.mxu0 %v3731
    %3763 = vmatpush.bf16.msra.mxu0 %v3730
    %3764 = vmatpush.bf16.msra.mxu0 %v3729
    %3765 = vmatpush.bf16.msra.mxu0 %v3728
    %3766 = vmatpush.bf16.msra.mxu0 %v3727
    %3767 = vmatmul.bf16.gmra.mxu0 %v3499
    %v3768 = vpop.f32.mrf.mxu0
    %v3769 = vadd.f32 %v3661, %v3768
    %v3770 = vpop.f32.mrf.mxu0
    %v3771 = vadd.f32 %v3661, %v3770
    %3772 = vmatmul.bf16.gmra.mxu0 %v3501
    %v3773 = vpop.f32.mrf.mxu0
    %v3774 = vadd.f32 %v3661, %v3773
    %v3775 = vpop.f32.mrf.mxu0
    %v3776 = vadd.f32 %v3661, %v3775
    %3777 = vmatmul.bf16.gmra.mxu0 %v3503
    %v3778 = vpop.f32.mrf.mxu0
    %v3779 = vadd.f32 %v3661, %v3778
    %v3780 = vpop.f32.mrf.mxu0
    %v3781 = vadd.f32 %v3661, %v3780
    %3782 = vmatmul.bf16.gmra.mxu0 %v3505
    %v3783 = vpop.f32.mrf.mxu0
    %v3784 = vadd.f32 %v3661, %v3783
    %v3785 = vpop.f32.mrf.mxu0
    %v3786 = vadd.f32 %v3661, %v3785
    %3787 = vmatmul.bf16.gmra.mxu0 %v3507
    %v3788 = vpop.f32.mrf.mxu0
    %v3789 = vadd.f32 %v3661, %v3788
    %v3790 = vpop.f32.mrf.mxu0
    %v3791 = vadd.f32 %v3661, %v3790
    %3792 = vmatmul.bf16.gmra.mxu0 %v3509
    %v3793 = vpop.f32.mrf.mxu0
    %v3794 = vadd.f32 %v3661, %v3793
    %v3795 = vpop.f32.mrf.mxu0
    %v3796 = vadd.f32 %v3661, %v3795
    %3797 = vmatmul.bf16.gmra.mxu0 %v3511
    %v3798 = vpop.f32.mrf.mxu0
    %v3799 = vadd.f32 %v3661, %v3798
    %v3800 = vpop.f32.mrf.mxu0
    %v3801 = vadd.f32 %v3661, %v3800
    %3802 = vmatmul.bf16.gmra.mxu0 %v3513
    %v3803 = vpop.f32.mrf.mxu0
    %v3804 = vadd.f32 %v3661, %v3803
    %v3805 = vpop.f32.mrf.mxu0
    %v3806 = vadd.f32 %v3661, %v3805
    %3807 = vmatmul.bf16.gmra.mxu0 %v3515
    %v3808 = vpop.f32.mrf.mxu0
    %v3809 = vadd.f32 %v3661, %v3808
    %v3810 = vpop.f32.mrf.mxu0
    %v3811 = vadd.f32 %v3661, %v3810
    %3812 = vmatmul.bf16.gmra.mxu0 %v3517
    %v3813 = vpop.f32.mrf.mxu0
    %v3814 = vadd.f32 %v3661, %v3813
    %v3815 = vpop.f32.mrf.mxu0
    %v3816 = vadd.f32 %v3661, %v3815
    %3817 = vmatmul.bf16.gmra.mxu0 %v3519
    %v3818 = vpop.f32.mrf.mxu0
    %v3819 = vadd.f32 %v3661, %v3818
    %v3820 = vpop.f32.mrf.mxu0
    %v3821 = vadd.f32 %v3661, %v3820
    %3822 = vmatmul.bf16.gmra.mxu0 %v3521
    %v3823 = vpop.f32.mrf.mxu0
    %v3824 = vadd.f32 %v3661, %v3823
    %v3825 = vpop.f32.mrf.mxu0
    %v3826 = vadd.f32 %v3661, %v3825
    %3827 = vmatmul.bf16.gmra.mxu0 %v3523
    %v3828 = vpop.f32.mrf.mxu0
    %v3829 = vadd.f32 %v3661, %v3828
    %v3830 = vpop.f32.mrf.mxu0
    %v3831 = vadd.f32 %v3661, %v3830
    %3832 = vmatmul.bf16.gmra.mxu0 %v3525
    %v3833 = vpop.f32.mrf.mxu0
    %v3834 = vadd.f32 %v3661, %v3833
    %v3835 = vpop.f32.mrf.mxu0
    %v3836 = vadd.f32 %v3661, %v3835
    %3837 = vmatmul.bf16.gmra.mxu0 %v3527
    %v3838 = vpop.f32.mrf.mxu0
    %v3839 = vadd.f32 %v3661, %v3838
    %v3840 = vpop.f32.mrf.mxu0
    %v3841 = vadd.f32 %v3661, %v3840
    %3842 = vmatmul.bf16.gmra.mxu0 %v3529
    %v3843 = vpop.f32.mrf.mxu0
    %v3844 = vadd.f32 %v3661, %v3843
    %v3845 = vpop.f32.mrf.mxu0
    %v3846 = vadd.f32 %v3661, %v3845
    %3847 = vmatmul.bf16.gmra.mxu0 %v3531
    %v3848 = vpop.f32.mrf.mxu0
    %v3849 = vadd.f32 %v3661, %v3848
    %v3850 = vpop.f32.mrf.mxu0
    %v3851 = vadd.f32 %v3661, %v3850
    %3852 = vmatmul.bf16.gmra.mxu0 %v3533
    %v3853 = vpop.f32.mrf.mxu0
    %v3854 = vadd.f32 %v3661, %v3853
    %v3855 = vpop.f32.mrf.mxu0
    %v3856 = vadd.f32 %v3661, %v3855
    %3857 = vmatmul.bf16.gmra.mxu0 %v3535
    %v3858 = vpop.f32.mrf.mxu0
    %v3859 = vadd.f32 %v3661, %v3858
    %v3860 = vpop.f32.mrf.mxu0
    %v3861 = vadd.f32 %v3661, %v3860
    %3862 = vmatmul.bf16.gmra.mxu0 %v3537
    %v3863 = vpop.f32.mrf.mxu0
    %v3864 = vadd.f32 %v3661, %v3863
    %v3865 = vpop.f32.mrf.mxu0
    %v3866 = vadd.f32 %v3661, %v3865
    %3867 = vmatmul.bf16.gmra.mxu0 %v3539
    %v3868 = vpop.f32.mrf.mxu0
    %v3869 = vadd.f32 %v3661, %v3868
    %v3870 = vpop.f32.mrf.mxu0
    %v3871 = vadd.f32 %v3661, %v3870
    %3872 = vmatmul.bf16.gmra.mxu0 %v3541
    %v3873 = vpop.f32.mrf.mxu0
    %v3874 = vadd.f32 %v3661, %v3873
    %v3875 = vpop.f32.mrf.mxu0
    %v3876 = vadd.f32 %v3661, %v3875
    %3877 = vmatmul.bf16.gmra.mxu0 %v3543
    %v3878 = vpop.f32.mrf.mxu0
    %v3879 = vadd.f32 %v3661, %v3878
    %v3880 = vpop.f32.mrf.mxu0
    %v3881 = vadd.f32 %v3661, %v3880
    %3882 = vmatmul.bf16.gmra.mxu0 %v3545
    %v3883 = vpop.f32.mrf.mxu0
    %v3884 = vadd.f32 %v3661, %v3883
    %v3885 = vpop.f32.mrf.mxu0
    %v3886 = vadd.f32 %v3661, %v3885
    %3887 = vmatmul.bf16.gmra.mxu0 %v3547
    %v3888 = vpop.f32.mrf.mxu0
    %v3889 = vadd.f32 %v3661, %v3888
    %v3890 = vpop.f32.mrf.mxu0
    %v3891 = vadd.f32 %v3661, %v3890
    %3892 = vmatmul.bf16.gmra.mxu0 %v3549
    %v3893 = vpop.f32.mrf.mxu0
    %v3894 = vadd.f32 %v3661, %v3893
    %v3895 = vpop.f32.mrf.mxu0
    %v3896 = vadd.f32 %v3661, %v3895
    %3897 = vmatmul.bf16.gmra.mxu0 %v3551
    %v3898 = vpop.f32.mrf.mxu0
    %v3899 = vadd.f32 %v3661, %v3898
    %v3900 = vpop.f32.mrf.mxu0
    %v3901 = vadd.f32 %v3661, %v3900
    %3902 = vmatmul.bf16.gmra.mxu0 %v3553
    %v3903 = vpop.f32.mrf.mxu0
    %v3904 = vadd.f32 %v3661, %v3903
    %v3905 = vpop.f32.mrf.mxu0
    %v3906 = vadd.f32 %v3661, %v3905
    %3907 = vmatmul.bf16.gmra.mxu0 %v3555
    %v3908 = vpop.f32.mrf.mxu0
    %v3909 = vadd.f32 %v3661, %v3908
    %v3910 = vpop.f32.mrf.mxu0
    %v3911 = vadd.f32 %v3661, %v3910
    %3912 = vmatmul.bf16.gmra.mxu0 %v3557
    %v3913 = vpop.f32.mrf.mxu0
    %v3914 = vadd.f32 %v3661, %v3913
    %v3915 = vpop.f32.mrf.mxu0
    %v3916 = vadd.f32 %v3661, %v3915
    %3917 = vmatmul.bf16.gmra.mxu0 %v3559
    %v3918 = vpop.f32.mrf.mxu0
    %v3919 = vadd.f32 %v3661, %v3918
    %v3920 = vpop.f32.mrf.mxu0
    %v3921 = vadd.f32 %v3661, %v3920
    %3922 = vmatmul.bf16.gmra.mxu0 %v3561
    %v3923 = vpop.f32.mrf.mxu0
    %v3924 = vadd.f32 %v3661, %v3923
    %v3925 = vpop.f32.mrf.mxu0
    %v3926 = vadd.f32 %v3661, %v3925
    %3927 = vmatmul.bf16.gmra.mxu0 %v3563
    %v3928 = vpop.f32.mrf.mxu0
    %v3929 = vadd.f32 %v3661, %v3928
    %v3930 = vpop.f32.mrf.mxu0
    %v3931 = vadd.f32 %v3661, %v3930
    %3932 = vmatmul.bf16.gmra.mxu0 %v3565
    %v3933 = vpop.f32.mrf.mxu0
    %v3934 = vadd.f32 %v3661, %v3933
    %v3935 = vpop.f32.mrf.mxu0
    %v3936 = vadd.f32 %v3661, %v3935
    %3937 = vmatmul.bf16.gmra.mxu0 %v3567
    %v3938 = vpop.f32.mrf.mxu0
    %v3939 = vadd.f32 %v3661, %v3938
    %v3940 = vpop.f32.mrf.mxu0
    %v3941 = vadd.f32 %v3661, %v3940
    %3942 = vmatmul.bf16.gmra.mxu0 %v3569
    %v3943 = vpop.f32.mrf.mxu0
    %v3944 = vadd.f32 %v3661, %v3943
    %v3945 = vpop.f32.mrf.mxu0
    %v3946 = vadd.f32 %v3661, %v3945
    %3947 = vmatmul.bf16.gmra.mxu0 %v3571
    %v3948 = vpop.f32.mrf.mxu0
    %v3949 = vadd.f32 %v3661, %v3948
    %v3950 = vpop.f32.mrf.mxu0
    %v3951 = vadd.f32 %v3661, %v3950
    %3952 = vmatmul.bf16.gmra.mxu0 %v3573
    %v3953 = vpop.f32.mrf.mxu0
    %v3954 = vadd.f32 %v3661, %v3953
    %v3955 = vpop.f32.mrf.mxu0
    %v3956 = vadd.f32 %v3661, %v3955
    %3957 = vmatmul.bf16.gmra.mxu0 %v3575
    %v3958 = vpop.f32.mrf.mxu0
    %v3959 = vadd.f32 %v3661, %v3958
    %v3960 = vpop.f32.mrf.mxu0
    %v3961 = vadd.f32 %v3661, %v3960
    %3962 = vmatmul.bf16.gmra.mxu0 %v3577
    %v3963 = vpop.f32.mrf.mxu0
    %v3964 = vadd.f32 %v3661, %v3963
    %v3965 = vpop.f32.mrf.mxu0
    %v3966 = vadd.f32 %v3661, %v3965
    %3967 = vmatmul.bf16.gmra.mxu0 %v3579
    %v3968 = vpop.f32.mrf.mxu0
    %v3969 = vadd.f32 %v3661, %v3968
    %v3970 = vpop.f32.mrf.mxu0
    %v3971 = vadd.f32 %v3661, %v3970
    %3972 = vmatmul.bf16.gmra.mxu0 %v3581
    %v3973 = vpop.f32.mrf.mxu0
    %v3974 = vadd.f32 %v3661, %v3973
    %v3975 = vpop.f32.mrf.mxu0
    %v3976 = vadd.f32 %v3661, %v3975
    %3977 = vmatmul.bf16.gmra.mxu0 %v3583
    %v3978 = vpop.f32.mrf.mxu0
    %v3979 = vadd.f32 %v3661, %v3978
    %v3980 = vpop.f32.mrf.mxu0
    %v3981 = vadd.f32 %v3661, %v3980
    %3982 = vmatmul.bf16.gmra.mxu0 %v3585
    %v3983 = vpop.f32.mrf.mxu0
    %v3984 = vadd.f32 %v3661, %v3983
    %v3985 = vpop.f32.mrf.mxu0
    %v3986 = vadd.f32 %v3661, %v3985
    %3987 = vmatmul.bf16.gmra.mxu0 %v3587
    %v3988 = vpop.f32.mrf.mxu0
    %v3989 = vadd.f32 %v3661, %v3988
    %v3990 = vpop.f32.mrf.mxu0
    %v3991 = vadd.f32 %v3661, %v3990
    %3992 = vmatmul.bf16.gmra.mxu0 %v3589
    %v3993 = vpop.f32.mrf.mxu0
    %v3994 = vadd.f32 %v3661, %v3993
    %v3995 = vpop.f32.mrf.mxu0
    %v3996 = vadd.f32 %v3661, %v3995
    %3997 = vmatmul.bf16.gmra.mxu0 %v3591
    %v3998 = vpop.f32.mrf.mxu0
    %v3999 = vadd.f32 %v3661, %v3998
    %v4000 = vpop.f32.mrf.mxu0
    %v4001 = vadd.f32 %v3661, %v4000
    %4002 = vmatmul.bf16.gmra.mxu0 %v3593
    %v4003 = vpop.f32.mrf.mxu0
    %v4004 = vadd.f32 %v3661, %v4003
    %v4005 = vpop.f32.mrf.mxu0
    %v4006 = vadd.f32 %v3661, %v4005
    %4007 = vmatmul.bf16.gmra.mxu0 %v3595
    %v4008 = vpop.f32.mrf.mxu0
    %v4009 = vadd.f32 %v3661, %v4008
    %v4010 = vpop.f32.mrf.mxu0
    %v4011 = vadd.f32 %v3661, %v4010
    %4012 = vmatmul.bf16.gmra.mxu0 %v3597
    %v4013 = vpop.f32.mrf.mxu0
    %v4014 = vadd.f32 %v3661, %v4013
    %v4015 = vpop.f32.mrf.mxu0
    %v4016 = vadd.f32 %v3661, %v4015
    %4017 = vmatmul.bf16.gmra.mxu0 %v3599
    %v4018 = vpop.f32.mrf.mxu0
    %v4019 = vadd.f32 %v3661, %v4018
    %v4020 = vpop.f32.mrf.mxu0
    %v4021 = vadd.f32 %v3661, %v4020
    %4022 = vmatmul.bf16.gmra.mxu0 %v3601
    %v4023 = vpop.f32.mrf.mxu0
    %v4024 = vadd.f32 %v3661, %v4023
    %v4025 = vpop.f32.mrf.mxu0
    %v4026 = vadd.f32 %v3661, %v4025
    %4027 = vmatmul.bf16.gmra.mxu0 %v3603
    %v4028 = vpop.f32.mrf.mxu0
    %v4029 = vadd.f32 %v3661, %v4028
    %v4030 = vpop.f32.mrf.mxu0
    %v4031 = vadd.f32 %v3661, %v4030
    %4032 = vmatmul.bf16.gmra.mxu0 %v3605
    %v4033 = vpop.f32.mrf.mxu0
    %v4034 = vadd.f32 %v3661, %v4033
    %v4035 = vpop.f32.mrf.mxu0
    %v4036 = vadd.f32 %v3661, %v4035
    %4037 = vmatmul.bf16.gmra.mxu0 %v3607
    %v4038 = vpop.f32.mrf.mxu0
    %v4039 = vadd.f32 %v3661, %v4038
    %v4040 = vpop.f32.mrf.mxu0
    %v4041 = vadd.f32 %v3661, %v4040
    %4042 = vmatmul.bf16.gmra.mxu0 %v3609
    %v4043 = vpop.f32.mrf.mxu0
    %v4044 = vadd.f32 %v3661, %v4043
    %v4045 = vpop.f32.mrf.mxu0
    %v4046 = vadd.f32 %v3661, %v4045
    %4047 = vmatmul.bf16.gmra.mxu0 %v3611
    %v4048 = vpop.f32.mrf.mxu0
    %v4049 = vadd.f32 %v3661, %v4048
    %v4050 = vpop.f32.mrf.mxu0
    %v4051 = vadd.f32 %v3661, %v4050
    %4052 = vmatmul.bf16.gmra.mxu0 %v3613
    %v4053 = vpop.f32.mrf.mxu0
    %v4054 = vadd.f32 %v3661, %v4053
    %v4055 = vpop.f32.mrf.mxu0
    %v4056 = vadd.f32 %v3661, %v4055
    %4057 = vmatmul.bf16.gmra.mxu0 %v3615
    %v4058 = vpop.f32.mrf.mxu0
    %v4059 = vadd.f32 %v3661, %v4058
    %v4060 = vpop.f32.mrf.mxu0
    %v4061 = vadd.f32 %v3661, %v4060
    %4062 = vmatmul.bf16.gmra.mxu0 %v3617
    %v4063 = vpop.f32.mrf.mxu0
    %v4064 = vadd.f32 %v3661, %v4063
    %v4065 = vpop.f32.mrf.mxu0
    %v4066 = vadd.f32 %v3661, %v4065
    %4067 = vmatmul.bf16.gmra.mxu0 %v3619
    %v4068 = vpop.f32.mrf.mxu0
    %v4069 = vadd.f32 %v3661, %v4068
    %v4070 = vpop.f32.mrf.mxu0
    %v4071 = vadd.f32 %v3661, %v4070
    %4072 = vmatmul.bf16.gmra.mxu0 %v3621
    %v4073 = vpop.f32.mrf.mxu0
    %v4074 = vadd.f32 %v3661, %v4073
    %v4075 = vpop.f32.mrf.mxu0
    %v4076 = vadd.f32 %v3661, %v4075
    %4077 = vmatmul.bf16.gmra.mxu0 %v3623
    %v4078 = vpop.f32.mrf.mxu0
    %v4079 = vadd.f32 %v3661, %v4078
    %v4080 = vpop.f32.mrf.mxu0
    %v4081 = vadd.f32 %v3661, %v4080
    %4082 = vmatmul.bf16.gmra.mxu0 %v3625
    %v4083 = vpop.f32.mrf.mxu0
    %v4084 = vadd.f32 %v3661, %v4083
    %v4085 = vpop.f32.mrf.mxu0
    %v4086 = vadd.f32 %v3661, %v4085
    %4087 = vdwg.mxu0
    %4088 = vmatpush.bf16.msra.mxu0 %v3742
    %4089 = vmatpush.bf16.msra.mxu0 %v3741
    %4090 = vmatpush.bf16.msra.mxu0 %v3740
    %4091 = vmatpush.bf16.msra.mxu0 %v3739
    %4092 = vmatpush.bf16.msra.mxu0 %v3738
    %4093 = vmatpush.bf16.msra.mxu0 %v3737
    %4094 = vmatpush.bf16.msra.mxu0 %v3736
    %4095 = vmatpush.bf16.msra.mxu0 %v3735
    %4096 = vmatmul.bf16.gmra.mxu0 %v3500
    %v4097 = vpop.f32.mrf.mxu0
    %v4098 = vadd.f32 %v3769, %v4097
    %v4099 = vpop.f32.mrf.mxu0
    %v4100 = vadd.f32 %v3771, %v4099
    %4101 = vmatmul.bf16.gmra.mxu0 %v3502
    %v4102 = vpop.f32.mrf.mxu0
    %v4103 = vadd.f32 %v3774, %v4102
    %v4104 = vpop.f32.mrf.mxu0
    %v4105 = vadd.f32 %v3776, %v4104
    %4106 = vmatmul.bf16.gmra.mxu0 %v3504
    %v4107 = vpop.f32.mrf.mxu0
    %v4108 = vadd.f32 %v3779, %v4107
    %v4109 = vpop.f32.mrf.mxu0
    %v4110 = vadd.f32 %v3781, %v4109
    %4111 = vmatmul.bf16.gmra.mxu0 %v3506
    %v4112 = vpop.f32.mrf.mxu0
    %v4113 = vadd.f32 %v3784, %v4112
    %v4114 = vpop.f32.mrf.mxu0
    %v4115 = vadd.f32 %v3786, %v4114
    %4116 = vmatmul.bf16.gmra.mxu0 %v3508
    %v4117 = vpop.f32.mrf.mxu0
    %v4118 = vadd.f32 %v3789, %v4117
    %v4119 = vpop.f32.mrf.mxu0
    %v4120 = vadd.f32 %v3791, %v4119
    %4121 = vmatmul.bf16.gmra.mxu0 %v3510
    %v4122 = vpop.f32.mrf.mxu0
    %v4123 = vadd.f32 %v3794, %v4122
    %v4124 = vpop.f32.mrf.mxu0
    %v4125 = vadd.f32 %v3796, %v4124
    %4126 = vmatmul.bf16.gmra.mxu0 %v3512
    %v4127 = vpop.f32.mrf.mxu0
    %v4128 = vadd.f32 %v3799, %v4127
    %v4129 = vpop.f32.mrf.mxu0
    %v4130 = vadd.f32 %v3801, %v4129
    %4131 = vmatmul.bf16.gmra.mxu0 %v3514
    %v4132 = vpop.f32.mrf.mxu0
    %v4133 = vadd.f32 %v3804, %v4132
    %v4134 = vpop.f32.mrf.mxu0
    %v4135 = vadd.f32 %v3806, %v4134
    %4136 = vmatmul.bf16.gmra.mxu0 %v3516
    %v4137 = vpop.f32.mrf.mxu0
    %v4138 = vadd.f32 %v3809, %v4137
    %v4139 = vpop.f32.mrf.mxu0
    %v4140 = vadd.f32 %v3811, %v4139
    %4141 = vmatmul.bf16.gmra.mxu0 %v3518
    %v4142 = vpop.f32.mrf.mxu0
    %v4143 = vadd.f32 %v3814, %v4142
    %v4144 = vpop.f32.mrf.mxu0
    %v4145 = vadd.f32 %v3816, %v4144
    %4146 = vmatmul.bf16.gmra.mxu0 %v3520
    %v4147 = vpop.f32.mrf.mxu0
    %v4148 = vadd.f32 %v3819, %v4147
    %v4149 = vpop.f32.mrf.mxu0
    %v4150 = vadd.f32 %v3821, %v4149
    %4151 = vmatmul.bf16.gmra.mxu0 %v3522
    %v4152 = vpop.f32.mrf.mxu0
    %v4153 = vadd.f32 %v3824, %v4152
    %v4154 = vpop.f32.mrf.mxu0
    %v4155 = vadd.f32 %v3826, %v4154
    %4156 = vmatmul.bf16.gmra.mxu0 %v3524
    %v4157 = vpop.f32.mrf.mxu0
    %v4158 = vadd.f32 %v3829, %v4157
    %v4159 = vpop.f32.mrf.mxu0
    %v4160 = vadd.f32 %v3831, %v4159
    %4161 = vmatmul.bf16.gmra.mxu0 %v3526
    %v4162 = vpop.f32.mrf.mxu0
    %v4163 = vadd.f32 %v3834, %v4162
    %v4164 = vpop.f32.mrf.mxu0
    %v4165 = vadd.f32 %v3836, %v4164
    %4166 = vmatmul.bf16.gmra.mxu0 %v3528
    %v4167 = vpop.f32.mrf.mxu0
    %v4168 = vadd.f32 %v3839, %v4167
    %v4169 = vpop.f32.mrf.mxu0
    %v4170 = vadd.f32 %v3841, %v4169
    %4171 = vmatmul.bf16.gmra.mxu0 %v3530
    %v4172 = vpop.f32.mrf.mxu0
    %v4173 = vadd.f32 %v3844, %v4172
    %v4174 = vpop.f32.mrf.mxu0
    %v4175 = vadd.f32 %v3846, %v4174
    %4176 = vmatmul.bf16.gmra.mxu0 %v3532
    %v4177 = vpop.f32.mrf.mxu0
    %v4178 = vadd.f32 %v3849, %v4177
    %v4179 = vpop.f32.mrf.mxu0
    %v4180 = vadd.f32 %v3851, %v4179
    %4181 = vmatmul.bf16.gmra.mxu0 %v3534
    %v4182 = vpop.f32.mrf.mxu0
    %v4183 = vadd.f32 %v3854, %v4182
    %v4184 = vpop.f32.mrf.mxu0
    %v4185 = vadd.f32 %v3856, %v4184
    %4186 = vmatmul.bf16.gmra.mxu0 %v3536
    %v4187 = vpop.f32.mrf.mxu0
    %v4188 = vadd.f32 %v3859, %v4187
    %v4189 = vpop.f32.mrf.mxu0
    %v4190 = vadd.f32 %v3861, %v4189
    %4191 = vmatmul.bf16.gmra.mxu0 %v3538
    %v4192 = vpop.f32.mrf.mxu0
    %v4193 = vadd.f32 %v3864, %v4192
    %v4194 = vpop.f32.mrf.mxu0
    %v4195 = vadd.f32 %v3866, %v4194
    %4196 = vmatmul.bf16.gmra.mxu0 %v3540
    %v4197 = vpop.f32.mrf.mxu0
    %v4198 = vadd.f32 %v3869, %v4197
    %v4199 = vpop.f32.mrf.mxu0
    %v4200 = vadd.f32 %v3871, %v4199
    %4201 = vmatmul.bf16.gmra.mxu0 %v3542
    %v4202 = vpop.f32.mrf.mxu0
    %v4203 = vadd.f32 %v3874, %v4202
    %v4204 = vpop.f32.mrf.mxu0
    %v4205 = vadd.f32 %v3876, %v4204
    %4206 = vmatmul.bf16.gmra.mxu0 %v3544
    %v4207 = vpop.f32.mrf.mxu0
    %v4208 = vadd.f32 %v3879, %v4207
    %v4209 = vpop.f32.mrf.mxu0
    %v4210 = vadd.f32 %v3881, %v4209
    %4211 = vmatmul.bf16.gmra.mxu0 %v3546
    %v4212 = vpop.f32.mrf.mxu0
    %v4213 = vadd.f32 %v3884, %v4212
    %v4214 = vpop.f32.mrf.mxu0
    %v4215 = vadd.f32 %v3886, %v4214
    %4216 = vmatmul.bf16.gmra.mxu0 %v3548
    %v4217 = vpop.f32.mrf.mxu0
    %v4218 = vadd.f32 %v3889, %v4217
    %v4219 = vpop.f32.mrf.mxu0
    %v4220 = vadd.f32 %v3891, %v4219
    %4221 = vmatmul.bf16.gmra.mxu0 %v3550
    %v4222 = vpop.f32.mrf.mxu0
    %v4223 = vadd.f32 %v3894, %v4222
    %v4224 = vpop.f32.mrf.mxu0
    %v4225 = vadd.f32 %v3896, %v4224
    %4226 = vmatmul.bf16.gmra.mxu0 %v3552
    %v4227 = vpop.f32.mrf.mxu0
    %v4228 = vadd.f32 %v3899, %v4227
    %v4229 = vpop.f32.mrf.mxu0
    %v4230 = vadd.f32 %v3901, %v4229
    %4231 = vmatmul.bf16.gmra.mxu0 %v3554
    %v4232 = vpop.f32.mrf.mxu0
    %v4233 = vadd.f32 %v3904, %v4232
    %v4234 = vpop.f32.mrf.mxu0
    %v4235 = vadd.f32 %v3906, %v4234
    %4236 = vmatmul.bf16.gmra.mxu0 %v3556
    %v4237 = vpop.f32.mrf.mxu0
    %v4238 = vadd.f32 %v3909, %v4237
    %v4239 = vpop.f32.mrf.mxu0
    %v4240 = vadd.f32 %v3911, %v4239
    %4241 = vmatmul.bf16.gmra.mxu0 %v3558
    %v4242 = vpop.f32.mrf.mxu0
    %v4243 = vadd.f32 %v3914, %v4242
    %v4244 = vpop.f32.mrf.mxu0
    %v4245 = vadd.f32 %v3916, %v4244
    %4246 = vmatmul.bf16.gmra.mxu0 %v3560
    %v4247 = vpop.f32.mrf.mxu0
    %v4248 = vadd.f32 %v3919, %v4247
    %v4249 = vpop.f32.mrf.mxu0
    %v4250 = vadd.f32 %v3921, %v4249
    %4251 = vmatmul.bf16.gmra.mxu0 %v3562
    %v4252 = vpop.f32.mrf.mxu0
    %v4253 = vadd.f32 %v3924, %v4252
    %v4254 = vpop.f32.mrf.mxu0
    %v4255 = vadd.f32 %v3926, %v4254
    %4256 = vmatmul.bf16.gmra.mxu0 %v3564
    %v4257 = vpop.f32.mrf.mxu0
    %v4258 = vadd.f32 %v3929, %v4257
    %v4259 = vpop.f32.mrf.mxu0
    %v4260 = vadd.f32 %v3931, %v4259
    %4261 = vmatmul.bf16.gmra.mxu0 %v3566
    %v4262 = vpop.f32.mrf.mxu0
    %v4263 = vadd.f32 %v3934, %v4262
    %v4264 = vpop.f32.mrf.mxu0
    %v4265 = vadd.f32 %v3936, %v4264
    %4266 = vmatmul.bf16.gmra.mxu0 %v3568
    %v4267 = vpop.f32.mrf.mxu0
    %v4268 = vadd.f32 %v3939, %v4267
    %v4269 = vpop.f32.mrf.mxu0
    %v4270 = vadd.f32 %v3941, %v4269
    %4271 = vmatmul.bf16.gmra.mxu0 %v3570
    %v4272 = vpop.f32.mrf.mxu0
    %v4273 = vadd.f32 %v3944, %v4272
    %v4274 = vpop.f32.mrf.mxu0
    %v4275 = vadd.f32 %v3946, %v4274
    %4276 = vmatmul.bf16.gmra.mxu0 %v3572
    %v4277 = vpop.f32.mrf.mxu0
    %v4278 = vadd.f32 %v3949, %v4277
    %v4279 = vpop.f32.mrf.mxu0
    %v4280 = vadd.f32 %v3951, %v4279
    %4281 = vmatmul.bf16.gmra.mxu0 %v3574
    %v4282 = vpop.f32.mrf.mxu0
    %v4283 = vadd.f32 %v3954, %v4282
    %v4284 = vpop.f32.mrf.mxu0
    %v4285 = vadd.f32 %v3956, %v4284
    %4286 = vmatmul.bf16.gmra.mxu0 %v3576
    %v4287 = vpop.f32.mrf.mxu0
    %v4288 = vadd.f32 %v3959, %v4287
    %v4289 = vpop.f32.mrf.mxu0
    %v4290 = vadd.f32 %v3961, %v4289
    %4291 = vmatmul.bf16.gmra.mxu0 %v3578
    %v4292 = vpop.f32.mrf.mxu0
    %v4293 = vadd.f32 %v3964, %v4292
    %v4294 = vpop.f32.mrf.mxu0
    %v4295 = vadd.f32 %v3966, %v4294
    %4296 = vmatmul.bf16.gmra.mxu0 %v3580
    %v4297 = vpop.f32.mrf.mxu0
    %v4298 = vadd.f32 %v3969, %v4297
    %v4299 = vpop.f32.mrf.mxu0
    %v4300 = vadd.f32 %v3971, %v4299
    %4301 = vmatmul.bf16.gmra.mxu0 %v3582
    %v4302 = vpop.f32.mrf.mxu0
    %v4303 = vadd.f32 %v3974, %v4302
    %v4304 = vpop.f32.mrf.mxu0
    %v4305 = vadd.f32 %v3976, %v4304
    %4306 = vmatmul.bf16.gmra.mxu0 %v3584
    %v4307 = vpop.f32.mrf.mxu0
    %v4308 = vadd.f32 %v3979, %v4307
    %v4309 = vpop.f32.mrf.mxu0
    %v4310 = vadd.f32 %v3981, %v4309
    %4311 = vmatmul.bf16.gmra.mxu0 %v3586
    %v4312 = vpop.f32.mrf.mxu0
    %v4313 = vadd.f32 %v3984, %v4312
    %v4314 = vpop.f32.mrf.mxu0
    %v4315 = vadd.f32 %v3986, %v4314
    %4316 = vmatmul.bf16.gmra.mxu0 %v3588
    %v4317 = vpop.f32.mrf.mxu0
    %v4318 = vadd.f32 %v3989, %v4317
    %v4319 = vpop.f32.mrf.mxu0
    %v4320 = vadd.f32 %v3991, %v4319
    %4321 = vmatmul.bf16.gmra.mxu0 %v3590
    %v4322 = vpop.f32.mrf.mxu0
    %v4323 = vadd.f32 %v3994, %v4322
    %v4324 = vpop.f32.mrf.mxu0
    %v4325 = vadd.f32 %v3996, %v4324
    %4326 = vmatmul.bf16.gmra.mxu0 %v3592
    %v4327 = vpop.f32.mrf.mxu0
    %v4328 = vadd.f32 %v3999, %v4327
    %v4329 = vpop.f32.mrf.mxu0
    %v4330 = vadd.f32 %v4001, %v4329
    %4331 = vmatmul.bf16.gmra.mxu0 %v3594
    %v4332 = vpop.f32.mrf.mxu0
    %v4333 = vadd.f32 %v4004, %v4332
    %v4334 = vpop.f32.mrf.mxu0
    %v4335 = vadd.f32 %v4006, %v4334
    %4336 = vmatmul.bf16.gmra.mxu0 %v3596
    %v4337 = vpop.f32.mrf.mxu0
    %v4338 = vadd.f32 %v4009, %v4337
    %v4339 = vpop.f32.mrf.mxu0
    %v4340 = vadd.f32 %v4011, %v4339
    %4341 = vmatmul.bf16.gmra.mxu0 %v3598
    %v4342 = vpop.f32.mrf.mxu0
    %v4343 = vadd.f32 %v4014, %v4342
    %v4344 = vpop.f32.mrf.mxu0
    %v4345 = vadd.f32 %v4016, %v4344
    %4346 = vmatmul.bf16.gmra.mxu0 %v3600
    %v4347 = vpop.f32.mrf.mxu0
    %v4348 = vadd.f32 %v4019, %v4347
    %v4349 = vpop.f32.mrf.mxu0
    %v4350 = vadd.f32 %v4021, %v4349
    %4351 = vmatmul.bf16.gmra.mxu0 %v3602
    %v4352 = vpop.f32.mrf.mxu0
    %v4353 = vadd.f32 %v4024, %v4352
    %v4354 = vpop.f32.mrf.mxu0
    %v4355 = vadd.f32 %v4026, %v4354
    %4356 = vmatmul.bf16.gmra.mxu0 %v3604
    %v4357 = vpop.f32.mrf.mxu0
    %v4358 = vadd.f32 %v4029, %v4357
    %v4359 = vpop.f32.mrf.mxu0
    %v4360 = vadd.f32 %v4031, %v4359
    %4361 = vmatmul.bf16.gmra.mxu0 %v3606
    %v4362 = vpop.f32.mrf.mxu0
    %v4363 = vadd.f32 %v4034, %v4362
    %v4364 = vpop.f32.mrf.mxu0
    %v4365 = vadd.f32 %v4036, %v4364
    %4366 = vmatmul.bf16.gmra.mxu0 %v3608
    %v4367 = vpop.f32.mrf.mxu0
    %v4368 = vadd.f32 %v4039, %v4367
    %v4369 = vpop.f32.mrf.mxu0
    %v4370 = vadd.f32 %v4041, %v4369
    %4371 = vmatmul.bf16.gmra.mxu0 %v3610
    %v4372 = vpop.f32.mrf.mxu0
    %v4373 = vadd.f32 %v4044, %v4372
    %v4374 = vpop.f32.mrf.mxu0
    %v4375 = vadd.f32 %v4046, %v4374
    %4376 = vmatmul.bf16.gmra.mxu0 %v3612
    %v4377 = vpop.f32.mrf.mxu0
    %v4378 = vadd.f32 %v4049, %v4377
    %v4379 = vpop.f32.mrf.mxu0
    %v4380 = vadd.f32 %v4051, %v4379
    %4381 = vmatmul.bf16.gmra.mxu0 %v3614
    %v4382 = vpop.f32.mrf.mxu0
    %v4383 = vadd.f32 %v4054, %v4382
    %v4384 = vpop.f32.mrf.mxu0
    %v4385 = vadd.f32 %v4056, %v4384
    %4386 = vmatmul.bf16.gmra.mxu0 %v3616
    %v4387 = vpop.f32.mrf.mxu0
    %v4388 = vadd.f32 %v4059, %v4387
    %v4389 = vpop.f32.mrf.mxu0
    %v4390 = vadd.f32 %v4061, %v4389
    %4391 = vmatmul.bf16.gmra.mxu0 %v3618
    %v4392 = vpop.f32.mrf.mxu0
    %v4393 = vadd.f32 %v4064, %v4392
    %v4394 = vpop.f32.mrf.mxu0
    %v4395 = vadd.f32 %v4066, %v4394
    %4396 = vmatmul.bf16.gmra.mxu0 %v3620
    %v4397 = vpop.f32.mrf.mxu0
    %v4398 = vadd.f32 %v4069, %v4397
    %v4399 = vpop.f32.mrf.mxu0
    %v4400 = vadd.f32 %v4071, %v4399
    %4401 = vmatmul.bf16.gmra.mxu0 %v3622
    %v4402 = vpop.f32.mrf.mxu0
    %v4403 = vadd.f32 %v4074, %v4402
    %v4404 = vpop.f32.mrf.mxu0
    %v4405 = vadd.f32 %v4076, %v4404
    %4406 = vmatmul.bf16.gmra.mxu0 %v3624
    %v4407 = vpop.f32.mrf.mxu0
    %v4408 = vadd.f32 %v4079, %v4407
    %v4409 = vpop.f32.mrf.mxu0
    %v4410 = vadd.f32 %v4081, %v4409
    %4411 = vmatmul.bf16.gmra.mxu0 %v3626
    %v4412 = vpop.f32.mrf.mxu0
    %v4413 = vadd.f32 %v4084, %v4412
    %v4414 = vpop.f32.mrf.mxu0
    %v4415 = vadd.f32 %v4086, %v4414
    %4416 = vdwg.mxu0
    %v4417 = vpack.c.bf16 %v4098, %v4098
    %v4418 = vpack.c.bf16 %v4100, %v4100
    %v4419 = vpack.c.bf16 %v4103, %v4103
    %v4420 = vpack.c.bf16 %v4105, %v4105
    %v4421 = vpack.c.bf16 %v4108, %v4108
    %v4422 = vpack.c.bf16 %v4110, %v4110
    %v4423 = vpack.c.bf16 %v4113, %v4113
    %v4424 = vpack.c.bf16 %v4115, %v4115
    %v4425 = vpack.c.bf16 %v4118, %v4118
    %v4426 = vpack.c.bf16 %v4120, %v4120
    %v4427 = vpack.c.bf16 %v4123, %v4123
    %v4428 = vpack.c.bf16 %v4125, %v4125
    %v4429 = vpack.c.bf16 %v4128, %v4128
    %v4430 = vpack.c.bf16 %v4130, %v4130
    %v4431 = vpack.c.bf16 %v4133, %v4133
    %v4432 = vpack.c.bf16 %v4135, %v4135
    %v4433 = vpack.c.bf16 %v4138, %v4138
    %v4434 = vpack.c.bf16 %v4140, %v4140
    %v4435 = vpack.c.bf16 %v4143, %v4143
    %v4436 = vpack.c.bf16 %v4145, %v4145
    %v4437 = vpack.c.bf16 %v4148, %v4148
    %v4438 = vpack.c.bf16 %v4150, %v4150
    %v4439 = vpack.c.bf16 %v4153, %v4153
    %v4440 = vpack.c.bf16 %v4155, %v4155
    %v4441 = vpack.c.bf16 %v4158, %v4158
    %v4442 = vpack.c.bf16 %v4160, %v4160
    %v4443 = vpack.c.bf16 %v4163, %v4163
    %v4444 = vpack.c.bf16 %v4165, %v4165
    %v4445 = vpack.c.bf16 %v4168, %v4168
    %v4446 = vpack.c.bf16 %v4170, %v4170
    %v4447 = vpack.c.bf16 %v4173, %v4173
    %v4448 = vpack.c.bf16 %v4175, %v4175
    %v4449 = vpack.c.bf16 %v4178, %v4178
    %v4450 = vpack.c.bf16 %v4180, %v4180
    %v4451 = vpack.c.bf16 %v4183, %v4183
    %v4452 = vpack.c.bf16 %v4185, %v4185
    %v4453 = vpack.c.bf16 %v4188, %v4188
    %v4454 = vpack.c.bf16 %v4190, %v4190
    %v4455 = vpack.c.bf16 %v4193, %v4193
    %v4456 = vpack.c.bf16 %v4195, %v4195
    %v4457 = vpack.c.bf16 %v4198, %v4198
    %v4458 = vpack.c.bf16 %v4200, %v4200
    %v4459 = vpack.c.bf16 %v4203, %v4203
    %v4460 = vpack.c.bf16 %v4205, %v4205
    %v4461 = vpack.c.bf16 %v4208, %v4208
    %v4462 = vpack.c.bf16 %v4210, %v4210
    %v4463 = vpack.c.bf16 %v4213, %v4213
    %v4464 = vpack.c.bf16 %v4215, %v4215
    %v4465 = vpack.c.bf16 %v4218, %v4218
    %v4466 = vpack.c.bf16 %v4220, %v4220
    %v4467 = vpack.c.bf16 %v4223, %v4223
    %v4468 = vpack.c.bf16 %v4225, %v4225
    %v4469 = vpack.c.bf16 %v4228, %v4228
    %v4470 = vpack.c.bf16 %v4230, %v4230
    %v4471 = vpack.c.bf16 %v4233, %v4233
    %v4472 = vpack.c.bf16 %v4235, %v4235
    %v4473 = vpack.c.bf16 %v4238, %v4238
    %v4474 = vpack.c.bf16 %v4240, %v4240
    %v4475 = vpack.c.bf16 %v4243, %v4243
    %v4476 = vpack.c.bf16 %v4245, %v4245
    %v4477 = vpack.c.bf16 %v4248, %v4248
    %v4478 = vpack.c.bf16 %v4250, %v4250
    %v4479 = vpack.c.bf16 %v4253, %v4253
    %v4480 = vpack.c.bf16 %v4255, %v4255
    %v4481 = vpack.c.bf16 %v4258, %v4258
    %v4482 = vpack.c.bf16 %v4260, %v4260
    %v4483 = vpack.c.bf16 %v4263, %v4263
    %v4484 = vpack.c.bf16 %v4265, %v4265
    %v4485 = vpack.c.bf16 %v4268, %v4268
    %v4486 = vpack.c.bf16 %v4270, %v4270
    %v4487 = vpack.c.bf16 %v4273, %v4273
    %v4488 = vpack.c.bf16 %v4275, %v4275
    %v4489 = vpack.c.bf16 %v4278, %v4278
    %v4490 = vpack.c.bf16 %v4280, %v4280
    %v4491 = vpack.c.bf16 %v4283, %v4283
    %v4492 = vpack.c.bf16 %v4285, %v4285
    %v4493 = vpack.c.bf16 %v4288, %v4288
    %v4494 = vpack.c.bf16 %v4290, %v4290
    %v4495 = vpack.c.bf16 %v4293, %v4293
    %v4496 = vpack.c.bf16 %v4295, %v4295
    %v4497 = vpack.c.bf16 %v4298, %v4298
    %v4498 = vpack.c.bf16 %v4300, %v4300
    %v4499 = vpack.c.bf16 %v4303, %v4303
    %v4500 = vpack.c.bf16 %v4305, %v4305
    %v4501 = vpack.c.bf16 %v4308, %v4308
    %v4502 = vpack.c.bf16 %v4310, %v4310
    %v4503 = vpack.c.bf16 %v4313, %v4313
    %v4504 = vpack.c.bf16 %v4315, %v4315
    %v4505 = vpack.c.bf16 %v4318, %v4318
    %v4506 = vpack.c.bf16 %v4320, %v4320
    %v4507 = vpack.c.bf16 %v4323, %v4323
    %v4508 = vpack.c.bf16 %v4325, %v4325
    %v4509 = vpack.c.bf16 %v4328, %v4328
    %v4510 = vpack.c.bf16 %v4330, %v4330
    %v4511 = vpack.c.bf16 %v4333, %v4333
    %v4512 = vpack.c.bf16 %v4335, %v4335
    %v4513 = vpack.c.bf16 %v4338, %v4338
    %v4514 = vpack.c.bf16 %v4340, %v4340
    %v4515 = vpack.c.bf16 %v4343, %v4343
    %v4516 = vpack.c.bf16 %v4345, %v4345
    %v4517 = vpack.c.bf16 %v4348, %v4348
    %v4518 = vpack.c.bf16 %v4350, %v4350
    %v4519 = vpack.c.bf16 %v4353, %v4353
    %v4520 = vpack.c.bf16 %v4355, %v4355
    %v4521 = vpack.c.bf16 %v4358, %v4358
    %v4522 = vpack.c.bf16 %v4360, %v4360
    %v4523 = vpack.c.bf16 %v4363, %v4363
    %v4524 = vpack.c.bf16 %v4365, %v4365
    %v4525 = vpack.c.bf16 %v4368, %v4368
    %v4526 = vpack.c.bf16 %v4370, %v4370
    %v4527 = vpack.c.bf16 %v4373, %v4373
    %v4528 = vpack.c.bf16 %v4375, %v4375
    %v4529 = vpack.c.bf16 %v4378, %v4378
    %v4530 = vpack.c.bf16 %v4380, %v4380
    %v4531 = vpack.c.bf16 %v4383, %v4383
    %v4532 = vpack.c.bf16 %v4385, %v4385
    %v4533 = vpack.c.bf16 %v4388, %v4388
    %v4534 = vpack.c.bf16 %v4390, %v4390
    %v4535 = vpack.c.bf16 %v4393, %v4393
    %v4536 = vpack.c.bf16 %v4395, %v4395
    %v4537 = vpack.c.bf16 %v4398, %v4398
    %v4538 = vpack.c.bf16 %v4400, %v4400
    %v4539 = vpack.c.bf16 %v4403, %v4403
    %v4540 = vpack.c.bf16 %v4405, %v4405
    %v4541 = vpack.c.bf16 %v4408, %v4408
    %v4542 = vpack.c.bf16 %v4410, %v4410
    %v4543 = vpack.c.bf16 %v4413, %v4413
    %v4544 = vpack.c.bf16 %v4415, %v4415
    %4545 = vst [vmem:[#allocation2] sm:$0xf] %v4417
    %4546 = vst [vmem:[#allocation2 + $0x4] sm:$0xf] %v4418
    %4547 = vst [vmem:[#allocation2 + $0x8] sm:$0xf] %v4419
    %4548 = vst [vmem:[#allocation2 + $0xc] sm:$0xf] %v4420
    %4549 = vst [vmem:[#allocation2 + $0x10] sm:$0xf] %v4421
    %4550 = vst [vmem:[#allocation2 + $0x14] sm:$0xf] %v4422
    %4551 = vst [vmem:[#allocation2 + $0x18] sm:$0xf] %v4423
    %4552 = vst [vmem:[#allocation2 + $0x1c] sm:$0xf] %v4424
    %4553 = vst [vmem:[#allocation2 + $0x20] sm:$0xf] %v4425
    %4554 = vst [vmem:[#allocation2 + $0x24] sm:$0xf] %v4426
    %4555 = vst [vmem:[#allocation2 + $0x28] sm:$0xf] %v4427
    %4556 = vst [vmem:[#allocation2 + $0x2c] sm:$0xf] %v4428
    %4557 = vst [vmem:[#allocation2 + $0x30] sm:$0xf] %v4429
    %4558 = vst [vmem:[#allocation2 + $0x34] sm:$0xf] %v4430
    %4559 = vst [vmem:[#allocation2 + $0x38] sm:$0xf] %v4431
    %4560 = vst [vmem:[#allocation2 + $0x3c] sm:$0xf] %v4432
    %4561 = vst [vmem:[#allocation2 + $0x40] sm:$0xf] %v4433
    %4562 = vst [vmem:[#allocation2 + $0x44] sm:$0xf] %v4434
    %4563 = vst [vmem:[#allocation2 + $0x48] sm:$0xf] %v4435
    %4564 = vst [vmem:[#allocation2 + $0x4c] sm:$0xf] %v4436
    %4565 = vst [vmem:[#allocation2 + $0x50] sm:$0xf] %v4437
    %4566 = vst [vmem:[#allocation2 + $0x54] sm:$0xf] %v4438
    %4567 = vst [vmem:[#allocation2 + $0x58] sm:$0xf] %v4439
    %4568 = vst [vmem:[#allocation2 + $0x5c] sm:$0xf] %v4440
    %4569 = vst [vmem:[#allocation2 + $0x60] sm:$0xf] %v4441
    %4570 = vst [vmem:[#allocation2 + $0x64] sm:$0xf] %v4442
    %4571 = vst [vmem:[#allocation2 + $0x68] sm:$0xf] %v4443
    %4572 = vst [vmem:[#allocation2 + $0x6c] sm:$0xf] %v4444
    %4573 = vst [vmem:[#allocation2 + $0x70] sm:$0xf] %v4445
    %4574 = vst [vmem:[#allocation2 + $0x74] sm:$0xf] %v4446
    %4575 = vst [vmem:[#allocation2 + $0x78] sm:$0xf] %v4447
    %4576 = vst [vmem:[#allocation2 + $0x7c] sm:$0xf] %v4448
    %4577 = vst [vmem:[#allocation2 + $0x80] sm:$0xf] %v4449
    %4578 = vst [vmem:[#allocation2 + $0x84] sm:$0xf] %v4450
    %4579 = vst [vmem:[#allocation2 + $0x88] sm:$0xf] %v4451
    %4580 = vst [vmem:[#allocation2 + $0x8c] sm:$0xf] %v4452
    %4581 = vst [vmem:[#allocation2 + $0x90] sm:$0xf] %v4453
    %4582 = vst [vmem:[#allocation2 + $0x94] sm:$0xf] %v4454
    %4583 = vst [vmem:[#allocation2 + $0x98] sm:$0xf] %v4455
    %4584 = vst [vmem:[#allocation2 + $0x9c] sm:$0xf] %v4456
    %4585 = vst [vmem:[#allocation2 + $0xa0] sm:$0xf] %v4457
    %4586 = vst [vmem:[#allocation2 + $0xa4] sm:$0xf] %v4458
    %4587 = vst [vmem:[#allocation2 + $0xa8] sm:$0xf] %v4459
    %4588 = vst [vmem:[#allocation2 + $0xac] sm:$0xf] %v4460
    %4589 = vst [vmem:[#allocation2 + $0xb0] sm:$0xf] %v4461
    %4590 = vst [vmem:[#allocation2 + $0xb4] sm:$0xf] %v4462
    %4591 = vst [vmem:[#allocation2 + $0xb8] sm:$0xf] %v4463
    %4592 = vst [vmem:[#allocation2 + $0xbc] sm:$0xf] %v4464
    %4593 = vst [vmem:[#allocation2 + $0xc0] sm:$0xf] %v4465
    %4594 = vst [vmem:[#allocation2 + $0xc4] sm:$0xf] %v4466
    %4595 = vst [vmem:[#allocation2 + $0xc8] sm:$0xf] %v4467
    %4596 = vst [vmem:[#allocation2 + $0xcc] sm:$0xf] %v4468
    %4597 = vst [vmem:[#allocation2 + $0xd0] sm:$0xf] %v4469
    %4598 = vst [vmem:[#allocation2 + $0xd4] sm:$0xf] %v4470
    %4599 = vst [vmem:[#allocation2 + $0xd8] sm:$0xf] %v4471
    %4600 = vst [vmem:[#allocation2 + $0xdc] sm:$0xf] %v4472
    %4601 = vst [vmem:[#allocation2 + $0xe0] sm:$0xf] %v4473
    %4602 = vst [vmem:[#allocation2 + $0xe4] sm:$0xf] %v4474
    %4603 = vst [vmem:[#allocation2 + $0xe8] sm:$0xf] %v4475
    %4604 = vst [vmem:[#allocation2 + $0xec] sm:$0xf] %v4476
    %4605 = vst [vmem:[#allocation2 + $0xf0] sm:$0xf] %v4477
    %4606 = vst [vmem:[#allocation2 + $0xf4] sm:$0xf] %v4478
    %4607 = vst [vmem:[#allocation2 + $0xf8] sm:$0xf] %v4479
    %4608 = vst [vmem:[#allocation2 + $0xfc] sm:$0xf] %v4480
    %4609 = vst [vmem:[#allocation2 + $0x100] sm:$0xf] %v4481
    %4610 = vst [vmem:[#allocation2 + $0x104] sm:$0xf] %v4482
    %4611 = vst [vmem:[#allocation2 + $0x108] sm:$0xf] %v4483
    %4612 = vst [vmem:[#allocation2 + $0x10c] sm:$0xf] %v4484
    %4613 = vst [vmem:[#allocation2 + $0x110] sm:$0xf] %v4485
    %4614 = vst [vmem:[#allocation2 + $0x114] sm:$0xf] %v4486
    %4615 = vst [vmem:[#allocation2 + $0x118] sm:$0xf] %v4487
    %4616 = vst [vmem:[#allocation2 + $0x11c] sm:$0xf] %v4488
    %4617 = vst [vmem:[#allocation2 + $0x120] sm:$0xf] %v4489
    %4618 = vst [vmem:[#allocation2 + $0x124] sm:$0xf] %v4490
    %4619 = vst [vmem:[#allocation2 + $0x128] sm:$0xf] %v4491
    %4620 = vst [vmem:[#allocation2 + $0x12c] sm:$0xf] %v4492
    %4621 = vst [vmem:[#allocation2 + $0x130] sm:$0xf] %v4493
    %4622 = vst [vmem:[#allocation2 + $0x134] sm:$0xf] %v4494
    %4623 = vst [vmem:[#allocation2 + $0x138] sm:$0xf] %v4495
    %4624 = vst [vmem:[#allocation2 + $0x13c] sm:$0xf] %v4496
    %4625 = vst [vmem:[#allocation2 + $0x140] sm:$0xf] %v4497
    %4626 = vst [vmem:[#allocation2 + $0x144] sm:$0xf] %v4498
    %4627 = vst [vmem:[#allocation2 + $0x148] sm:$0xf] %v4499
    %4628 = vst [vmem:[#allocation2 + $0x14c] sm:$0xf] %v4500
    %4629 = vst [vmem:[#allocation2 + $0x150] sm:$0xf] %v4501
    %4630 = vst [vmem:[#allocation2 + $0x154] sm:$0xf] %v4502
    %4631 = vst [vmem:[#allocation2 + $0x158] sm:$0xf] %v4503
    %4632 = vst [vmem:[#allocation2 + $0x15c] sm:$0xf] %v4504
    %4633 = vst [vmem:[#allocation2 + $0x160] sm:$0xf] %v4505
    %4634 = vst [vmem:[#allocation2 + $0x164] sm:$0xf] %v4506
    %4635 = vst [vmem:[#allocation2 + $0x168] sm:$0xf] %v4507
    %4636 = vst [vmem:[#allocation2 + $0x16c] sm:$0xf] %v4508
    %4637 = vst [vmem:[#allocation2 + $0x170] sm:$0xf] %v4509
    %4638 = vst [vmem:[#allocation2 + $0x174] sm:$0xf] %v4510
    %4639 = vst [vmem:[#allocation2 + $0x178] sm:$0xf] %v4511
    %4640 = vst [vmem:[#allocation2 + $0x17c] sm:$0xf] %v4512
    %4641 = vst [vmem:[#allocation2 + $0x180] sm:$0xf] %v4513
    %4642 = vst [vmem:[#allocation2 + $0x184] sm:$0xf] %v4514
    %4643 = vst [vmem:[#allocation2 + $0x188] sm:$0xf] %v4515
    %4644 = vst [vmem:[#allocation2 + $0x18c] sm:$0xf] %v4516
    %4645 = vst [vmem:[#allocation2 + $0x190] sm:$0xf] %v4517
    %4646 = vst [vmem:[#allocation2 + $0x194] sm:$0xf] %v4518
    %4647 = vst [vmem:[#allocation2 + $0x198] sm:$0xf] %v4519
    %4648 = vst [vmem:[#allocation2 + $0x19c] sm:$0xf] %v4520
    %4649 = vst [vmem:[#allocation2 + $0x1a0] sm:$0xf] %v4521
    %4650 = vst [vmem:[#allocation2 + $0x1a4] sm:$0xf] %v4522
    %4651 = vst [vmem:[#allocation2 + $0x1a8] sm:$0xf] %v4523
    %4652 = vst [vmem:[#allocation2 + $0x1ac] sm:$0xf] %v4524
    %4653 = vst [vmem:[#allocation2 + $0x1b0] sm:$0xf] %v4525
    %4654 = vst [vmem:[#allocation2 + $0x1b4] sm:$0xf] %v4526
    %4655 = vst [vmem:[#allocation2 + $0x1b8] sm:$0xf] %v4527
    %4656 = vst [vmem:[#allocation2 + $0x1bc] sm:$0xf] %v4528
    %4657 = vst [vmem:[#allocation2 + $0x1c0] sm:$0xf] %v4529
    %4658 = vst [vmem:[#allocation2 + $0x1c4] sm:$0xf] %v4530
    %4659 = vst [vmem:[#allocation2 + $0x1c8] sm:$0xf] %v4531
    %4660 = vst [vmem:[#allocation2 + $0x1cc] sm:$0xf] %v4532
    %4661 = vst [vmem:[#allocation2 + $0x1d0] sm:$0xf] %v4533
    %4662 = vst [vmem:[#allocation2 + $0x1d4] sm:$0xf] %v4534
    %4663 = vst [vmem:[#allocation2 + $0x1d8] sm:$0xf] %v4535
    %4664 = vst [vmem:[#allocation2 + $0x1dc] sm:$0xf] %v4536
    %4665 = vst [vmem:[#allocation2 + $0x1e0] sm:$0xf] %v4537
    %4666 = vst [vmem:[#allocation2 + $0x1e4] sm:$0xf] %v4538
    %4667 = vst [vmem:[#allocation2 + $0x1e8] sm:$0xf] %v4539
    %4668 = vst [vmem:[#allocation2 + $0x1ec] sm:$0xf] %v4540
    %4669 = vst [vmem:[#allocation2 + $0x1f0] sm:$0xf] %v4541
    %4670 = vst [vmem:[#allocation2 + $0x1f4] sm:$0xf] %v4542
    %4671 = vst [vmem:[#allocation2 + $0x1f8] sm:$0xf] %v4543
    %4672 = vst [vmem:[#allocation2 + $0x1fc] sm:$0xf] %v4544
    // Predicated region
    $region30: #{tpu_custom_call.1} parent=1 // pred_check
      _
    $region31: #{tpu_custom_call.1} parent=1 // pred_check_branch
      %4674 = sbr.rel (0) target = $region33
    $region32: #{tpu_custom_call.1} parent=1 // pred_region
      %4676 = vsyncadd [#allocation3], 0
      %s4677 = sshll.u32 [#allocation2], 4
      %s4678 = int_to_ptr.vmem [resolvable:$true] %s4677
      %s4679 = sshll.u32 %s7, 4
      %s4680 = int_to_ptr.hbm [resolvable:$true] %s4679
      %4685 = dma.vmem_to_hbm [thread:$0]  %s4678, 8192, %s4680, [#allocation3], 64, 64, 4
    $region33: #{tpu_custom_call.1} parent=1 // pred_fallthru
      _
    // Predicated region
    $region34: #{tpu_custom_call.1} parent=1 // pred_check
      _
    $region35: #{tpu_custom_call.1} parent=1 // pred_check_branch
      %4687 = sbr.rel (0) target = $region37
    $region36: #{tpu_custom_call.1} parent=1 // pred_region
      %4689 = dma.done [#allocation3], 8192
    $region37: #{tpu_custom_call.1} parent=1 // pred_fallthru
      _
    %4690 = vsyncpa [#allocation3], 1

</llo_original>
